<compile_context>
chip_gen: v5e
topology: v5e:2x2
jax: 0.10.0
libtpu: 0.0.40
codegen_flags: <defaults>
</compile_context>

<pallas_src>
import math

import jax
import jax.numpy as jnp
from jax.experimental import pallas as pl
from jax.experimental.pallas import tpu as pltpu


# ----------------------------------------------------------------------------
# Fused Pallas kernel: BB images per grid step.
#
# Row layout: every "image" occupies 8 consecutive rows of each slab
# (rows = sub-sampled H positions, lanes = W*C).  Valid data lives in the
# leading rows of each 8-row slot; trailing rows are finite junk that never
# feeds a valid output row (matmuls / max / relu are row-independent, and the
# banded taps for valid rows never reach a junk row).
# ----------------------------------------------------------------------------
def _net_kernel(x0_ref, x1_ref, x2_ref, x3_ref,
                w1_ref, b1_ref, p1c_ref,
                w2_ref, b2_ref, p2c_ref,
                wf1_ref, bf1_ref,
                wf2_ref, bf2_ref,
                wf3_ref, bf3_ref,
                o_ref):
    f32 = jnp.float32
    bf16 = jnp.bfloat16
    n8 = x0_ref.shape[0]          # BB * 8
    lg = n8 - 1                   # conv1 rows  (7 valid + junk per image)
    lh = n8 - 3                   # conv2 rows  (5 valid + junk per image)
    lf = n8 - 7                   # fc rows     (local row 0 is the real one)

    # Input slabs: x{m}[b*8 + u] = input row 4*u + m of image b.   (n8, 96) f32
    xg = [x0_ref[...], x1_ref[...], x2_ref[...], x3_ref[...]]

    # ---- conv1 (5x5, 3->8) as banded matmuls, by output-row residue mod 4 ---
    # Group k holds conv1 output rows r = 4j + k  (j = 0..6 valid per image).
    def conv1_group(k):
        acc = None
        for di in range(5):
            src = xg[(k + di) % 4]
            off = (k + di) // 4
            lhs = src[off:off + lg, :].astype(bf16)
            term = jnp.dot(lhs, w1_ref[di], preferred_element_type=f32)
            acc = term if acc is None else acc + term
        return acc + b1_ref[...]

    g0, g1, g2, g3 = [conv1_group(k) for k in range(4)]

    # ---- 2x2 max-pool #1 (ReLU deferred; it commutes with max / selection) --
    pe = jnp.maximum(g0, g1).astype(bf16)     # pooled rows q = 2j    (lg, 224)
    po = jnp.maximum(g2, g3).astype(bf16)     # pooled rows q = 2j+1  (lg, 224)

    def colpool(v, sel_ref):                  # even/odd column selection + max
        return jnp.maximum(
            jnp.dot(v, sel_ref[0], preferred_element_type=f32),
            jnp.dot(v, sel_ref[1], preferred_element_type=f32))

    h1e = jnp.maximum(colpool(pe, p1c_ref), 0.0)   # h1 rows 0,2,..,12  (lg,112)
    h1o = jnp.maximum(colpool(po, p1c_ref), 0.0)   # h1 rows 1,3,..,13  (lg,112)

    # ---- conv2 (5x5, 8->16): even/odd output rows via banded matmuls --------
    def conv2_rows(taps):
        acc = None
        for di, (src, off) in enumerate(taps):
            lhs = src[off:off + lh, :].astype(bf16)
            term = jnp.dot(lhs, w2_ref[di], preferred_element_type=f32)
            acc = term if acc is None else acc + term
        return acc + b2_ref[...]

    y2e = conv2_rows([(h1e, 0), (h1o, 0), (h1e, 1), (h1o, 1), (h1e, 2)])
    y2o = conv2_rows([(h1o, 0), (h1e, 1), (h1o, 1), (h1e, 2), (h1o, 2)])

    # ---- 2x2 max-pool #2 + ReLU ---------------------------------------------
    rm2 = jnp.maximum(y2e, y2o).astype(bf16)            # (lh, 160)
    h2 = jnp.maximum(colpool(rm2, p2c_ref), 0.0)        # (lh, 80); rows 0..4 ok

    # ---- fc1 (400->120, lane-padded to 128) as a 5-tap band over rows -------
    f1 = None
    for h in range(5):
        lhs = h2[h:h + lf, :].astype(bf16)
        term = jnp.dot(lhs, wf1_ref[h], preferred_element_type=f32)
        f1 = term if f1 is None else f1 + term
    f1 = jnp.maximum(f1 + bf1_ref[...], 0.0).astype(bf16)

    # ---- fc2 / fc3 (all 128-lane dense) --------------------------------------
    f2 = jnp.maximum(jnp.dot(f1, wf2_ref[...], preferred_element_type=f32)
                     + bf2_ref[...], 0.0).astype(bf16)
    f3 = jnp.dot(f2, wf3_ref[...], preferred_element_type=f32) + bf3_ref[...]

    # Lane-dense store; only local row 0 of each 8-row image slot is real.
    o_ref[pl.ds(0, lf), :] = f3.astype(o_ref.dtype)


# ----------------------------------------------------------------------------
# One-time weight re-layout (done OUTSIDE the jitted forward).
# ----------------------------------------------------------------------------
def _banded_conv_weight(w_oihw, w_in):
    """(Cout,Cin,kh,kw) -> (kh, w_in*Cin, Wo*Cout) banded matmul weights."""
    cout, cin, kh, kw = w_oihw.shape
    wo = w_in - kw + 1
    w_t = jnp.transpose(w_oihw, (2, 3, 1, 0)).astype(jnp.float32)  # (kh,kw,Ci,Co)
    jin = jnp.arange(w_in)[:, None]
    jout = jnp.arange(wo)[None, :]
    dj = jin - jout
    valid = ((dj >= 0) & (dj < kw)).astype(jnp.float32)
    djc = jnp.clip(dj, 0, kw - 1)
    band = w_t[:, djc]                                   # (kh, w_in, wo, Ci, Co)
    band = band * valid[None, :, :, None, None]
    band = jnp.transpose(band, (0, 1, 3, 2, 4))          # (kh, w_in, Ci, wo, Co)
    return band.reshape(kh, w_in * cin, wo * cout)


def _pool_col_sel(w_in, c):
    """Even/odd 0-1 column (W-direction) pooling selection matrices."""
    w_out = w_in // 2
    li = jnp.arange(w_in * c)[:, None]
    lo = jnp.arange(w_out * c)[None, :]
    chan_ok = (li % c) == (lo % c)
    even = ((li // c == 2 * (lo // c)) & chan_ok).astype(jnp.float32)
    odd = ((li // c == 2 * (lo // c) + 1) & chan_ok).astype(jnp.float32)
    return jnp.stack([even, odd])                        # (2, w_in*c, w_out*c)


def prepare_params(params):
    bf16 = jnp.bfloat16
    f32 = jnp.float32
    p = {}
    p["w1"] = _banded_conv_weight(params["conv1_w"], 32).astype(bf16)   # (5,96,224)
    p["b1"] = jnp.tile(params["conv1_b"].astype(f32), 28)[None, :]      # (1,224)
    p["p1c"] = _pool_col_sel(28, 8).astype(bf16)                        # (2,224,112)

    p["w2"] = _banded_conv_weight(params["conv2_w"], 14).astype(bf16)   # (5,112,160)
    p["b2"] = jnp.tile(params["conv2_b"].astype(f32), 10)[None, :]      # (1,160)
    p["p2c"] = _pool_col_sel(10, 16).astype(bf16)                       # (2,160,80)

    # fc1: fold PyTorch's NCHW view(-1, 400) ordering in; pad 120 -> 128 lanes.
    wf1 = params["fc1_w"].reshape(120, 16, 5, 5)
    wf1 = jnp.transpose(wf1, (2, 3, 1, 0)).reshape(5, 80, 120).astype(f32)
    p["wf1"] = jnp.zeros((5, 80, 128), f32).at[:, :, :120].set(wf1).astype(bf16)
    p["bf1"] = jnp.zeros((1, 128), f32).at[0, :120].set(params["fc1_b"])

    p["wf2"] = (jnp.zeros((128, 128), f32)
                .at[:120, :84].set(params["fc2_w"].T).astype(bf16))
    p["bf2"] = jnp.zeros((1, 128), f32).at[0, :84].set(params["fc2_b"])

    p["wf3"] = (jnp.zeros((128, 128), f32)
                .at[:84, :10].set(params["fc3_w"].T).astype(bf16))
    p["bf3"] = jnp.zeros((1, 128), f32).at[0, :10].set(params["fc3_b"])
    return p


# ----------------------------------------------------------------------------
# Forward pass: single fused, batched pallas_call.
# ----------------------------------------------------------------------------
def net_forward(prep, x_nchw, *, block_images=128):
    B = x_nchw.shape[0]
    bb = min(block_images, B)                 # images per grid step
    bp = ((B + bb - 1) // bb) * bb            # batch padded to a block multiple
    n8 = bb * 8

    x = jnp.transpose(x_nchw, (0, 2, 3, 1)).astype(jnp.float32)   # NCHW -> NHWC
    x = x.reshape(B, 32, 32 * 3)                                  # (B, H, W*C)
    if bp != B:
        x = jnp.pad(x, ((0, bp - B), (0, 0), (0, 0)))
    # Split input rows by residue mod 4 -> four image-major (bp*8, 96) slabs.
    xs = [x[:, m::4, :].reshape(bp * 8, 96) for m in range(4)]

    weights = (prep["w1"], prep["b1"], prep["p1c"],
               prep["w2"], prep["b2"], prep["p2c"],
               prep["wf1"], prep["bf1"], prep["wf2"], prep["bf2"],
               prep["wf3"], prep["bf3"])

    def xspec():
        return pl.BlockSpec((n8, 96), lambda i: (i, 0))

    def wspec(a):
        return pl.BlockSpec(a.shape, lambda i, _nd=a.ndim: (0,) * _nd)

    flops_per_image = 2 * (160 * 96 * 224        # conv1 banded matmuls
                           + 2 * 16 * 224 * 112  # pool1 column selections
                           + 80 * 112 * 160      # conv2 banded matmuls
                           + 2 * 8 * 160 * 80    # pool2 column selections
                           + 40 * 80 * 128       # fc1 band
                           + 2 * 8 * 128 * 128)  # fc2 + fc3
    w_bytes = sum(int(a.size) * a.dtype.itemsize for a in weights)
    bytes_accessed = 4 * bp * 8 * 96 * 4 + w_bytes + bp * 8 * 128 * 4

    out = pl.pallas_call(
        _net_kernel,
        out_shape=jax.ShapeDtypeStruct((bp * 8, 128), jnp.float32),
        grid=(bp // bb,),
        in_specs=[xspec() for _ in range(4)] + [wspec(a) for a in weights],
        out_specs=pl.BlockSpec((n8, 128), lambda i: (i, 0)),
        compiler_params=pltpu.CompilerParams(
            dimension_semantics=("parallel",),
            vmem_limit_bytes=32 * 1024 * 1024),
        cost_estimate=pl.CostEstimate(flops=flops_per_image * bp,
                                      transcendentals=0,
                                      bytes_accessed=bytes_accessed),
    )(*xs, *weights)

    # Local row 0 of each 8-row image slot holds the logits.
    return out.reshape(bp, 8, 128)[:B, 0, :10]


# ----------------------------------------------------------------------------
# Params, pure-JAX reference, and smoke test.
# ----------------------------------------------------------------------------
def init_params(key):
    ks = jax.random.split(key, 10)
    s = 0.1

    def w(k, shape):
        return jax.random.normal(k, shape, dtype=jnp.float32) * s

    return {
        "conv1_w": w(ks[0], (8, 3, 5, 5)),   "conv1_b": w(ks[1], (8,)),
        "conv2_w": w(ks[2], (16, 8, 5, 5)),  "conv2_b": w(ks[3], (16,)),
        "fc1_w":   w(ks[4], (120, 400)),     "fc1_b":   w(ks[5], (120,)),
        "fc2_w":   w(ks[6], (84, 120)),      "fc2_b":   w(ks[7], (84,)),
        "fc3_w":   w(ks[8], (10, 84)),       "fc3_b":   w(ks[9], (10,)),
    }


def reference_forward(params, x_nchw):
    def conv(x, w, b):
        y = jax.lax.conv_general_dilated(
            x, w, window_strides=(1, 1), padding="VALID",
            dimension_numbers=("NCHW", "OIHW", "NCHW"))
        return jax.nn.relu(y + b[None, :, None, None])

    def pool(x):
        return jax.lax.reduce_window(x, -jnp.inf, jax.lax.max,
                                     (1, 1, 2, 2), (1, 1, 2, 2), "VALID")

    x = x_nchw.astype(jnp.float32)
    x = pool(conv(x, params["conv1_w"], params["conv1_b"]))
    x = pool(conv(x, params["conv2_w"], params["conv2_b"]))
    x = x.reshape(x.shape[0], 16 * 5 * 5)
    x = jax.nn.relu(x @ params["fc1_w"].T + params["fc1_b"])
    x = jax.nn.relu(x @ params["fc2_w"].T + params["fc2_b"])
    return x @ params["fc3_w"].T + params["fc3_b"]


if __name__ == "__main__":
    key = jax.random.PRNGKey(0)
    pkey, xkey = jax.random.split(key)
    params = init_params(pkey)
    prep = prepare_params(params)          # one-time weight re-layout

    # Spatial size must be 32x32 for the 16*5*5 flatten (as in the PyTorch net).
    B = 6
    x = jax.random.normal(xkey, (B, 3, 32, 32), dtype=jnp.float32)

    fwd = jax.jit(net_forward, static_argnames=("block_images",))
    # Small block so the smoke test exercises multi-step grid + batch padding.
    logits = fwd(prep, x, block_images=4)
    logits = jax.block_until_ready(logits)

    assert logits.shape == (B, 10), logits.shape
    assert bool(jnp.all(jnp.isfinite(logits)))

    ref = reference_forward(params, x)
    err = float(jnp.max(jnp.abs(logits - ref)))
    scale = float(jnp.max(jnp.abs(ref)))
    # bf16 matmul operands with f32 accumulation: allow ~5% of the logit scale.
    assert err <= 5e-2 * max(1.0, scale), (
        f"max abs diff vs reference: {err} (ref scale {scale})")

    print("KERNEL_OK")
</pallas_src>

<mosaic_0001>
module attributes {stable_mosaic.version = 11 : i64} {
  func.func @_net_kernel(%arg0: i32, %arg1: memref<32x96xf32, #tpu.memory_space<vmem>>, %arg2: memref<32x96xf32, #tpu.memory_space<vmem>>, %arg3: memref<32x96xf32, #tpu.memory_space<vmem>>, %arg4: memref<32x96xf32, #tpu.memory_space<vmem>>, %arg5: memref<5x96x224xbf16, #tpu.memory_space<vmem>>, %arg6: memref<1x224xf32, #tpu.memory_space<vmem>>, %arg7: memref<2x224x112xbf16, #tpu.memory_space<vmem>>, %arg8: memref<5x112x160xbf16, #tpu.memory_space<vmem>>, %arg9: memref<1x160xf32, #tpu.memory_space<vmem>>, %arg10: memref<2x160x80xbf16, #tpu.memory_space<vmem>>, %arg11: memref<5x80x128xbf16, #tpu.memory_space<vmem>>, %arg12: memref<1x128xf32, #tpu.memory_space<vmem>>, %arg13: memref<128x128xbf16, #tpu.memory_space<vmem>>, %arg14: memref<1x128xf32, #tpu.memory_space<vmem>>, %arg15: memref<128x128xbf16, #tpu.memory_space<vmem>>, %arg16: memref<1x128xf32, #tpu.memory_space<vmem>>, %arg17: memref<32x128xf32, #tpu.memory_space<vmem>>) attributes {dimension_semantics = [#tpu.dimension_semantics<parallel>], iteration_bounds = array<i64: 2>, scalar_prefetch = 0 : i64, scratch_operands = 0 : i64, tpu.core_type = #tpu.core_type<tc>, window_params = [{transform_indices = @transform_0, window_bounds = array<i64: 32, 96>}, {transform_indices = @transform_1, window_bounds = array<i64: 32, 96>}, {transform_indices = @transform_2, window_bounds = array<i64: 32, 96>}, {transform_indices = @transform_3, window_bounds = array<i64: 32, 96>}, {pipeline_mode = #tpu.pipeline_mode<synchronous>, transform_indices = @transform_4, window_bounds = array<i64: 5, 96, 224>}, {pipeline_mode = #tpu.pipeline_mode<synchronous>, transform_indices = @transform_5, window_bounds = array<i64: 1, 224>}, {pipeline_mode = #tpu.pipeline_mode<synchronous>, transform_indices = @transform_6, window_bounds = array<i64: 2, 224, 112>}, {pipeline_mode = #tpu.pipeline_mode<synchronous>, transform_indices = @transform_7, window_bounds = array<i64: 5, 112, 160>}, {pipeline_mode = #tpu.pipeline_mode<synchronous>, transform_indices = @transform_8, window_bounds = array<i64: 1, 160>}, {pipeline_mode = #tpu.pipeline_mode<synchronous>, transform_indices = @transform_9, window_bounds = array<i64: 2, 160, 80>}, {pipeline_mode = #tpu.pipeline_mode<synchronous>, transform_indices = @transform_10, window_bounds = array<i64: 5, 80, 128>}, {pipeline_mode = #tpu.pipeline_mode<synchronous>, transform_indices = @transform_11, window_bounds = array<i64: 1, 128>}, {pipeline_mode = #tpu.pipeline_mode<synchronous>, transform_indices = @transform_12, window_bounds = array<i64: 128, 128>}, {pipeline_mode = #tpu.pipeline_mode<synchronous>, transform_indices = @transform_13, window_bounds = array<i64: 1, 128>}, {pipeline_mode = #tpu.pipeline_mode<synchronous>, transform_indices = @transform_14, window_bounds = array<i64: 128, 128>}, {pipeline_mode = #tpu.pipeline_mode<synchronous>, transform_indices = @transform_15, window_bounds = array<i64: 1, 128>}, {transform_indices = @transform_16, window_bounds = array<i64: 32, 128>}]} {
    %c0 = arith.constant 0 : index
    %c0_0 = arith.constant 0 : index
    %0 = vector.load %arg1[%c0, %c0_0] : memref<32x96xf32, #tpu.memory_space<vmem>>, vector<32x96xf32>
    %c0_1 = arith.constant 0 : index
    %c0_2 = arith.constant 0 : index
    %1 = vector.load %arg2[%c0_1, %c0_2] : memref<32x96xf32, #tpu.memory_space<vmem>>, vector<32x96xf32>
    %c0_3 = arith.constant 0 : index
    %c0_4 = arith.constant 0 : index
    %2 = vector.load %arg3[%c0_3, %c0_4] : memref<32x96xf32, #tpu.memory_space<vmem>>, vector<32x96xf32>
    %c0_5 = arith.constant 0 : index
    %c0_6 = arith.constant 0 : index
    %3 = vector.load %arg4[%c0_5, %c0_6] : memref<32x96xf32, #tpu.memory_space<vmem>>, vector<32x96xf32>
    %4 = vector.extract_strided_slice %0 {offsets = [0, 0], sizes = [31, 96], strides = [1, 1]} : vector<32x96xf32> to vector<31x96xf32>
    %5 = arith.truncf %4 : vector<31x96xf32> to vector<31x96xbf16>
    %c0_7 = arith.constant 0 : index
    %c0_8 = arith.constant 0 : index
    %c0_9 = arith.constant 0 : index
    %6 = vector.load %arg5[%c0_7, %c0_8, %c0_9] : memref<5x96x224xbf16, #tpu.memory_space<vmem>>, vector<1x96x224xbf16>
    %7 = vector.shape_cast %6 : vector<1x96x224xbf16> to vector<96x224xbf16>
    %cst = arith.constant dense<0.000000e+00> : vector<31x224xf32>
    %8 = tpu.matmul %5, %7, %cst {dimension_numbers = #tpu.dot_dimension_numbers<[1], [0], [0], [1], [0, 0, 1, 1], [], []>} : vector<31x96xbf16>, vector<96x224xbf16>, vector<31x224xf32> -> vector<31x224xf32>
    %9 = vector.extract_strided_slice %1 {offsets = [0, 0], sizes = [31, 96], strides = [1, 1]} : vector<32x96xf32> to vector<31x96xf32>
    %10 = arith.truncf %9 : vector<31x96xf32> to vector<31x96xbf16>
    %c1 = arith.constant 1 : index
    %c0_10 = arith.constant 0 : index
    %c0_11 = arith.constant 0 : index
    %11 = vector.load %arg5[%c1, %c0_10, %c0_11] : memref<5x96x224xbf16, #tpu.memory_space<vmem>>, vector<1x96x224xbf16>
    %12 = vector.shape_cast %11 : vector<1x96x224xbf16> to vector<96x224xbf16>
    %cst_12 = arith.constant dense<0.000000e+00> : vector<31x224xf32>
    %13 = tpu.matmul %10, %12, %cst_12 {dimension_numbers = #tpu.dot_dimension_numbers<[1], [0], [0], [1], [0, 0, 1, 1], [], []>} : vector<31x96xbf16>, vector<96x224xbf16>, vector<31x224xf32> -> vector<31x224xf32>
    %14 = arith.addf %8, %13 : vector<31x224xf32>
    %15 = vector.extract_strided_slice %2 {offsets = [0, 0], sizes = [31, 96], strides = [1, 1]} : vector<32x96xf32> to vector<31x96xf32>
    %16 = arith.truncf %15 : vector<31x96xf32> to vector<31x96xbf16>
    %c2 = arith.constant 2 : index
    %c0_13 = arith.constant 0 : index
    %c0_14 = arith.constant 0 : index
    %17 = vector.load %arg5[%c2, %c0_13, %c0_14] : memref<5x96x224xbf16, #tpu.memory_space<vmem>>, vector<1x96x224xbf16>
    %18 = vector.shape_cast %17 : vector<1x96x224xbf16> to vector<96x224xbf16>
    %cst_15 = arith.constant dense<0.000000e+00> : vector<31x224xf32>
    %19 = tpu.matmul %16, %18, %cst_15 {dimension_numbers = #tpu.dot_dimension_numbers<[1], [0], [0], [1], [0, 0, 1, 1], [], []>} : vector<31x96xbf16>, vector<96x224xbf16>, vector<31x224xf32> -> vector<31x224xf32>
    %20 = arith.addf %14, %19 : vector<31x224xf32>
    %21 = vector.extract_strided_slice %3 {offsets = [0, 0], sizes = [31, 96], strides = [1, 1]} : vector<32x96xf32> to vector<31x96xf32>
    %22 = arith.truncf %21 : vector<31x96xf32> to vector<31x96xbf16>
    %c3 = arith.constant 3 : index
    %c0_16 = arith.constant 0 : index
    %c0_17 = arith.constant 0 : index
    %23 = vector.load %arg5[%c3, %c0_16, %c0_17] : memref<5x96x224xbf16, #tpu.memory_space<vmem>>, vector<1x96x224xbf16>
    %24 = vector.shape_cast %23 : vector<1x96x224xbf16> to vector<96x224xbf16>
    %cst_18 = arith.constant dense<0.000000e+00> : vector<31x224xf32>
    %25 = tpu.matmul %22, %24, %cst_18 {dimension_numbers = #tpu.dot_dimension_numbers<[1], [0], [0], [1], [0, 0, 1, 1], [], []>} : vector<31x96xbf16>, vector<96x224xbf16>, vector<31x224xf32> -> vector<31x224xf32>
    %26 = arith.addf %20, %25 : vector<31x224xf32>
    %27 = vector.extract_strided_slice %0 {offsets = [1, 0], sizes = [31, 96], strides = [1, 1]} : vector<32x96xf32> to vector<31x96xf32>
    %28 = arith.truncf %27 : vector<31x96xf32> to vector<31x96xbf16>
    %c4 = arith.constant 4 : index
    %c0_19 = arith.constant 0 : index
    %c0_20 = arith.constant 0 : index
    %29 = vector.load %arg5[%c4, %c0_19, %c0_20] : memref<5x96x224xbf16, #tpu.memory_space<vmem>>, vector<1x96x224xbf16>
    %30 = vector.shape_cast %29 : vector<1x96x224xbf16> to vector<96x224xbf16>
    %cst_21 = arith.constant dense<0.000000e+00> : vector<31x224xf32>
    %31 = tpu.matmul %28, %30, %cst_21 {dimension_numbers = #tpu.dot_dimension_numbers<[1], [0], [0], [1], [0, 0, 1, 1], [], []>} : vector<31x96xbf16>, vector<96x224xbf16>, vector<31x224xf32> -> vector<31x224xf32>
    %32 = arith.addf %26, %31 : vector<31x224xf32>
    %c0_22 = arith.constant 0 : index
    %c0_23 = arith.constant 0 : index
    %33 = vector.load %arg6[%c0_22, %c0_23] : memref<1x224xf32, #tpu.memory_space<vmem>>, vector<1x224xf32>
    %34 = vector.broadcast %33 : vector<1x224xf32> to vector<31x224xf32>
    %35 = arith.addf %32, %34 : vector<31x224xf32>
    %36 = vector.extract_strided_slice %1 {offsets = [0, 0], sizes = [31, 96], strides = [1, 1]} : vector<32x96xf32> to vector<31x96xf32>
    %37 = arith.truncf %36 : vector<31x96xf32> to vector<31x96xbf16>
    %c0_24 = arith.constant 0 : index
    %c0_25 = arith.constant 0 : index
    %c0_26 = arith.constant 0 : index
    %38 = vector.load %arg5[%c0_24, %c0_25, %c0_26] : memref<5x96x224xbf16, #tpu.memory_space<vmem>>, vector<1x96x224xbf16>
    %39 = vector.shape_cast %38 : vector<1x96x224xbf16> to vector<96x224xbf16>
    %cst_27 = arith.constant dense<0.000000e+00> : vector<31x224xf32>
    %40 = tpu.matmul %37, %39, %cst_27 {dimension_numbers = #tpu.dot_dimension_numbers<[1], [0], [0], [1], [0, 0, 1, 1], [], []>} : vector<31x96xbf16>, vector<96x224xbf16>, vector<31x224xf32> -> vector<31x224xf32>
    %41 = vector.extract_strided_slice %2 {offsets = [0, 0], sizes = [31, 96], strides = [1, 1]} : vector<32x96xf32> to vector<31x96xf32>
    %42 = arith.truncf %41 : vector<31x96xf32> to vector<31x96xbf16>
    %c1_28 = arith.constant 1 : index
    %c0_29 = arith.constant 0 : index
    %c0_30 = arith.constant 0 : index
    %43 = vector.load %arg5[%c1_28, %c0_29, %c0_30] : memref<5x96x224xbf16, #tpu.memory_space<vmem>>, vector<1x96x224xbf16>
    %44 = vector.shape_cast %43 : vector<1x96x224xbf16> to vector<96x224xbf16>
    %cst_31 = arith.constant dense<0.000000e+00> : vector<31x224xf32>
    %45 = tpu.matmul %42, %44, %cst_31 {dimension_numbers = #tpu.dot_dimension_numbers<[1], [0], [0], [1], [0, 0, 1, 1], [], []>} : vector<31x96xbf16>, vector<96x224xbf16>, vector<31x224xf32> -> vector<31x224xf32>
    %46 = arith.addf %40, %45 : vector<31x224xf32>
    %47 = vector.extract_strided_slice %3 {offsets = [0, 0], sizes = [31, 96], strides = [1, 1]} : vector<32x96xf32> to vector<31x96xf32>
    %48 = arith.truncf %47 : vector<31x96xf32> to vector<31x96xbf16>
    %c2_32 = arith.constant 2 : index
    %c0_33 = arith.constant 0 : index
    %c0_34 = arith.constant 0 : index
    %49 = vector.load %arg5[%c2_32, %c0_33, %c0_34] : memref<5x96x224xbf16, #tpu.memory_space<vmem>>, vector<1x96x224xbf16>
    %50 = vector.shape_cast %49 : vector<1x96x224xbf16> to vector<96x224xbf16>
    %cst_35 = arith.constant dense<0.000000e+00> : vector<31x224xf32>
    %51 = tpu.matmul %48, %50, %cst_35 {dimension_numbers = #tpu.dot_dimension_numbers<[1], [0], [0], [1], [0, 0, 1, 1], [], []>} : vector<31x96xbf16>, vector<96x224xbf16>, vector<31x224xf32> -> vector<31x224xf32>
    %52 = arith.addf %46, %51 : vector<31x224xf32>
    %53 = vector.extract_strided_slice %0 {offsets = [1, 0], sizes = [31, 96], strides = [1, 1]} : vector<32x96xf32> to vector<31x96xf32>
    %54 = arith.truncf %53 : vector<31x96xf32> to vector<31x96xbf16>
    %c3_36 = arith.constant 3 : index
    %c0_37 = arith.constant 0 : index
    %c0_38 = arith.constant 0 : index
    %55 = vector.load %arg5[%c3_36, %c0_37, %c0_38] : memref<5x96x224xbf16, #tpu.memory_space<vmem>>, vector<1x96x224xbf16>
    %56 = vector.shape_cast %55 : vector<1x96x224xbf16> to vector<96x224xbf16>
    %cst_39 = arith.constant dense<0.000000e+00> : vector<31x224xf32>
    %57 = tpu.matmul %54, %56, %cst_39 {dimension_numbers = #tpu.dot_dimension_numbers<[1], [0], [0], [1], [0, 0, 1, 1], [], []>} : vector<31x96xbf16>, vector<96x224xbf16>, vector<31x224xf32> -> vector<31x224xf32>
    %58 = arith.addf %52, %57 : vector<31x224xf32>
    %59 = vector.extract_strided_slice %1 {offsets = [1, 0], sizes = [31, 96], strides = [1, 1]} : vector<32x96xf32> to vector<31x96xf32>
    %60 = arith.truncf %59 : vector<31x96xf32> to vector<31x96xbf16>
    %c4_40 = arith.constant 4 : index
    %c0_41 = arith.constant 0 : index
    %c0_42 = arith.constant 0 : index
    %61 = vector.load %arg5[%c4_40, %c0_41, %c0_42] : memref<5x96x224xbf16, #tpu.memory_space<vmem>>, vector<1x96x224xbf16>
    %62 = vector.shape_cast %61 : vector<1x96x224xbf16> to vector<96x224xbf16>
    %cst_43 = arith.constant dense<0.000000e+00> : vector<31x224xf32>
    %63 = tpu.matmul %60, %62, %cst_43 {dimension_numbers = #tpu.dot_dimension_numbers<[1], [0], [0], [1], [0, 0, 1, 1], [], []>} : vector<31x96xbf16>, vector<96x224xbf16>, vector<31x224xf32> -> vector<31x224xf32>
    %64 = arith.addf %58, %63 : vector<31x224xf32>
    %c0_44 = arith.constant 0 : index
    %c0_45 = arith.constant 0 : index
    %65 = vector.load %arg6[%c0_44, %c0_45] : memref<1x224xf32, #tpu.memory_space<vmem>>, vector<1x224xf32>
    %66 = vector.broadcast %65 : vector<1x224xf32> to vector<31x224xf32>
    %67 = arith.addf %64, %66 : vector<31x224xf32>
    %68 = vector.extract_strided_slice %2 {offsets = [0, 0], sizes = [31, 96], strides = [1, 1]} : vector<32x96xf32> to vector<31x96xf32>
    %69 = arith.truncf %68 : vector<31x96xf32> to vector<31x96xbf16>
    %c0_46 = arith.constant 0 : index
    %c0_47 = arith.constant 0 : index
    %c0_48 = arith.constant 0 : index
    %70 = vector.load %arg5[%c0_46, %c0_47, %c0_48] : memref<5x96x224xbf16, #tpu.memory_space<vmem>>, vector<1x96x224xbf16>
    %71 = vector.shape_cast %70 : vector<1x96x224xbf16> to vector<96x224xbf16>
    %cst_49 = arith.constant dense<0.000000e+00> : vector<31x224xf32>
    %72 = tpu.matmul %69, %71, %cst_49 {dimension_numbers = #tpu.dot_dimension_numbers<[1], [0], [0], [1], [0, 0, 1, 1], [], []>} : vector<31x96xbf16>, vector<96x224xbf16>, vector<31x224xf32> -> vector<31x224xf32>
    %73 = vector.extract_strided_slice %3 {offsets = [0, 0], sizes = [31, 96], strides = [1, 1]} : vector<32x96xf32> to vector<31x96xf32>
    %74 = arith.truncf %73 : vector<31x96xf32> to vector<31x96xbf16>
    %c1_50 = arith.constant 1 : index
    %c0_51 = arith.constant 0 : index
    %c0_52 = arith.constant 0 : index
    %75 = vector.load %arg5[%c1_50, %c0_51, %c0_52] : memref<5x96x224xbf16, #tpu.memory_space<vmem>>, vector<1x96x224xbf16>
    %76 = vector.shape_cast %75 : vector<1x96x224xbf16> to vector<96x224xbf16>
    %cst_53 = arith.constant dense<0.000000e+00> : vector<31x224xf32>
    %77 = tpu.matmul %74, %76, %cst_53 {dimension_numbers = #tpu.dot_dimension_numbers<[1], [0], [0], [1], [0, 0, 1, 1], [], []>} : vector<31x96xbf16>, vector<96x224xbf16>, vector<31x224xf32> -> vector<31x224xf32>
    %78 = arith.addf %72, %77 : vector<31x224xf32>
    %79 = vector.extract_strided_slice %0 {offsets = [1, 0], sizes = [31, 96], strides = [1, 1]} : vector<32x96xf32> to vector<31x96xf32>
    %80 = arith.truncf %79 : vector<31x96xf32> to vector<31x96xbf16>
    %c2_54 = arith.constant 2 : index
    %c0_55 = arith.constant 0 : index
    %c0_56 = arith.constant 0 : index
    %81 = vector.load %arg5[%c2_54, %c0_55, %c0_56] : memref<5x96x224xbf16, #tpu.memory_space<vmem>>, vector<1x96x224xbf16>
    %82 = vector.shape_cast %81 : vector<1x96x224xbf16> to vector<96x224xbf16>
    %cst_57 = arith.constant dense<0.000000e+00> : vector<31x224xf32>
    %83 = tpu.matmul %80, %82, %cst_57 {dimension_numbers = #tpu.dot_dimension_numbers<[1], [0], [0], [1], [0, 0, 1, 1], [], []>} : vector<31x96xbf16>, vector<96x224xbf16>, vector<31x224xf32> -> vector<31x224xf32>
    %84 = arith.addf %78, %83 : vector<31x224xf32>
    %85 = vector.extract_strided_slice %1 {offsets = [1, 0], sizes = [31, 96], strides = [1, 1]} : vector<32x96xf32> to vector<31x96xf32>
    %86 = arith.truncf %85 : vector<31x96xf32> to vector<31x96xbf16>
    %c3_58 = arith.constant 3 : index
    %c0_59 = arith.constant 0 : index
    %c0_60 = arith.constant 0 : index
    %87 = vector.load %arg5[%c3_58, %c0_59, %c0_60] : memref<5x96x224xbf16, #tpu.memory_space<vmem>>, vector<1x96x224xbf16>
    %88 = vector.shape_cast %87 : vector<1x96x224xbf16> to vector<96x224xbf16>
    %cst_61 = arith.constant dense<0.000000e+00> : vector<31x224xf32>
    %89 = tpu.matmul %86, %88, %cst_61 {dimension_numbers = #tpu.dot_dimension_numbers<[1], [0], [0], [1], [0, 0, 1, 1], [], []>} : vector<31x96xbf16>, vector<96x224xbf16>, vector<31x224xf32> -> vector<31x224xf32>
    %90 = arith.addf %84, %89 : vector<31x224xf32>
    %91 = vector.extract_strided_slice %2 {offsets = [1, 0], sizes = [31, 96], strides = [1, 1]} : vector<32x96xf32> to vector<31x96xf32>
    %92 = arith.truncf %91 : vector<31x96xf32> to vector<31x96xbf16>
    %c4_62 = arith.constant 4 : index
    %c0_63 = arith.constant 0 : index
    %c0_64 = arith.constant 0 : index
    %93 = vector.load %arg5[%c4_62, %c0_63, %c0_64] : memref<5x96x224xbf16, #tpu.memory_space<vmem>>, vector<1x96x224xbf16>
    %94 = vector.shape_cast %93 : vector<1x96x224xbf16> to vector<96x224xbf16>
    %cst_65 = arith.constant dense<0.000000e+00> : vector<31x224xf32>
    %95 = tpu.matmul %92, %94, %cst_65 {dimension_numbers = #tpu.dot_dimension_numbers<[1], [0], [0], [1], [0, 0, 1, 1], [], []>} : vector<31x96xbf16>, vector<96x224xbf16>, vector<31x224xf32> -> vector<31x224xf32>
    %96 = arith.addf %90, %95 : vector<31x224xf32>
    %c0_66 = arith.constant 0 : index
    %c0_67 = arith.constant 0 : index
    %97 = vector.load %arg6[%c0_66, %c0_67] : memref<1x224xf32, #tpu.memory_space<vmem>>, vector<1x224xf32>
    %98 = vector.broadcast %97 : vector<1x224xf32> to vector<31x224xf32>
    %99 = arith.addf %96, %98 : vector<31x224xf32>
    %100 = vector.extract_strided_slice %3 {offsets = [0, 0], sizes = [31, 96], strides = [1, 1]} : vector<32x96xf32> to vector<31x96xf32>
    %101 = arith.truncf %100 : vector<31x96xf32> to vector<31x96xbf16>
    %c0_68 = arith.constant 0 : index
    %c0_69 = arith.constant 0 : index
    %c0_70 = arith.constant 0 : index
    %102 = vector.load %arg5[%c0_68, %c0_69, %c0_70] : memref<5x96x224xbf16, #tpu.memory_space<vmem>>, vector<1x96x224xbf16>
    %103 = vector.shape_cast %102 : vector<1x96x224xbf16> to vector<96x224xbf16>
    %cst_71 = arith.constant dense<0.000000e+00> : vector<31x224xf32>
    %104 = tpu.matmul %101, %103, %cst_71 {dimension_numbers = #tpu.dot_dimension_numbers<[1], [0], [0], [1], [0, 0, 1, 1], [], []>} : vector<31x96xbf16>, vector<96x224xbf16>, vector<31x224xf32> -> vector<31x224xf32>
    %105 = vector.extract_strided_slice %0 {offsets = [1, 0], sizes = [31, 96], strides = [1, 1]} : vector<32x96xf32> to vector<31x96xf32>
    %106 = arith.truncf %105 : vector<31x96xf32> to vector<31x96xbf16>
    %c1_72 = arith.constant 1 : index
    %c0_73 = arith.constant 0 : index
    %c0_74 = arith.constant 0 : index
    %107 = vector.load %arg5[%c1_72, %c0_73, %c0_74] : memref<5x96x224xbf16, #tpu.memory_space<vmem>>, vector<1x96x224xbf16>
    %108 = vector.shape_cast %107 : vector<1x96x224xbf16> to vector<96x224xbf16>
    %cst_75 = arith.constant dense<0.000000e+00> : vector<31x224xf32>
    %109 = tpu.matmul %106, %108, %cst_75 {dimension_numbers = #tpu.dot_dimension_numbers<[1], [0], [0], [1], [0, 0, 1, 1], [], []>} : vector<31x96xbf16>, vector<96x224xbf16>, vector<31x224xf32> -> vector<31x224xf32>
    %110 = arith.addf %104, %109 : vector<31x224xf32>
    %111 = vector.extract_strided_slice %1 {offsets = [1, 0], sizes = [31, 96], strides = [1, 1]} : vector<32x96xf32> to vector<31x96xf32>
    %112 = arith.truncf %111 : vector<31x96xf32> to vector<31x96xbf16>
    %c2_76 = arith.constant 2 : index
    %c0_77 = arith.constant 0 : index
    %c0_78 = arith.constant 0 : index
    %113 = vector.load %arg5[%c2_76, %c0_77, %c0_78] : memref<5x96x224xbf16, #tpu.memory_space<vmem>>, vector<1x96x224xbf16>
    %114 = vector.shape_cast %113 : vector<1x96x224xbf16> to vector<96x224xbf16>
    %cst_79 = arith.constant dense<0.000000e+00> : vector<31x224xf32>
    %115 = tpu.matmul %112, %114, %cst_79 {dimension_numbers = #tpu.dot_dimension_numbers<[1], [0], [0], [1], [0, 0, 1, 1], [], []>} : vector<31x96xbf16>, vector<96x224xbf16>, vector<31x224xf32> -> vector<31x224xf32>
    %116 = arith.addf %110, %115 : vector<31x224xf32>
    %117 = vector.extract_strided_slice %2 {offsets = [1, 0], sizes = [31, 96], strides = [1, 1]} : vector<32x96xf32> to vector<31x96xf32>
    %118 = arith.truncf %117 : vector<31x96xf32> to vector<31x96xbf16>
    %c3_80 = arith.constant 3 : index
    %c0_81 = arith.constant 0 : index
    %c0_82 = arith.constant 0 : index
    %119 = vector.load %arg5[%c3_80, %c0_81, %c0_82] : memref<5x96x224xbf16, #tpu.memory_space<vmem>>, vector<1x96x224xbf16>
    %120 = vector.shape_cast %119 : vector<1x96x224xbf16> to vector<96x224xbf16>
    %cst_83 = arith.constant dense<0.000000e+00> : vector<31x224xf32>
    %121 = tpu.matmul %118, %120, %cst_83 {dimension_numbers = #tpu.dot_dimension_numbers<[1], [0], [0], [1], [0, 0, 1, 1], [], []>} : vector<31x96xbf16>, vector<96x224xbf16>, vector<31x224xf32> -> vector<31x224xf32>
    %122 = arith.addf %116, %121 : vector<31x224xf32>
    %123 = vector.extract_strided_slice %3 {offsets = [1, 0], sizes = [31, 96], strides = [1, 1]} : vector<32x96xf32> to vector<31x96xf32>
    %124 = arith.truncf %123 : vector<31x96xf32> to vector<31x96xbf16>
    %c4_84 = arith.constant 4 : index
    %c0_85 = arith.constant 0 : index
    %c0_86 = arith.constant 0 : index
    %125 = vector.load %arg5[%c4_84, %c0_85, %c0_86] : memref<5x96x224xbf16, #tpu.memory_space<vmem>>, vector<1x96x224xbf16>
    %126 = vector.shape_cast %125 : vector<1x96x224xbf16> to vector<96x224xbf16>
    %cst_87 = arith.constant dense<0.000000e+00> : vector<31x224xf32>
    %127 = tpu.matmul %124, %126, %cst_87 {dimension_numbers = #tpu.dot_dimension_numbers<[1], [0], [0], [1], [0, 0, 1, 1], [], []>} : vector<31x96xbf16>, vector<96x224xbf16>, vector<31x224xf32> -> vector<31x224xf32>
    %128 = arith.addf %122, %127 : vector<31x224xf32>
    %c0_88 = arith.constant 0 : index
    %c0_89 = arith.constant 0 : index
    %129 = vector.load %arg6[%c0_88, %c0_89] : memref<1x224xf32, #tpu.memory_space<vmem>>, vector<1x224xf32>
    %130 = vector.broadcast %129 : vector<1x224xf32> to vector<31x224xf32>
    %131 = arith.addf %128, %130 : vector<31x224xf32>
    %132 = arith.maximumf %35, %67 : vector<31x224xf32>
    %133 = arith.truncf %132 : vector<31x224xf32> to vector<31x224xbf16>
    %134 = arith.maximumf %99, %131 : vector<31x224xf32>
    %135 = arith.truncf %134 : vector<31x224xf32> to vector<31x224xbf16>
    %c0_90 = arith.constant 0 : index
    %c0_91 = arith.constant 0 : index
    %c0_92 = arith.constant 0 : index
    %136 = vector.load %arg7[%c0_90, %c0_91, %c0_92] : memref<2x224x112xbf16, #tpu.memory_space<vmem>>, vector<1x224x112xbf16>
    %137 = vector.shape_cast %136 : vector<1x224x112xbf16> to vector<224x112xbf16>
    %cst_93 = arith.constant dense<0.000000e+00> : vector<31x112xf32>
    %138 = tpu.matmul %133, %137, %cst_93 {dimension_numbers = #tpu.dot_dimension_numbers<[1], [0], [0], [1], [0, 0, 1, 1], [], []>} : vector<31x224xbf16>, vector<224x112xbf16>, vector<31x112xf32> -> vector<31x112xf32>
    %c1_94 = arith.constant 1 : index
    %c0_95 = arith.constant 0 : index
    %c0_96 = arith.constant 0 : index
    %139 = vector.load %arg7[%c1_94, %c0_95, %c0_96] : memref<2x224x112xbf16, #tpu.memory_space<vmem>>, vector<1x224x112xbf16>
    %140 = vector.shape_cast %139 : vector<1x224x112xbf16> to vector<224x112xbf16>
    %cst_97 = arith.constant dense<0.000000e+00> : vector<31x112xf32>
    %141 = tpu.matmul %133, %140, %cst_97 {dimension_numbers = #tpu.dot_dimension_numbers<[1], [0], [0], [1], [0, 0, 1, 1], [], []>} : vector<31x224xbf16>, vector<224x112xbf16>, vector<31x112xf32> -> vector<31x112xf32>
    %142 = arith.maximumf %138, %141 : vector<31x112xf32>
    %cst_98 = arith.constant 0.000000e+00 : f32
    %143 = vector.broadcast %cst_98 : f32 to vector<31x112xf32>
    %144 = arith.maximumf %142, %143 : vector<31x112xf32>
    %c0_99 = arith.constant 0 : index
    %c0_100 = arith.constant 0 : index
    %c0_101 = arith.constant 0 : index
    %145 = vector.load %arg7[%c0_99, %c0_100, %c0_101] : memref<2x224x112xbf16, #tpu.memory_space<vmem>>, vector<1x224x112xbf16>
    %146 = vector.shape_cast %145 : vector<1x224x112xbf16> to vector<224x112xbf16>
    %cst_102 = arith.constant dense<0.000000e+00> : vector<31x112xf32>
    %147 = tpu.matmul %135, %146, %cst_102 {dimension_numbers = #tpu.dot_dimension_numbers<[1], [0], [0], [1], [0, 0, 1, 1], [], []>} : vector<31x224xbf16>, vector<224x112xbf16>, vector<31x112xf32> -> vector<31x112xf32>
    %c1_103 = arith.constant 1 : index
    %c0_104 = arith.constant 0 : index
    %c0_105 = arith.constant 0 : index
    %148 = vector.load %arg7[%c1_103, %c0_104, %c0_105] : memref<2x224x112xbf16, #tpu.memory_space<vmem>>, vector<1x224x112xbf16>
    %149 = vector.shape_cast %148 : vector<1x224x112xbf16> to vector<224x112xbf16>
    %cst_106 = arith.constant dense<0.000000e+00> : vector<31x112xf32>
    %150 = tpu.matmul %135, %149, %cst_106 {dimension_numbers = #tpu.dot_dimension_numbers<[1], [0], [0], [1], [0, 0, 1, 1], [], []>} : vector<31x224xbf16>, vector<224x112xbf16>, vector<31x112xf32> -> vector<31x112xf32>
    %151 = arith.maximumf %147, %150 : vector<31x112xf32>
    %cst_107 = arith.constant 0.000000e+00 : f32
    %152 = vector.broadcast %cst_107 : f32 to vector<31x112xf32>
    %153 = arith.maximumf %151, %152 : vector<31x112xf32>
    %154 = vector.extract_strided_slice %144 {offsets = [0, 0], sizes = [29, 112], strides = [1, 1]} : vector<31x112xf32> to vector<29x112xf32>
    %155 = arith.truncf %154 : vector<29x112xf32> to vector<29x112xbf16>
    %c0_108 = arith.constant 0 : index
    %c0_109 = arith.constant 0 : index
    %c0_110 = arith.constant 0 : index
    %156 = vector.load %arg8[%c0_108, %c0_109, %c0_110] : memref<5x112x160xbf16, #tpu.memory_space<vmem>>, vector<1x112x160xbf16>
    %157 = vector.shape_cast %156 : vector<1x112x160xbf16> to vector<112x160xbf16>
    %cst_111 = arith.constant dense<0.000000e+00> : vector<29x160xf32>
    %158 = tpu.matmul %155, %157, %cst_111 {dimension_numbers = #tpu.dot_dimension_numbers<[1], [0], [0], [1], [0, 0, 1, 1], [], []>} : vector<29x112xbf16>, vector<112x160xbf16>, vector<29x160xf32> -> vector<29x160xf32>
    %159 = vector.extract_strided_slice %153 {offsets = [0, 0], sizes = [29, 112], strides = [1, 1]} : vector<31x112xf32> to vector<29x112xf32>
    %160 = arith.truncf %159 : vector<29x112xf32> to vector<29x112xbf16>
    %c1_112 = arith.constant 1 : index
    %c0_113 = arith.constant 0 : index
    %c0_114 = arith.constant 0 : index
    %161 = vector.load %arg8[%c1_112, %c0_113, %c0_114] : memref<5x112x160xbf16, #tpu.memory_space<vmem>>, vector<1x112x160xbf16>
    %162 = vector.shape_cast %161 : vector<1x112x160xbf16> to vector<112x160xbf16>
    %cst_115 = arith.constant dense<0.000000e+00> : vector<29x160xf32>
    %163 = tpu.matmul %160, %162, %cst_115 {dimension_numbers = #tpu.dot_dimension_numbers<[1], [0], [0], [1], [0, 0, 1, 1], [], []>} : vector<29x112xbf16>, vector<112x160xbf16>, vector<29x160xf32> -> vector<29x160xf32>
    %164 = arith.addf %158, %163 : vector<29x160xf32>
    %165 = vector.extract_strided_slice %144 {offsets = [1, 0], sizes = [29, 112], strides = [1, 1]} : vector<31x112xf32> to vector<29x112xf32>
    %166 = arith.truncf %165 : vector<29x112xf32> to vector<29x112xbf16>
    %c2_116 = arith.constant 2 : index
    %c0_117 = arith.constant 0 : index
    %c0_118 = arith.constant 0 : index
    %167 = vector.load %arg8[%c2_116, %c0_117, %c0_118] : memref<5x112x160xbf16, #tpu.memory_space<vmem>>, vector<1x112x160xbf16>
    %168 = vector.shape_cast %167 : vector<1x112x160xbf16> to vector<112x160xbf16>
    %cst_119 = arith.constant dense<0.000000e+00> : vector<29x160xf32>
    %169 = tpu.matmul %166, %168, %cst_119 {dimension_numbers = #tpu.dot_dimension_numbers<[1], [0], [0], [1], [0, 0, 1, 1], [], []>} : vector<29x112xbf16>, vector<112x160xbf16>, vector<29x160xf32> -> vector<29x160xf32>
    %170 = arith.addf %164, %169 : vector<29x160xf32>
    %171 = vector.extract_strided_slice %153 {offsets = [1, 0], sizes = [29, 112], strides = [1, 1]} : vector<31x112xf32> to vector<29x112xf32>
    %172 = arith.truncf %171 : vector<29x112xf32> to vector<29x112xbf16>
    %c3_120 = arith.constant 3 : index
    %c0_121 = arith.constant 0 : index
    %c0_122 = arith.constant 0 : index
    %173 = vector.load %arg8[%c3_120, %c0_121, %c0_122] : memref<5x112x160xbf16, #tpu.memory_space<vmem>>, vector<1x112x160xbf16>
    %174 = vector.shape_cast %173 : vector<1x112x160xbf16> to vector<112x160xbf16>
    %cst_123 = arith.constant dense<0.000000e+00> : vector<29x160xf32>
    %175 = tpu.matmul %172, %174, %cst_123 {dimension_numbers = #tpu.dot_dimension_numbers<[1], [0], [0], [1], [0, 0, 1, 1], [], []>} : vector<29x112xbf16>, vector<112x160xbf16>, vector<29x160xf32> -> vector<29x160xf32>
    %176 = arith.addf %170, %175 : vector<29x160xf32>
    %177 = vector.extract_strided_slice %144 {offsets = [2, 0], sizes = [29, 112], strides = [1, 1]} : vector<31x112xf32> to vector<29x112xf32>
    %178 = arith.truncf %177 : vector<29x112xf32> to vector<29x112xbf16>
    %c4_124 = arith.constant 4 : index
    %c0_125 = arith.constant 0 : index
    %c0_126 = arith.constant 0 : index
    %179 = vector.load %arg8[%c4_124, %c0_125, %c0_126] : memref<5x112x160xbf16, #tpu.memory_space<vmem>>, vector<1x112x160xbf16>
    %180 = vector.shape_cast %179 : vector<1x112x160xbf16> to vector<112x160xbf16>
    %cst_127 = arith.constant dense<0.000000e+00> : vector<29x160xf32>
    %181 = tpu.matmul %178, %180, %cst_127 {dimension_numbers = #tpu.dot_dimension_numbers<[1], [0], [0], [1], [0, 0, 1, 1], [], []>} : vector<29x112xbf16>, vector<112x160xbf16>, vector<29x160xf32> -> vector<29x160xf32>
    %182 = arith.addf %176, %181 : vector<29x160xf32>
    %c0_128 = arith.constant 0 : index
    %c0_129 = arith.constant 0 : index
    %183 = vector.load %arg9[%c0_128, %c0_129] : memref<1x160xf32, #tpu.memory_space<vmem>>, vector<1x160xf32>
    %184 = vector.broadcast %183 : vector<1x160xf32> to vector<29x160xf32>
    %185 = arith.addf %182, %184 : vector<29x160xf32>
    %186 = vector.extract_strided_slice %153 {offsets = [0, 0], sizes = [29, 112], strides = [1, 1]} : vector<31x112xf32> to vector<29x112xf32>
    %187 = arith.truncf %186 : vector<29x112xf32> to vector<29x112xbf16>
    %c0_130 = arith.constant 0 : index
    %c0_131 = arith.constant 0 : index
    %c0_132 = arith.constant 0 : index
    %188 = vector.load %arg8[%c0_130, %c0_131, %c0_132] : memref<5x112x160xbf16, #tpu.memory_space<vmem>>, vector<1x112x160xbf16>
    %189 = vector.shape_cast %188 : vector<1x112x160xbf16> to vector<112x160xbf16>
    %cst_133 = arith.constant dense<0.000000e+00> : vector<29x160xf32>
    %190 = tpu.matmul %187, %189, %cst_133 {dimension_numbers = #tpu.dot_dimension_numbers<[1], [0], [0], [1], [0, 0, 1, 1], [], []>} : vector<29x112xbf16>, vector<112x160xbf16>, vector<29x160xf32> -> vector<29x160xf32>
    %191 = vector.extract_strided_slice %144 {offsets = [1, 0], sizes = [29, 112], strides = [1, 1]} : vector<31x112xf32> to vector<29x112xf32>
    %192 = arith.truncf %191 : vector<29x112xf32> to vector<29x112xbf16>
    %c1_134 = arith.constant 1 : index
    %c0_135 = arith.constant 0 : index
    %c0_136 = arith.constant 0 : index
    %193 = vector.load %arg8[%c1_134, %c0_135, %c0_136] : memref<5x112x160xbf16, #tpu.memory_space<vmem>>, vector<1x112x160xbf16>
    %194 = vector.shape_cast %193 : vector<1x112x160xbf16> to vector<112x160xbf16>
    %cst_137 = arith.constant dense<0.000000e+00> : vector<29x160xf32>
    %195 = tpu.matmul %192, %194, %cst_137 {dimension_numbers = #tpu.dot_dimension_numbers<[1], [0], [0], [1], [0, 0, 1, 1], [], []>} : vector<29x112xbf16>, vector<112x160xbf16>, vector<29x160xf32> -> vector<29x160xf32>
    %196 = arith.addf %190, %195 : vector<29x160xf32>
    %197 = vector.extract_strided_slice %153 {offsets = [1, 0], sizes = [29, 112], strides = [1, 1]} : vector<31x112xf32> to vector<29x112xf32>
    %198 = arith.truncf %197 : vector<29x112xf32> to vector<29x112xbf16>
    %c2_138 = arith.constant 2 : index
    %c0_139 = arith.constant 0 : index
    %c0_140 = arith.constant 0 : index
    %199 = vector.load %arg8[%c2_138, %c0_139, %c0_140] : memref<5x112x160xbf16, #tpu.memory_space<vmem>>, vector<1x112x160xbf16>
    %200 = vector.shape_cast %199 : vector<1x112x160xbf16> to vector<112x160xbf16>
    %cst_141 = arith.constant dense<0.000000e+00> : vector<29x160xf32>
    %201 = tpu.matmul %198, %200, %cst_141 {dimension_numbers = #tpu.dot_dimension_numbers<[1], [0], [0], [1], [0, 0, 1, 1], [], []>} : vector<29x112xbf16>, vector<112x160xbf16>, vector<29x160xf32> -> vector<29x160xf32>
    %202 = arith.addf %196, %201 : vector<29x160xf32>
    %203 = vector.extract_strided_slice %144 {offsets = [2, 0], sizes = [29, 112], strides = [1, 1]} : vector<31x112xf32> to vector<29x112xf32>
    %204 = arith.truncf %203 : vector<29x112xf32> to vector<29x112xbf16>
    %c3_142 = arith.constant 3 : index
    %c0_143 = arith.constant 0 : index
    %c0_144 = arith.constant 0 : index
    %205 = vector.load %arg8[%c3_142, %c0_143, %c0_144] : memref<5x112x160xbf16, #tpu.memory_space<vmem>>, vector<1x112x160xbf16>
    %206 = vector.shape_cast %205 : vector<1x112x160xbf16> to vector<112x160xbf16>
    %cst_145 = arith.constant dense<0.000000e+00> : vector<29x160xf32>
    %207 = tpu.matmul %204, %206, %cst_145 {dimension_numbers = #tpu.dot_dimension_numbers<[1], [0], [0], [1], [0, 0, 1, 1], [], []>} : vector<29x112xbf16>, vector<112x160xbf16>, vector<29x160xf32> -> vector<29x160xf32>
    %208 = arith.addf %202, %207 : vector<29x160xf32>
    %209 = vector.extract_strided_slice %153 {offsets = [2, 0], sizes = [29, 112], strides = [1, 1]} : vector<31x112xf32> to vector<29x112xf32>
    %210 = arith.truncf %209 : vector<29x112xf32> to vector<29x112xbf16>
    %c4_146 = arith.constant 4 : index
    %c0_147 = arith.constant 0 : index
    %c0_148 = arith.constant 0 : index
    %211 = vector.load %arg8[%c4_146, %c0_147, %c0_148] : memref<5x112x160xbf16, #tpu.memory_space<vmem>>, vector<1x112x160xbf16>
    %212 = vector.shape_cast %211 : vector<1x112x160xbf16> to vector<112x160xbf16>
    %cst_149 = arith.constant dense<0.000000e+00> : vector<29x160xf32>
    %213 = tpu.matmul %210, %212, %cst_149 {dimension_numbers = #tpu.dot_dimension_numbers<[1], [0], [0], [1], [0, 0, 1, 1], [], []>} : vector<29x112xbf16>, vector<112x160xbf16>, vector<29x160xf32> -> vector<29x160xf32>
    %214 = arith.addf %208, %213 : vector<29x160xf32>
    %c0_150 = arith.constant 0 : index
    %c0_151 = arith.constant 0 : index
    %215 = vector.load %arg9[%c0_150, %c0_151] : memref<1x160xf32, #tpu.memory_space<vmem>>, vector<1x160xf32>
    %216 = vector.broadcast %215 : vector<1x160xf32> to vector<29x160xf32>
    %217 = arith.addf %214, %216 : vector<29x160xf32>
    %218 = arith.maximumf %185, %217 : vector<29x160xf32>
    %219 = arith.truncf %218 : vector<29x160xf32> to vector<29x160xbf16>
    %c0_152 = arith.constant 0 : index
    %c0_153 = arith.constant 0 : index
    %c0_154 = arith.constant 0 : index
    %220 = vector.load %arg10[%c0_152, %c0_153, %c0_154] : memref<2x160x80xbf16, #tpu.memory_space<vmem>>, vector<1x160x80xbf16>
    %221 = vector.shape_cast %220 : vector<1x160x80xbf16> to vector<160x80xbf16>
    %cst_155 = arith.constant dense<0.000000e+00> : vector<29x80xf32>
    %222 = tpu.matmul %219, %221, %cst_155 {dimension_numbers = #tpu.dot_dimension_numbers<[1], [0], [0], [1], [0, 0, 1, 1], [], []>} : vector<29x160xbf16>, vector<160x80xbf16>, vector<29x80xf32> -> vector<29x80xf32>
    %c1_156 = arith.constant 1 : index
    %c0_157 = arith.constant 0 : index
    %c0_158 = arith.constant 0 : index
    %223 = vector.load %arg10[%c1_156, %c0_157, %c0_158] : memref<2x160x80xbf16, #tpu.memory_space<vmem>>, vector<1x160x80xbf16>
    %224 = vector.shape_cast %223 : vector<1x160x80xbf16> to vector<160x80xbf16>
    %cst_159 = arith.constant dense<0.000000e+00> : vector<29x80xf32>
    %225 = tpu.matmul %219, %224, %cst_159 {dimension_numbers = #tpu.dot_dimension_numbers<[1], [0], [0], [1], [0, 0, 1, 1], [], []>} : vector<29x160xbf16>, vector<160x80xbf16>, vector<29x80xf32> -> vector<29x80xf32>
    %226 = arith.maximumf %222, %225 : vector<29x80xf32>
    %cst_160 = arith.constant 0.000000e+00 : f32
    %227 = vector.broadcast %cst_160 : f32 to vector<29x80xf32>
    %228 = arith.maximumf %226, %227 : vector<29x80xf32>
    %229 = vector.extract_strided_slice %228 {offsets = [0, 0], sizes = [25, 80], strides = [1, 1]} : vector<29x80xf32> to vector<25x80xf32>
    %230 = arith.truncf %229 : vector<25x80xf32> to vector<25x80xbf16>
    %c0_161 = arith.constant 0 : index
    %c0_162 = arith.constant 0 : index
    %c0_163 = arith.constant 0 : index
    %231 = vector.load %arg11[%c0_161, %c0_162, %c0_163] : memref<5x80x128xbf16, #tpu.memory_space<vmem>>, vector<1x80x128xbf16>
    %232 = vector.shape_cast %231 : vector<1x80x128xbf16> to vector<80x128xbf16>
    %cst_164 = arith.constant dense<0.000000e+00> : vector<25x128xf32>
    %233 = tpu.matmul %230, %232, %cst_164 {dimension_numbers = #tpu.dot_dimension_numbers<[1], [0], [0], [1], [0, 0, 1, 1], [], []>} : vector<25x80xbf16>, vector<80x128xbf16>, vector<25x128xf32> -> vector<25x128xf32>
    %234 = vector.extract_strided_slice %228 {offsets = [1, 0], sizes = [25, 80], strides = [1, 1]} : vector<29x80xf32> to vector<25x80xf32>
    %235 = arith.truncf %234 : vector<25x80xf32> to vector<25x80xbf16>
    %c1_165 = arith.constant 1 : index
    %c0_166 = arith.constant 0 : index
    %c0_167 = arith.constant 0 : index
    %236 = vector.load %arg11[%c1_165, %c0_166, %c0_167] : memref<5x80x128xbf16, #tpu.memory_space<vmem>>, vector<1x80x128xbf16>
    %237 = vector.shape_cast %236 : vector<1x80x128xbf16> to vector<80x128xbf16>
    %cst_168 = arith.constant dense<0.000000e+00> : vector<25x128xf32>
    %238 = tpu.matmul %235, %237, %cst_168 {dimension_numbers = #tpu.dot_dimension_numbers<[1], [0], [0], [1], [0, 0, 1, 1], [], []>} : vector<25x80xbf16>, vector<80x128xbf16>, vector<25x128xf32> -> vector<25x128xf32>
    %239 = arith.addf %233, %238 : vector<25x128xf32>
    %240 = vector.extract_strided_slice %228 {offsets = [2, 0], sizes = [25, 80], strides = [1, 1]} : vector<29x80xf32> to vector<25x80xf32>
    %241 = arith.truncf %240 : vector<25x80xf32> to vector<25x80xbf16>
    %c2_169 = arith.constant 2 : index
    %c0_170 = arith.constant 0 : index
    %c0_171 = arith.constant 0 : index
    %242 = vector.load %arg11[%c2_169, %c0_170, %c0_171] : memref<5x80x128xbf16, #tpu.memory_space<vmem>>, vector<1x80x128xbf16>
    %243 = vector.shape_cast %242 : vector<1x80x128xbf16> to vector<80x128xbf16>
    %cst_172 = arith.constant dense<0.000000e+00> : vector<25x128xf32>
    %244 = tpu.matmul %241, %243, %cst_172 {dimension_numbers = #tpu.dot_dimension_numbers<[1], [0], [0], [1], [0, 0, 1, 1], [], []>} : vector<25x80xbf16>, vector<80x128xbf16>, vector<25x128xf32> -> vector<25x128xf32>
    %245 = arith.addf %239, %244 : vector<25x128xf32>
    %246 = vector.extract_strided_slice %228 {offsets = [3, 0], sizes = [25, 80], strides = [1, 1]} : vector<29x80xf32> to vector<25x80xf32>
    %247 = arith.truncf %246 : vector<25x80xf32> to vector<25x80xbf16>
    %c3_173 = arith.constant 3 : index
    %c0_174 = arith.constant 0 : index
    %c0_175 = arith.constant 0 : index
    %248 = vector.load %arg11[%c3_173, %c0_174, %c0_175] : memref<5x80x128xbf16, #tpu.memory_space<vmem>>, vector<1x80x128xbf16>
    %249 = vector.shape_cast %248 : vector<1x80x128xbf16> to vector<80x128xbf16>
    %cst_176 = arith.constant dense<0.000000e+00> : vector<25x128xf32>
    %250 = tpu.matmul %247, %249, %cst_176 {dimension_numbers = #tpu.dot_dimension_numbers<[1], [0], [0], [1], [0, 0, 1, 1], [], []>} : vector<25x80xbf16>, vector<80x128xbf16>, vector<25x128xf32> -> vector<25x128xf32>
    %251 = arith.addf %245, %250 : vector<25x128xf32>
    %252 = vector.extract_strided_slice %228 {offsets = [4, 0], sizes = [25, 80], strides = [1, 1]} : vector<29x80xf32> to vector<25x80xf32>
    %253 = arith.truncf %252 : vector<25x80xf32> to vector<25x80xbf16>
    %c4_177 = arith.constant 4 : index
    %c0_178 = arith.constant 0 : index
    %c0_179 = arith.constant 0 : index
    %254 = vector.load %arg11[%c4_177, %c0_178, %c0_179] : memref<5x80x128xbf16, #tpu.memory_space<vmem>>, vector<1x80x128xbf16>
    %255 = vector.shape_cast %254 : vector<1x80x128xbf16> to vector<80x128xbf16>
    %cst_180 = arith.constant dense<0.000000e+00> : vector<25x128xf32>
    %256 = tpu.matmul %253, %255, %cst_180 {dimension_numbers = #tpu.dot_dimension_numbers<[1], [0], [0], [1], [0, 0, 1, 1], [], []>} : vector<25x80xbf16>, vector<80x128xbf16>, vector<25x128xf32> -> vector<25x128xf32>
    %257 = arith.addf %251, %256 : vector<25x128xf32>
    %c0_181 = arith.constant 0 : index
    %c0_182 = arith.constant 0 : index
    %258 = vector.load %arg12[%c0_181, %c0_182] : memref<1x128xf32, #tpu.memory_space<vmem>>, vector<1x128xf32>
    %259 = vector.broadcast %258 : vector<1x128xf32> to vector<25x128xf32>
    %260 = arith.addf %257, %259 : vector<25x128xf32>
    %cst_183 = arith.constant 0.000000e+00 : f32
    %261 = vector.broadcast %cst_183 : f32 to vector<25x128xf32>
    %262 = arith.maximumf %260, %261 : vector<25x128xf32>
    %263 = arith.truncf %262 : vector<25x128xf32> to vector<25x128xbf16>
    %c0_184 = arith.constant 0 : index
    %c0_185 = arith.constant 0 : index
    %264 = vector.load %arg13[%c0_184, %c0_185] : memref<128x128xbf16, #tpu.memory_space<vmem>>, vector<128x128xbf16>
    %cst_186 = arith.constant dense<0.000000e+00> : vector<25x128xf32>
    %265 = tpu.matmul %263, %264, %cst_186 {dimension_numbers = #tpu.dot_dimension_numbers<[1], [0], [0], [1], [0, 0, 1, 1], [], []>} : vector<25x128xbf16>, vector<128x128xbf16>, vector<25x128xf32> -> vector<25x128xf32>
    %c0_187 = arith.constant 0 : index
    %c0_188 = arith.constant 0 : index
    %266 = vector.load %arg14[%c0_187, %c0_188] : memref<1x128xf32, #tpu.memory_space<vmem>>, vector<1x128xf32>
    %267 = vector.broadcast %266 : vector<1x128xf32> to vector<25x128xf32>
    %268 = arith.addf %265, %267 : vector<25x128xf32>
    %cst_189 = arith.constant 0.000000e+00 : f32
    %269 = vector.broadcast %cst_189 : f32 to vector<25x128xf32>
    %270 = arith.maximumf %268, %269 : vector<25x128xf32>
    %271 = arith.truncf %270 : vector<25x128xf32> to vector<25x128xbf16>
    %c0_190 = arith.constant 0 : index
    %c0_191 = arith.constant 0 : index
    %272 = vector.load %arg15[%c0_190, %c0_191] : memref<128x128xbf16, #tpu.memory_space<vmem>>, vector<128x128xbf16>
    %cst_192 = arith.constant dense<0.000000e+00> : vector<25x128xf32>
    %273 = tpu.matmul %271, %272, %cst_192 {dimension_numbers = #tpu.dot_dimension_numbers<[1], [0], [0], [1], [0, 0, 1, 1], [], []>} : vector<25x128xbf16>, vector<128x128xbf16>, vector<25x128xf32> -> vector<25x128xf32>
    %c0_193 = arith.constant 0 : index
    %c0_194 = arith.constant 0 : index
    %274 = vector.load %arg16[%c0_193, %c0_194] : memref<1x128xf32, #tpu.memory_space<vmem>>, vector<1x128xf32>
    %275 = vector.broadcast %274 : vector<1x128xf32> to vector<25x128xf32>
    %276 = arith.addf %273, %275 : vector<25x128xf32>
    %c0_195 = arith.constant 0 : index
    %c0_196 = arith.constant 0 : index
    %277 = vector.load %arg17[%c0_195, %c0_196] : memref<32x128xf32, #tpu.memory_space<vmem>>, vector<25x128xf32>
    tpu.vector_store %arg17[%c0_195, %c0_196], %276 {strides = array<i32>} : memref<32x128xf32, #tpu.memory_space<vmem>>, vector<25x128xf32>,
    return
  }
  func.func @transform_0(%arg0: i32) -> (i32, i32) {
    %c0_i32 = arith.constant 0 : i32
    %c0_i32_0 = arith.constant 0 : i32
    return %arg0, %c0_i32 : i32, i32
  }
  func.func @transform_1(%arg0: i32) -> (i32, i32) {
    %c0_i32 = arith.constant 0 : i32
    %c0_i32_0 = arith.constant 0 : i32
    return %arg0, %c0_i32 : i32, i32
  }
  func.func @transform_2(%arg0: i32) -> (i32, i32) {
    %c0_i32 = arith.constant 0 : i32
    %c0_i32_0 = arith.constant 0 : i32
    return %arg0, %c0_i32 : i32, i32
  }
  func.func @transform_3(%arg0: i32) -> (i32, i32) {
    %c0_i32 = arith.constant 0 : i32
    %c0_i32_0 = arith.constant 0 : i32
    return %arg0, %c0_i32 : i32, i32
  }
  func.func @transform_4(%arg0: i32) -> (i32, i32, i32) {
    %c0_i32 = arith.constant 0 : i32
    %c0_i32_0 = arith.constant 0 : i32
    %c0_i32_1 = arith.constant 0 : i32
    %c0_i32_2 = arith.constant 0 : i32
    return %c0_i32, %c0_i32_0, %c0_i32_1 : i32, i32, i32
  }
  func.func @transform_5(%arg0: i32) -> (i32, i32) {
    %c0_i32 = arith.constant 0 : i32
    %c0_i32_0 = arith.constant 0 : i32
    %c0_i32_1 = arith.constant 0 : i32
    return %c0_i32, %c0_i32_0 : i32, i32
  }
  func.func @transform_6(%arg0: i32) -> (i32, i32, i32) {
    %c0_i32 = arith.constant 0 : i32
    %c0_i32_0 = arith.constant 0 : i32
    %c0_i32_1 = arith.constant 0 : i32
    %c0_i32_2 = arith.constant 0 : i32
    return %c0_i32, %c0_i32_0, %c0_i32_1 : i32, i32, i32
  }
  func.func @transform_7(%arg0: i32) -> (i32, i32, i32) {
    %c0_i32 = arith.constant 0 : i32
    %c0_i32_0 = arith.constant 0 : i32
    %c0_i32_1 = arith.constant 0 : i32
    %c0_i32_2 = arith.constant 0 : i32
    return %c0_i32, %c0_i32_0, %c0_i32_1 : i32, i32, i32
  }
  func.func @transform_8(%arg0: i32) -> (i32, i32) {
    %c0_i32 = arith.constant 0 : i32
    %c0_i32_0 = arith.constant 0 : i32
    %c0_i32_1 = arith.constant 0 : i32
    return %c0_i32, %c0_i32_0 : i32, i32
  }
  func.func @transform_9(%arg0: i32) -> (i32, i32, i32) {
    %c0_i32 = arith.constant 0 : i32
    %c0_i32_0 = arith.constant 0 : i32
    %c0_i32_1 = arith.constant 0 : i32
    %c0_i32_2 = arith.constant 0 : i32
    return %c0_i32, %c0_i32_0, %c0_i32_1 : i32, i32, i32
  }
  func.func @transform_10(%arg0: i32) -> (i32, i32, i32) {
    %c0_i32 = arith.constant 0 : i32
    %c0_i32_0 = arith.constant 0 : i32
    %c0_i32_1 = arith.constant 0 : i32
    %c0_i32_2 = arith.constant 0 : i32
    return %c0_i32, %c0_i32_0, %c0_i32_1 : i32, i32, i32
  }
  func.func @transform_11(%arg0: i32) -> (i32, i32) {
    %c0_i32 = arith.constant 0 : i32
    %c0_i32_0 = arith.constant 0 : i32
    %c0_i32_1 = arith.constant 0 : i32
    return %c0_i32, %c0_i32_0 : i32, i32
  }
  func.func @transform_12(%arg0: i32) -> (i32, i32) {
    %c0_i32 = arith.constant 0 : i32
    %c0_i32_0 = arith.constant 0 : i32
    %c0_i32_1 = arith.constant 0 : i32
    return %c0_i32, %c0_i32_0 : i32, i32
  }
  func.func @transform_13(%arg0: i32) -> (i32, i32) {
    %c0_i32 = arith.constant 0 : i32
    %c0_i32_0 = arith.constant 0 : i32
    %c0_i32_1 = arith.constant 0 : i32
    return %c0_i32, %c0_i32_0 : i32, i32
  }
  func.func @transform_14(%arg0: i32) -> (i32, i32) {
    %c0_i32 = arith.constant 0 : i32
    %c0_i32_0 = arith.constant 0 : i32
    %c0_i32_1 = arith.constant 0 : i32
    return %c0_i32, %c0_i32_0 : i32, i32
  }
  func.func @transform_15(%arg0: i32) -> (i32, i32) {
    %c0_i32 = arith.constant 0 : i32
    %c0_i32_0 = arith.constant 0 : i32
    %c0_i32_1 = arith.constant 0 : i32
    return %c0_i32, %c0_i32_0 : i32, i32
  }
  func.func @transform_16(%arg0: i32) -> (i32, i32) {
    %c0_i32 = arith.constant 0 : i32
    %c0_i32_0 = arith.constant 0 : i32
    return %arg0, %c0_i32 : i32, i32
  }
}

</mosaic_0001>

<llo_original>
// kernel: net_forward.1
$region0: #{net_forward.1}
  #allocation0 [shape = 'u32[]', space=smem, size = 0x4, offset = 0x4, fixed_abs, tag = 'smem constant byte address 0x4 - core index']
  #allocation1 [shape = 'u32[72,128]{1,0:T(1,128)}', space=vmem, size = 0x9000, scoped, tag = 'internal scratch']
  %s0 = inlined_call_operand.vmem [shape: f32[64,96], index: 0, kind: input, shape index: {}]
  %s1 = inlined_call_operand.vmem [shape: f32[64,96], index: 1, kind: input, shape index: {}]
  %s2 = inlined_call_operand.vmem [shape: f32[64,96], index: 2, kind: input, shape index: {}]
  %s3 = inlined_call_operand.vmem [shape: f32[64,96], index: 3, kind: input, shape index: {}]
  %s4 = inlined_call_operand.vmem [shape: bf16[5,96,224], index: 4, kind: input, shape index: {}]
  %s5 = inlined_call_operand.vmem [shape: f32[1,224], index: 5, kind: input, shape index: {}]
  %s6 = inlined_call_operand.vmem [shape: bf16[2,224,112], index: 6, kind: input, shape index: {}]
  %s7 = inlined_call_operand.vmem [shape: bf16[5,112,160], index: 7, kind: input, shape index: {}]
  %s8 = inlined_call_operand.vmem [shape: f32[1,160], index: 8, kind: input, shape index: {}]
  %s9 = inlined_call_operand.vmem [shape: bf16[2,160,80], index: 9, kind: input, shape index: {}]
  %s10 = inlined_call_operand.vmem [shape: bf16[5,80,128], index: 10, kind: input, shape index: {}]
  %s11 = inlined_call_operand.vmem [shape: f32[1,128], index: 11, kind: input, shape index: {}]
  %s12 = inlined_call_operand.vmem [shape: bf16[128,128], index: 12, kind: input, shape index: {}]
  %s13 = inlined_call_operand.vmem [shape: f32[1,128], index: 13, kind: input, shape index: {}]
  %s14 = inlined_call_operand.vmem [shape: bf16[128,128], index: 14, kind: input, shape index: {}]
  %s15 = inlined_call_operand.vmem [shape: f32[1,128], index: 15, kind: input, shape index: {}]
  %s16 = inlined_call_operand.vmem [shape: f32[64,128], index: 16, kind: output, shape index: {}]
  %s17 = sld [smem:[#allocation0]]
  $region97: #{net_forward.1} parent=0
    _
  %s19 = ssub.s32 1, %s17
  %s20 = scalar_select 0, %s19, %s17
  loop: start=0, step=1, limit=4
  $region2: #{net_forward.1} parent=0 // loop_pre_header
    _
  $region3: #{net_forward.1} parent=0 // loop_header
    %s22 = sphi 0, %s26
    %p23 = scmp.ge.s32.totalorder %s22, 4
    %s32 = sphi 0, %s34
    %s35 = sphi 0, %s32
    %s36 = sphi 0, %s35
    %s52 = sphi 0, %s36
    %s58 = sphi 0, %s60
    %s61 = sphi 0, %s58
    %s62 = sphi 0, %s61
    %s78 = sphi 0, %s62
    %s84 = sphi 0, %s86
    %s87 = sphi 0, %s84
    %s88 = sphi 0, %s87
    %s104 = sphi 0, %s88
    %s110 = sphi 0, %s112
    %s113 = sphi 0, %s110
    %s114 = sphi 0, %s113
    %s130 = sphi 0, %s114
    %s134 = sphi 0, %s134
    %s136 = sphi 0, %s134
    %s137 = sphi 0, %s136
    %s151 = sphi 0, %s137
    %s155 = sphi 0, %s155
    %s157 = sphi 0, %s155
    %s158 = sphi 0, %s157
    %s172 = sphi 0, %s158
    %s176 = sphi 0, %s176
    %s178 = sphi 0, %s176
    %s179 = sphi 0, %s178
    %s193 = sphi 0, %s179
    %s197 = sphi 0, %s197
    %s199 = sphi 0, %s197
    %s200 = sphi 0, %s199
    %s214 = sphi 0, %s200
    %s218 = sphi 0, %s218
    %s220 = sphi 0, %s218
    %s221 = sphi 0, %s220
    %s235 = sphi 0, %s221
    %s239 = sphi 0, %s239
    %s241 = sphi 0, %s239
    %s242 = sphi 0, %s241
    %s256 = sphi 0, %s242
    %s260 = sphi 0, %s260
    %s262 = sphi 0, %s260
    %s263 = sphi 0, %s262
    %s277 = sphi 0, %s263
    %s281 = sphi 0, %s281
    %s283 = sphi 0, %s281
    %s284 = sphi 0, %s283
    %s298 = sphi 0, %s284
    %s302 = sphi 0, %s302
    %s304 = sphi 0, %s302
    %s305 = sphi 0, %s304
    %s319 = sphi 0, %s305
    %s323 = sphi 0, %s323
    %s325 = sphi 0, %s323
    %s326 = sphi 0, %s325
    %s340 = sphi 0, %s326
    %s344 = sphi 0, %s344
    %s346 = sphi 0, %s344
    %s347 = sphi 0, %s346
    %s361 = sphi 0, %s347
    %s365 = sphi 0, %s365
    %s367 = sphi 0, %s365
    %s368 = sphi 0, %s367
    %s382 = sphi 0, %s368
    %s388 = sphi 0, %s390
    %s391 = sphi 0, %s388
    %s392 = sphi 0, %s391
    %s408 = sphi 0, %s392
  $region4: #{net_forward.1} parent=0 // loop_header_branch
    %25 = sbr.rel (%p23) target = $region8
  $region5: #{net_forward.1} parent=0 // loop_body
    %s27 = ssub.s32 %s22, 1
    %s28 = ssub.s32 %s22, 2
    %s29 = sadd.s32 %s22, 1
    %s30 = ssub.s32 %s22, %s29
    %p31 = scmp.eq.s32.totalorder %s30, 0
    %s33 = sadd.s32 %s32, 1
    %s34 = scalar_select %p31, %s32, %s33
    %p37 = pneg %p31
    %p38 = scmp.eq.s32.totalorder %s22, 1
    %p39 = por %p37, %p38
    %p40 = scmp.ne.s32.totalorder %s32, %s35
    %p41 = scmp.eq.s32.totalorder %s22, 0
    %p42 = por %p40, %p41
    %p43 = scmp.ne.s32.totalorder %s32, %s35
    %p44 = scmp.eq.s32.totalorder %s27, 1
    %p45 = por %p43, %p44
    %p46 = scmp.ne.s32.totalorder %s35, %s36
    %p47 = scmp.eq.s32.totalorder %s27, 0
    %p48 = por %p46, %p47
    %p49 = scmp.ne.s32.totalorder %s35, %s36
    %p50 = scmp.eq.s32.totalorder %s28, 1
    %p51 = por %p49, %p50
    %p53 = scmp.ne.s32.totalorder %s36, %s52
    %p54 = scmp.eq.s32.totalorder %s28, 0
    %p55 = por %p53, %p54
    %s56 = ssub.s32 %s22, %s29
    %p57 = scmp.eq.s32.totalorder %s56, 0
    %s59 = sadd.s32 %s58, 1
    %s60 = scalar_select %p57, %s58, %s59
    %p63 = pneg %p57
    %p64 = scmp.eq.s32.totalorder %s22, 1
    %p65 = por %p63, %p64
    %p66 = scmp.ne.s32.totalorder %s58, %s61
    %p67 = scmp.eq.s32.totalorder %s22, 0
    %p68 = por %p66, %p67
    %p69 = scmp.ne.s32.totalorder %s58, %s61
    %p70 = scmp.eq.s32.totalorder %s27, 1
    %p71 = por %p69, %p70
    %p72 = scmp.ne.s32.totalorder %s61, %s62
    %p73 = scmp.eq.s32.totalorder %s27, 0
    %p74 = por %p72, %p73
    %p75 = scmp.ne.s32.totalorder %s61, %s62
    %p76 = scmp.eq.s32.totalorder %s28, 1
    %p77 = por %p75, %p76
    %p79 = scmp.ne.s32.totalorder %s62, %s78
    %p80 = scmp.eq.s32.totalorder %s28, 0
    %p81 = por %p79, %p80
    %s82 = ssub.s32 %s22, %s29
    %p83 = scmp.eq.s32.totalorder %s82, 0
    %s85 = sadd.s32 %s84, 1
    %s86 = scalar_select %p83, %s84, %s85
    %p89 = pneg %p83
    %p90 = scmp.eq.s32.totalorder %s22, 1
    %p91 = por %p89, %p90
    %p92 = scmp.ne.s32.totalorder %s84, %s87
    %p93 = scmp.eq.s32.totalorder %s22, 0
    %p94 = por %p92, %p93
    %p95 = scmp.ne.s32.totalorder %s84, %s87
    %p96 = scmp.eq.s32.totalorder %s27, 1
    %p97 = por %p95, %p96
    %p98 = scmp.ne.s32.totalorder %s87, %s88
    %p99 = scmp.eq.s32.totalorder %s27, 0
    %p100 = por %p98, %p99
    %p101 = scmp.ne.s32.totalorder %s87, %s88
    %p102 = scmp.eq.s32.totalorder %s28, 1
    %p103 = por %p101, %p102
    %p105 = scmp.ne.s32.totalorder %s88, %s104
    %p106 = scmp.eq.s32.totalorder %s28, 0
    %p107 = por %p105, %p106
    %s108 = ssub.s32 %s22, %s29
    %p109 = scmp.eq.s32.totalorder %s108, 0
    %s111 = sadd.s32 %s110, 1
    %s112 = scalar_select %p109, %s110, %s111
    %p115 = pneg %p109
    %p116 = scmp.eq.s32.totalorder %s22, 1
    %p117 = por %p115, %p116
    %p118 = scmp.ne.s32.totalorder %s110, %s113
    %p119 = scmp.eq.s32.totalorder %s22, 0
    %p120 = por %p118, %p119
    %p121 = scmp.ne.s32.totalorder %s110, %s113
    %p122 = scmp.eq.s32.totalorder %s27, 1
    %p123 = por %p121, %p122
    %p124 = scmp.ne.s32.totalorder %s113, %s114
    %p125 = scmp.eq.s32.totalorder %s27, 0
    %p126 = por %p124, %p125
    %p127 = scmp.ne.s32.totalorder %s113, %s114
    %p128 = scmp.eq.s32.totalorder %s28, 1
    %p129 = por %p127, %p128
    %p131 = scmp.ne.s32.totalorder %s114, %s130
    %p132 = scmp.eq.s32.totalorder %s28, 0
    %p133 = por %p131, %p132
    %s135 = sadd.s32 %s134, 1
    %p138 = scmp.eq.s32.totalorder %s22, 1
    %p139 = scmp.ne.s32.totalorder %s134, %s136
    %p140 = scmp.eq.s32.totalorder %s22, 0
    %p141 = por %p139, %p140
    %p142 = scmp.ne.s32.totalorder %s134, %s136
    %p143 = scmp.eq.s32.totalorder %s27, 1
    %p144 = por %p142, %p143
    %p145 = scmp.ne.s32.totalorder %s136, %s137
    %p146 = scmp.eq.s32.totalorder %s27, 0
    %p147 = por %p145, %p146
    %p148 = scmp.ne.s32.totalorder %s136, %s137
    %p149 = scmp.eq.s32.totalorder %s28, 1
    %p150 = por %p148, %p149
    %p152 = scmp.ne.s32.totalorder %s137, %s151
    %p153 = scmp.eq.s32.totalorder %s28, 0
    %p154 = por %p152, %p153
    %s156 = sadd.s32 %s155, 1
    %p159 = scmp.eq.s32.totalorder %s22, 1
    %p160 = scmp.ne.s32.totalorder %s155, %s157
    %p161 = scmp.eq.s32.totalorder %s22, 0
    %p162 = por %p160, %p161
    %p163 = scmp.ne.s32.totalorder %s155, %s157
    %p164 = scmp.eq.s32.totalorder %s27, 1
    %p165 = por %p163, %p164
    %p166 = scmp.ne.s32.totalorder %s157, %s158
    %p167 = scmp.eq.s32.totalorder %s27, 0
    %p168 = por %p166, %p167
    %p169 = scmp.ne.s32.totalorder %s157, %s158
    %p170 = scmp.eq.s32.totalorder %s28, 1
    %p171 = por %p169, %p170
    %p173 = scmp.ne.s32.totalorder %s158, %s172
    %p174 = scmp.eq.s32.totalorder %s28, 0
    %p175 = por %p173, %p174
    %s177 = sadd.s32 %s176, 1
    %p180 = scmp.eq.s32.totalorder %s22, 1
    %p181 = scmp.ne.s32.totalorder %s176, %s178
    %p182 = scmp.eq.s32.totalorder %s22, 0
    %p183 = por %p181, %p182
    %p184 = scmp.ne.s32.totalorder %s176, %s178
    %p185 = scmp.eq.s32.totalorder %s27, 1
    %p186 = por %p184, %p185
    %p187 = scmp.ne.s32.totalorder %s178, %s179
    %p188 = scmp.eq.s32.totalorder %s27, 0
    %p189 = por %p187, %p188
    %p190 = scmp.ne.s32.totalorder %s178, %s179
    %p191 = scmp.eq.s32.totalorder %s28, 1
    %p192 = por %p190, %p191
    %p194 = scmp.ne.s32.totalorder %s179, %s193
    %p195 = scmp.eq.s32.totalorder %s28, 0
    %p196 = por %p194, %p195
    %s198 = sadd.s32 %s197, 1
    %p201 = scmp.eq.s32.totalorder %s22, 1
    %p202 = scmp.ne.s32.totalorder %s197, %s199
    %p203 = scmp.eq.s32.totalorder %s22, 0
    %p204 = por %p202, %p203
    %p205 = scmp.ne.s32.totalorder %s197, %s199
    %p206 = scmp.eq.s32.totalorder %s27, 1
    %p207 = por %p205, %p206
    %p208 = scmp.ne.s32.totalorder %s199, %s200
    %p209 = scmp.eq.s32.totalorder %s27, 0
    %p210 = por %p208, %p209
    %p211 = scmp.ne.s32.totalorder %s199, %s200
    %p212 = scmp.eq.s32.totalorder %s28, 1
    %p213 = por %p211, %p212
    %p215 = scmp.ne.s32.totalorder %s200, %s214
    %p216 = scmp.eq.s32.totalorder %s28, 0
    %p217 = por %p215, %p216
    %s219 = sadd.s32 %s218, 1
    %p222 = scmp.eq.s32.totalorder %s22, 1
    %p223 = scmp.ne.s32.totalorder %s218, %s220
    %p224 = scmp.eq.s32.totalorder %s22, 0
    %p225 = por %p223, %p224
    %p226 = scmp.ne.s32.totalorder %s218, %s220
    %p227 = scmp.eq.s32.totalorder %s27, 1
    %p228 = por %p226, %p227
    %p229 = scmp.ne.s32.totalorder %s220, %s221
    %p230 = scmp.eq.s32.totalorder %s27, 0
    %p231 = por %p229, %p230
    %p232 = scmp.ne.s32.totalorder %s220, %s221
    %p233 = scmp.eq.s32.totalorder %s28, 1
    %p234 = por %p232, %p233
    %p236 = scmp.ne.s32.totalorder %s221, %s235
    %p237 = scmp.eq.s32.totalorder %s28, 0
    %p238 = por %p236, %p237
    %s240 = sadd.s32 %s239, 1
    %p243 = scmp.eq.s32.totalorder %s22, 1
    %p244 = scmp.ne.s32.totalorder %s239, %s241
    %p245 = scmp.eq.s32.totalorder %s22, 0
    %p246 = por %p244, %p245
    %p247 = scmp.ne.s32.totalorder %s239, %s241
    %p248 = scmp.eq.s32.totalorder %s27, 1
    %p249 = por %p247, %p248
    %p250 = scmp.ne.s32.totalorder %s241, %s242
    %p251 = scmp.eq.s32.totalorder %s27, 0
    %p252 = por %p250, %p251
    %p253 = scmp.ne.s32.totalorder %s241, %s242
    %p254 = scmp.eq.s32.totalorder %s28, 1
    %p255 = por %p253, %p254
    %p257 = scmp.ne.s32.totalorder %s242, %s256
    %p258 = scmp.eq.s32.totalorder %s28, 0
    %p259 = por %p257, %p258
    %s261 = sadd.s32 %s260, 1
    %p264 = scmp.eq.s32.totalorder %s22, 1
    %p265 = scmp.ne.s32.totalorder %s260, %s262
    %p266 = scmp.eq.s32.totalorder %s22, 0
    %p267 = por %p265, %p266
    %p268 = scmp.ne.s32.totalorder %s260, %s262
    %p269 = scmp.eq.s32.totalorder %s27, 1
    %p270 = por %p268, %p269
    %p271 = scmp.ne.s32.totalorder %s262, %s263
    %p272 = scmp.eq.s32.totalorder %s27, 0
    %p273 = por %p271, %p272
    %p274 = scmp.ne.s32.totalorder %s262, %s263
    %p275 = scmp.eq.s32.totalorder %s28, 1
    %p276 = por %p274, %p275
    %p278 = scmp.ne.s32.totalorder %s263, %s277
    %p279 = scmp.eq.s32.totalorder %s28, 0
    %p280 = por %p278, %p279
    %s282 = sadd.s32 %s281, 1
    %p285 = scmp.eq.s32.totalorder %s22, 1
    %p286 = scmp.ne.s32.totalorder %s281, %s283
    %p287 = scmp.eq.s32.totalorder %s22, 0
    %p288 = por %p286, %p287
    %p289 = scmp.ne.s32.totalorder %s281, %s283
    %p290 = scmp.eq.s32.totalorder %s27, 1
    %p291 = por %p289, %p290
    %p292 = scmp.ne.s32.totalorder %s283, %s284
    %p293 = scmp.eq.s32.totalorder %s27, 0
    %p294 = por %p292, %p293
    %p295 = scmp.ne.s32.totalorder %s283, %s284
    %p296 = scmp.eq.s32.totalorder %s28, 1
    %p297 = por %p295, %p296
    %p299 = scmp.ne.s32.totalorder %s284, %s298
    %p300 = scmp.eq.s32.totalorder %s28, 0
    %p301 = por %p299, %p300
    %s303 = sadd.s32 %s302, 1
    %p306 = scmp.eq.s32.totalorder %s22, 1
    %p307 = scmp.ne.s32.totalorder %s302, %s304
    %p308 = scmp.eq.s32.totalorder %s22, 0
    %p309 = por %p307, %p308
    %p310 = scmp.ne.s32.totalorder %s302, %s304
    %p311 = scmp.eq.s32.totalorder %s27, 1
    %p312 = por %p310, %p311
    %p313 = scmp.ne.s32.totalorder %s304, %s305
    %p314 = scmp.eq.s32.totalorder %s27, 0
    %p315 = por %p313, %p314
    %p316 = scmp.ne.s32.totalorder %s304, %s305
    %p317 = scmp.eq.s32.totalorder %s28, 1
    %p318 = por %p316, %p317
    %p320 = scmp.ne.s32.totalorder %s305, %s319
    %p321 = scmp.eq.s32.totalorder %s28, 0
    %p322 = por %p320, %p321
    %s324 = sadd.s32 %s323, 1
    %p327 = scmp.eq.s32.totalorder %s22, 1
    %p328 = scmp.ne.s32.totalorder %s323, %s325
    %p329 = scmp.eq.s32.totalorder %s22, 0
    %p330 = por %p328, %p329
    %p331 = scmp.ne.s32.totalorder %s323, %s325
    %p332 = scmp.eq.s32.totalorder %s27, 1
    %p333 = por %p331, %p332
    %p334 = scmp.ne.s32.totalorder %s325, %s326
    %p335 = scmp.eq.s32.totalorder %s27, 0
    %p336 = por %p334, %p335
    %p337 = scmp.ne.s32.totalorder %s325, %s326
    %p338 = scmp.eq.s32.totalorder %s28, 1
    %p339 = por %p337, %p338
    %p341 = scmp.ne.s32.totalorder %s326, %s340
    %p342 = scmp.eq.s32.totalorder %s28, 0
    %p343 = por %p341, %p342
    %s345 = sadd.s32 %s344, 1
    %p348 = scmp.eq.s32.totalorder %s22, 1
    %p349 = scmp.ne.s32.totalorder %s344, %s346
    %p350 = scmp.eq.s32.totalorder %s22, 0
    %p351 = por %p349, %p350
    %p352 = scmp.ne.s32.totalorder %s344, %s346
    %p353 = scmp.eq.s32.totalorder %s27, 1
    %p354 = por %p352, %p353
    %p355 = scmp.ne.s32.totalorder %s346, %s347
    %p356 = scmp.eq.s32.totalorder %s27, 0
    %p357 = por %p355, %p356
    %p358 = scmp.ne.s32.totalorder %s346, %s347
    %p359 = scmp.eq.s32.totalorder %s28, 1
    %p360 = por %p358, %p359
    %p362 = scmp.ne.s32.totalorder %s347, %s361
    %p363 = scmp.eq.s32.totalorder %s28, 0
    %p364 = por %p362, %p363
    %s366 = sadd.s32 %s365, 1
    %p369 = scmp.eq.s32.totalorder %s22, 1
    %p370 = scmp.ne.s32.totalorder %s365, %s367
    %p371 = scmp.eq.s32.totalorder %s22, 0
    %p372 = por %p370, %p371
    %p373 = scmp.ne.s32.totalorder %s365, %s367
    %p374 = scmp.eq.s32.totalorder %s27, 1
    %p375 = por %p373, %p374
    %p376 = scmp.ne.s32.totalorder %s367, %s368
    %p377 = scmp.eq.s32.totalorder %s27, 0
    %p378 = por %p376, %p377
    %p379 = scmp.ne.s32.totalorder %s367, %s368
    %p380 = scmp.eq.s32.totalorder %s28, 1
    %p381 = por %p379, %p380
    %p383 = scmp.ne.s32.totalorder %s368, %s382
    %p384 = scmp.eq.s32.totalorder %s28, 0
    %p385 = por %p383, %p384
    %s386 = ssub.s32 %s22, %s29
    %p387 = scmp.eq.s32.totalorder %s386, 0
    %s389 = sadd.s32 %s388, 1
    %s390 = scalar_select %p387, %s388, %s389
    %p393 = pneg %p387
    %p394 = scmp.eq.s32.totalorder %s22, 1
    %p395 = por %p393, %p394
    %p396 = scmp.ne.s32.totalorder %s388, %s391
    %p397 = scmp.eq.s32.totalorder %s22, 0
    %p398 = por %p396, %p397
    %p399 = scmp.ne.s32.totalorder %s388, %s391
    %p400 = scmp.eq.s32.totalorder %s27, 1
    %p401 = por %p399, %p400
    %p402 = scmp.ne.s32.totalorder %s391, %s392
    %p403 = scmp.eq.s32.totalorder %s27, 0
    %p404 = por %p402, %p403
    %p405 = scmp.ne.s32.totalorder %s391, %s392
    %p406 = scmp.eq.s32.totalorder %s28, 1
    %p407 = por %p405, %p406
    %p409 = scmp.ne.s32.totalorder %s392, %s408
    %p410 = scmp.eq.s32.totalorder %s28, 0
    %p411 = por %p409, %p410
    %p412 = scmp.le.s32.totalorder 1, %s22
    %p413 = scmp.lt.s32.totalorder %s22, 3
    %p414 = pnand %p412, %p413
    %p415 = pneg %p414
    // Predicated region
    $region9: #{net_forward.1} parent=5 // pred_check
      _
    $region10: #{net_forward.1} parent=5 // pred_check_branch
      %417 = sbr.rel (%p414) target = $region12
    $region11: #{net_forward.1} parent=5 // pred_region
      %s418 = ssub.s32 %s22, 1
      // Predicated region
      $region13: #{net_forward.1} parent=11 // pred_check
        %p419 = pneg %p147
      $region14: #{net_forward.1} parent=11 // pred_check_branch
        %421 = sbr.rel (%p419) target = $region16
      $region15: #{net_forward.1} parent=11 // pred_region
        _
      $region16: #{net_forward.1} parent=11 // pred_fallthru
        _
      // Predicated region
      $region17: #{net_forward.1} parent=11 // pred_check
        %p422 = pneg %p168
      $region18: #{net_forward.1} parent=11 // pred_check_branch
        %424 = sbr.rel (%p422) target = $region20
      $region19: #{net_forward.1} parent=11 // pred_region
        _
      $region20: #{net_forward.1} parent=11 // pred_fallthru
        _
      // Predicated region
      $region21: #{net_forward.1} parent=11 // pred_check
        %p425 = pneg %p189
      $region22: #{net_forward.1} parent=11 // pred_check_branch
        %427 = sbr.rel (%p425) target = $region24
      $region23: #{net_forward.1} parent=11 // pred_region
        _
      $region24: #{net_forward.1} parent=11 // pred_fallthru
        _
      // Predicated region
      $region25: #{net_forward.1} parent=11 // pred_check
        %p428 = pneg %p210
      $region26: #{net_forward.1} parent=11 // pred_check_branch
        %430 = sbr.rel (%p428) target = $region28
      $region27: #{net_forward.1} parent=11 // pred_region
        _
      $region28: #{net_forward.1} parent=11 // pred_fallthru
        _
      // Predicated region
      $region29: #{net_forward.1} parent=11 // pred_check
        %p431 = pneg %p231
      $region30: #{net_forward.1} parent=11 // pred_check_branch
        %433 = sbr.rel (%p431) target = $region32
      $region31: #{net_forward.1} parent=11 // pred_region
        _
      $region32: #{net_forward.1} parent=11 // pred_fallthru
        _
      // Predicated region
      $region33: #{net_forward.1} parent=11 // pred_check
        %p434 = pneg %p252
      $region34: #{net_forward.1} parent=11 // pred_check_branch
        %436 = sbr.rel (%p434) target = $region36
      $region35: #{net_forward.1} parent=11 // pred_region
        _
      $region36: #{net_forward.1} parent=11 // pred_fallthru
        _
      // Predicated region
      $region37: #{net_forward.1} parent=11 // pred_check
        %p437 = pneg %p273
      $region38: #{net_forward.1} parent=11 // pred_check_branch
        %439 = sbr.rel (%p437) target = $region40
      $region39: #{net_forward.1} parent=11 // pred_region
        _
      $region40: #{net_forward.1} parent=11 // pred_fallthru
        _
      // Predicated region
      $region41: #{net_forward.1} parent=11 // pred_check
        %p440 = pneg %p294
      $region42: #{net_forward.1} parent=11 // pred_check_branch
        %442 = sbr.rel (%p440) target = $region44
      $region43: #{net_forward.1} parent=11 // pred_region
        _
      $region44: #{net_forward.1} parent=11 // pred_fallthru
        _
      // Predicated region
      $region45: #{net_forward.1} parent=11 // pred_check
        %p443 = pneg %p315
      $region46: #{net_forward.1} parent=11 // pred_check_branch
        %445 = sbr.rel (%p443) target = $region48
      $region47: #{net_forward.1} parent=11 // pred_region
        _
      $region48: #{net_forward.1} parent=11 // pred_fallthru
        _
      // Predicated region
      $region49: #{net_forward.1} parent=11 // pred_check
        %p446 = pneg %p336
      $region50: #{net_forward.1} parent=11 // pred_check_branch
        %448 = sbr.rel (%p446) target = $region52
      $region51: #{net_forward.1} parent=11 // pred_region
        _
      $region52: #{net_forward.1} parent=11 // pred_fallthru
        _
      // Predicated region
      $region53: #{net_forward.1} parent=11 // pred_check
        %p449 = pneg %p357
      $region54: #{net_forward.1} parent=11 // pred_check_branch
        %451 = sbr.rel (%p449) target = $region56
      $region55: #{net_forward.1} parent=11 // pred_region
        _
      $region56: #{net_forward.1} parent=11 // pred_fallthru
        _
      // Predicated region
      $region57: #{net_forward.1} parent=11 // pred_check
        %p452 = pneg %p378
      $region58: #{net_forward.1} parent=11 // pred_check_branch
        %454 = sbr.rel (%p452) target = $region60
      $region59: #{net_forward.1} parent=11 // pred_region
        _
      $region60: #{net_forward.1} parent=11 // pred_fallthru
        _
    $region12: #{net_forward.1} parent=5 // pred_fallthru
      _
    %p455 = scmp.lt.s32.totalorder %s22, 2
    // Predicated region
    $region61: #{net_forward.1} parent=5 // pred_check
      %p456 = pneg %p455
    $region62: #{net_forward.1} parent=5 // pred_check_branch
      %458 = sbr.rel (%p456) target = $region64
    $region63: #{net_forward.1} parent=5 // pred_region
      // Predicated region
      $region65: #{net_forward.1} parent=63 // pred_check
        %p459 = pneg %p42
      $region66: #{net_forward.1} parent=63 // pred_check_branch
        %461 = sbr.rel (%p459) target = $region68
      $region67: #{net_forward.1} parent=63 // pred_region
        %s462 = smul.u32 4, %s22
        %p463 = scmp.lt.s32.totalorder %s462, 7
        %s464 = scalar_select %p463, %s462, 7
        %s465 = smul.addr %s464, 8
        %s466 = scalar_lea.vmem %s0, %s465
        %s467 = smul.u32 4, %s22
      $region68: #{net_forward.1} parent=63 // pred_fallthru
        _
      // Predicated region
      $region69: #{net_forward.1} parent=63 // pred_check
        %p468 = pneg %p68
      $region70: #{net_forward.1} parent=63 // pred_check_branch
        %470 = sbr.rel (%p468) target = $region72
      $region71: #{net_forward.1} parent=63 // pred_region
        %s471 = smul.u32 4, %s22
        %p472 = scmp.lt.s32.totalorder %s471, 7
        %s473 = scalar_select %p472, %s471, 7
        %s474 = smul.addr %s473, 8
        %s475 = scalar_lea.vmem %s1, %s474
        %s476 = smul.u32 4, %s22
      $region72: #{net_forward.1} parent=63 // pred_fallthru
        _
      // Predicated region
      $region73: #{net_forward.1} parent=63 // pred_check
        %p477 = pneg %p94
      $region74: #{net_forward.1} parent=63 // pred_check_branch
        %479 = sbr.rel (%p477) target = $region76
      $region75: #{net_forward.1} parent=63 // pred_region
        %s480 = smul.u32 4, %s22
        %p481 = scmp.lt.s32.totalorder %s480, 7
        %s482 = scalar_select %p481, %s480, 7
        %s483 = smul.addr %s482, 8
        %s484 = scalar_lea.vmem %s2, %s483
        %s485 = smul.u32 4, %s22
      $region76: #{net_forward.1} parent=63 // pred_fallthru
        _
      // Predicated region
      $region77: #{net_forward.1} parent=63 // pred_check
        %p486 = pneg %p120
      $region78: #{net_forward.1} parent=63 // pred_check_branch
        %488 = sbr.rel (%p486) target = $region80
      $region79: #{net_forward.1} parent=63 // pred_region
        %s489 = smul.u32 4, %s22
        %p490 = scmp.lt.s32.totalorder %s489, 7
        %s491 = scalar_select %p490, %s489, 7
        %s492 = smul.addr %s491, 8
        %s493 = scalar_lea.vmem %s3, %s492
        %s494 = smul.u32 4, %s22
      $region80: #{net_forward.1} parent=63 // pred_fallthru
        _
    $region64: #{net_forward.1} parent=5 // pred_fallthru
      _
    %p495 = scmp.le.s32.totalorder 1, %s22
    %p496 = scmp.lt.s32.totalorder %s22, 3
    %p497 = pnand %p495, %p496
    %p498 = pneg %p497
    // Predicated region
    $region81: #{net_forward.1} parent=5 // pred_check
      _
    $region82: #{net_forward.1} parent=5 // pred_check_branch
      %500 = sbr.rel (%p497) target = $region84
    $region83: #{net_forward.1} parent=5 // pred_region
      %s501 = ssub.s32 %s22, 1
      %s502 = smul.u32 4, %s27
      %p503 = scmp.lt.s32.totalorder %s502, 7
      %s504 = scalar_select %p503, %s502, 7
      %s505 = smul.addr %s504, 8
      %s506 = scalar_lea.vmem %s0, %s505
      %p507 = pneg %p48
      %p508 = pneg %p45
      %s509 = smul.u32 4, %s27
      %p510 = scmp.lt.s32.totalorder %s509, 7
      %s511 = scalar_select %p510, %s509, 7
      %s512 = smul.addr %s511, 8
      %s513 = scalar_lea.vmem %s1, %s512
      %p514 = pneg %p74
      %p515 = pneg %p71
      %s516 = smul.u32 4, %s27
      %p517 = scmp.lt.s32.totalorder %s516, 7
      %s518 = scalar_select %p517, %s516, 7
      %s519 = smul.addr %s518, 8
      %s520 = scalar_lea.vmem %s2, %s519
      %p521 = pneg %p100
      %p522 = pneg %p97
      %s523 = smul.u32 4, %s27
      %p524 = scmp.lt.s32.totalorder %s523, 7
      %s525 = scalar_select %p524, %s523, 7
      %s526 = smul.addr %s525, 8
      %s527 = scalar_lea.vmem %s3, %s526
      %p528 = pneg %p126
      %p529 = pneg %p123
      %p530 = pneg %p147
      %p531 = pneg %p144
      %p532 = pneg %p168
      %p533 = pneg %p165
      %p534 = pneg %p189
      %p535 = pneg %p186
      %p536 = pneg %p210
      %p537 = pneg %p207
      %p538 = pneg %p231
      %p539 = pneg %p228
      %p540 = pneg %p252
      %p541 = pneg %p249
      %p542 = pneg %p273
      %p543 = pneg %p270
      %p544 = pneg %p294
      %p545 = pneg %p291
      %p546 = pneg %p315
      %p547 = pneg %p312
      %p548 = pneg %p336
      %p549 = pneg %p333
      %p550 = pneg %p357
      %p551 = pneg %p354
      %p552 = pneg %p378
      %p553 = pneg %p375
      %p554 = pneg %p404
      %p555 = pneg %p401
      %s556 = smul.u32 4, %s27
      %p557 = scmp.lt.s32.totalorder %s556, 7
      %s558 = scalar_select %p557, %s556, 7
      %s559 = smul.addr %s558, 8
      %s560 = scalar_lea.vmem %s16, %s559
      %s561 = smul.u32 4, %s27
      %p562 = scmp.lt.s32.totalorder %s561, 7
      %s563 = scalar_select %p562, %s561, 7
      %s564 = smul.addr %s563, 8
      %s565 = scalar_lea.vmem %s0, %s564
      %s566 = smul.u32 4, %s27
      %s567 = smul.u32 4, %s27
      %p568 = scmp.lt.s32.totalorder %s567, 7
      %s569 = scalar_select %p568, %s567, 7
      %s570 = smul.addr %s569, 8
      %s571 = scalar_lea.vmem %s1, %s570
      %s572 = smul.u32 4, %s27
      %s573 = smul.u32 4, %s27
      %p574 = scmp.lt.s32.totalorder %s573, 7
      %s575 = scalar_select %p574, %s573, 7
      %s576 = smul.addr %s575, 8
      %s577 = scalar_lea.vmem %s2, %s576
      %s578 = smul.u32 4, %s27
      %s579 = smul.u32 4, %s27
      %p580 = scmp.lt.s32.totalorder %s579, 7
      %s581 = scalar_select %p580, %s579, 7
      %s582 = smul.addr %s581, 8
      %s583 = scalar_lea.vmem %s3, %s582
      %s584 = smul.u32 4, %s27
      %s585 = smul.u32 4, %s27
      %p586 = scmp.lt.s32.totalorder %s585, 7
      %s587 = scalar_select %p586, %s585, 7
      %s588 = smul.addr %s587, 8
      %s589 = scalar_lea.vmem %s16, %s588
      %s590 = smul.u32 4, %s27
      %v592 = vld [vmem:[%s565] sm:$0xff]
      %v593 = vld [vmem:[%s565 + $0x8] sm:$0xff]
      %v594 = vld [vmem:[%s565 + $0x10] sm:$0xff]
      %v595 = vld [vmem:[%s565 + $0x18] sm:$0xff]
      %v596 = vld [vmem:[%s571] sm:$0xff]
      %v597 = vld [vmem:[%s571 + $0x8] sm:$0xff]
      %v598 = vld [vmem:[%s571 + $0x10] sm:$0xff]
      %v599 = vld [vmem:[%s571 + $0x18] sm:$0xff]
      %v600 = vld [vmem:[%s577] sm:$0xff]
      %v601 = vld [vmem:[%s577 + $0x8] sm:$0xff]
      %v602 = vld [vmem:[%s577 + $0x10] sm:$0xff]
      %v603 = vld [vmem:[%s577 + $0x18] sm:$0xff]
      %v604 = vld [vmem:[%s583] sm:$0xff]
      %v605 = vld [vmem:[%s583 + $0x8] sm:$0xff]
      %v606 = vld [vmem:[%s583 + $0x10] sm:$0xff]
      %v607 = vld [vmem:[%s583 + $0x18] sm:$0xff]
      %v608 = vpack.c.bf16 %v593, %v592
      %v609 = vpack.c.bf16 %v595, %v594
      %v610 = vld [vmem:[%s4] sm:$0xff]
      %v611 = vld [vmem:[%s4 + $0x8] sm:$0xff]
      %v612 = vld [vmem:[%s4 + $0x10] sm:$0xff]
      %v613 = vld [vmem:[%s4 + $0x18] sm:$0xff]
      %v614 = vld [vmem:[%s4 + $0x20] sm:$0xff]
      %v615 = vld [vmem:[%s4 + $0x28] sm:$0xff]
      %v616 = vld [vmem:[%s4 + $0x30] sm:$0xff]
      %v617 = vld [vmem:[%s4 + $0x38] sm:$0xff]
      %v618 = vld [vmem:[%s4 + $0x40] sm:$0xff]
      %v619 = vld [vmem:[%s4 + $0x48] sm:$0xff]
      %v620 = vld [vmem:[%s4 + $0x50] sm:$0xff]
      %v621 = vld [vmem:[%s4 + $0x58] sm:$0xff]
      %v622 = vpack.c.bf16 %v597, %v596
      %v623 = vpack.c.bf16 %v599, %v598
      %s624 = scalar_lea.vmem %s4, 96
      %v625 = vld [vmem:[%s624] sm:$0xff]
      %v626 = vld [vmem:[%s624 + $0x8] sm:$0xff]
      %v627 = vld [vmem:[%s624 + $0x10] sm:$0xff]
      %v628 = vld [vmem:[%s624 + $0x18] sm:$0xff]
      %v629 = vld [vmem:[%s624 + $0x20] sm:$0xff]
      %v630 = vld [vmem:[%s624 + $0x28] sm:$0xff]
      %v631 = vld [vmem:[%s624 + $0x30] sm:$0xff]
      %v632 = vld [vmem:[%s624 + $0x38] sm:$0xff]
      %v633 = vld [vmem:[%s624 + $0x40] sm:$0xff]
      %v634 = vld [vmem:[%s624 + $0x48] sm:$0xff]
      %v635 = vld [vmem:[%s624 + $0x50] sm:$0xff]
      %v636 = vld [vmem:[%s624 + $0x58] sm:$0xff]
      %v649 = vunpack.c.l.b16 %v625
      %v650 = vunpack.c.h.b16 %v625
      %v651 = vunpack.c.l.b16 %v626
      %v652 = vunpack.c.h.b16 %v626
      %v653 = vunpack.c.l.b16 %v627
      %v654 = vunpack.c.h.b16 %v627
      %v655 = vunpack.c.l.b16 %v628
      %v656 = vunpack.c.h.b16 %v628
      %v657 = vunpack.c.l.b16 %v629
      %v658 = vunpack.c.h.b16 %v629
      %v659 = vunpack.c.l.b16 %v630
      %v660 = vunpack.c.h.b16 %v630
      %v661 = vunpack.c.l.b16 %v631
      %v662 = vunpack.c.h.b16 %v631
      %v663 = vunpack.c.l.b16 %v632
      %v664 = vunpack.c.h.b16 %v632
      %v665 = vunpack.c.l.b16 %v633
      %v666 = vunpack.c.h.b16 %v633
      %v667 = vunpack.c.l.b16 %v634
      %v668 = vunpack.c.h.b16 %v634
      %v669 = vunpack.c.l.b16 %v635
      %v670 = vunpack.c.h.b16 %v635
      %v671 = vunpack.c.l.b16 %v636
      %v672 = vunpack.c.h.b16 %v636
      %v673 = vpack.c.b16 %v651, %v649
      %v674 = vpack.c.b16 %v652, %v650
      %v675 = vpack.c.b16 %v655, %v653
      %v676 = vpack.c.b16 %v656, %v654
      %v677 = vpack.c.b16 %v659, %v657
      %v678 = vpack.c.b16 %v660, %v658
      %v679 = vpack.c.b16 %v663, %v661
      %v680 = vpack.c.b16 %v664, %v662
      %v681 = vpack.c.b16 %v667, %v665
      %v682 = vpack.c.b16 %v668, %v666
      %v683 = vpack.c.b16 %v671, %v669
      %v684 = vpack.c.b16 %v672, %v670
      %vm697 = vcmask 785408
      %v699 = vsel %vm697, %v622, 0
      %v702 = vsel %vm697, %v623, 0
      %704 = vmatpush.bf16.msra.mxu0 0
      %705 = vmatpush.bf16.msra.mxu0 0
      %706 = vmatpush.bf16.msra.mxu0 %v683
      %707 = vmatpush.bf16.msra.mxu0 %v681
      %708 = vmatpush.bf16.msra.mxu0 %v679
      %709 = vmatpush.bf16.msra.mxu0 %v677
      %710 = vmatpush.bf16.msra.mxu0 %v675
      %711 = vmatpush.bf16.msra.mxu0 %v673
      %712 = vmatmul.bf16.gmra.mxu0 %v699
      %v713 = vpop.f32.mrf.mxu0
      %v714 = vadd.f32 0.0, %v713
      %v715 = vpop.f32.mrf.mxu0
      %v716 = vadd.f32 0.0, %v715
      %717 = vmatmul.bf16.gmra.mxu0 %v702
      %v718 = vpop.f32.mrf.mxu0
      %v719 = vadd.f32 0.0, %v718
      %v720 = vpop.f32.mrf.mxu0
      %v721 = vadd.f32 0.0, %v720
      %722 = vdwg.mxu0
      %723 = vmatpush.bf16.msra.mxu0 0
      %724 = vmatpush.bf16.msra.mxu0 0
      %725 = vmatpush.bf16.msra.mxu0 %v684
      %726 = vmatpush.bf16.msra.mxu0 %v682
      %727 = vmatpush.bf16.msra.mxu0 %v680
      %728 = vmatpush.bf16.msra.mxu0 %v678
      %729 = vmatpush.bf16.msra.mxu0 %v676
      %730 = vmatpush.bf16.msra.mxu0 %v674
      %731 = vmatmul.bf16.gmra.mxu0 %v699
      %v732 = vpop.f32.mrf.mxu0
      %v733 = vadd.f32 0.0, %v732
      %v734 = vpop.f32.mrf.mxu0
      %v735 = vadd.f32 0.0, %v734
      %736 = vmatmul.bf16.gmra.mxu0 %v702
      %v737 = vpop.f32.mrf.mxu0
      %v738 = vadd.f32 0.0, %v737
      %v739 = vpop.f32.mrf.mxu0
      %v740 = vadd.f32 0.0, %v739
      %741 = vdwg.mxu0
      %v754 = vunpack.c.l.b16 %v610
      %v755 = vunpack.c.h.b16 %v610
      %v756 = vunpack.c.l.b16 %v611
      %v757 = vunpack.c.h.b16 %v611
      %v758 = vunpack.c.l.b16 %v612
      %v759 = vunpack.c.h.b16 %v612
      %v760 = vunpack.c.l.b16 %v613
      %v761 = vunpack.c.h.b16 %v613
      %v762 = vunpack.c.l.b16 %v614
      %v763 = vunpack.c.h.b16 %v614
      %v764 = vunpack.c.l.b16 %v615
      %v765 = vunpack.c.h.b16 %v615
      %v766 = vunpack.c.l.b16 %v616
      %v767 = vunpack.c.h.b16 %v616
      %v768 = vunpack.c.l.b16 %v617
      %v769 = vunpack.c.h.b16 %v617
      %v770 = vunpack.c.l.b16 %v618
      %v771 = vunpack.c.h.b16 %v618
      %v772 = vunpack.c.l.b16 %v619
      %v773 = vunpack.c.h.b16 %v619
      %v774 = vunpack.c.l.b16 %v620
      %v775 = vunpack.c.h.b16 %v620
      %v776 = vunpack.c.l.b16 %v621
      %v777 = vunpack.c.h.b16 %v621
      %v778 = vpack.c.b16 %v756, %v754
      %v779 = vpack.c.b16 %v757, %v755
      %v780 = vpack.c.b16 %v760, %v758
      %v781 = vpack.c.b16 %v761, %v759
      %v782 = vpack.c.b16 %v764, %v762
      %v783 = vpack.c.b16 %v765, %v763
      %v784 = vpack.c.b16 %v768, %v766
      %v785 = vpack.c.b16 %v769, %v767
      %v786 = vpack.c.b16 %v772, %v770
      %v787 = vpack.c.b16 %v773, %v771
      %v788 = vpack.c.b16 %v776, %v774
      %v789 = vpack.c.b16 %v777, %v775
      %v803 = vsel %vm697, %v608, 0
      %v806 = vsel %vm697, %v609, 0
      %808 = vmatpush.bf16.msra.mxu0 0
      %809 = vmatpush.bf16.msra.mxu0 0
      %810 = vmatpush.bf16.msra.mxu0 %v788
      %811 = vmatpush.bf16.msra.mxu0 %v786
      %812 = vmatpush.bf16.msra.mxu0 %v784
      %813 = vmatpush.bf16.msra.mxu0 %v782
      %814 = vmatpush.bf16.msra.mxu0 %v780
      %815 = vmatpush.bf16.msra.mxu0 %v778
      %816 = vmatmul.bf16.gmra.mxu0 %v803
      %v817 = vpop.f32.mrf.mxu0
      %v818 = vadd.f32 %v714, %v817
      %v819 = vpop.f32.mrf.mxu0
      %v820 = vadd.f32 %v716, %v819
      %821 = vmatmul.bf16.gmra.mxu0 %v806
      %v822 = vpop.f32.mrf.mxu0
      %v823 = vadd.f32 %v719, %v822
      %v824 = vpop.f32.mrf.mxu0
      %v825 = vadd.f32 %v721, %v824
      %826 = vdwg.mxu0
      %827 = vmatpush.bf16.msra.mxu0 0
      %828 = vmatpush.bf16.msra.mxu0 0
      %829 = vmatpush.bf16.msra.mxu0 %v789
      %830 = vmatpush.bf16.msra.mxu0 %v787
      %831 = vmatpush.bf16.msra.mxu0 %v785
      %832 = vmatpush.bf16.msra.mxu0 %v783
      %833 = vmatpush.bf16.msra.mxu0 %v781
      %834 = vmatpush.bf16.msra.mxu0 %v779
      %835 = vmatmul.bf16.gmra.mxu0 %v803
      %v836 = vpop.f32.mrf.mxu0
      %v837 = vadd.f32 %v733, %v836
      %v838 = vpop.f32.mrf.mxu0
      %v839 = vadd.f32 %v735, %v838
      %840 = vmatmul.bf16.gmra.mxu0 %v806
      %v841 = vpop.f32.mrf.mxu0
      %v842 = vadd.f32 %v738, %v841
      %v843 = vpop.f32.mrf.mxu0
      %v844 = vadd.f32 %v740, %v843
      %845 = vdwg.mxu0
      %v846 = vpack.c.bf16 %v601, %v600
      %v847 = vpack.c.bf16 %v603, %v602
      %s848 = scalar_lea.vmem %s4, 192
      %v849 = vld [vmem:[%s848] sm:$0xff]
      %v850 = vld [vmem:[%s848 + $0x8] sm:$0xff]
      %v851 = vld [vmem:[%s848 + $0x10] sm:$0xff]
      %v852 = vld [vmem:[%s848 + $0x18] sm:$0xff]
      %v853 = vld [vmem:[%s848 + $0x20] sm:$0xff]
      %v854 = vld [vmem:[%s848 + $0x28] sm:$0xff]
      %v855 = vld [vmem:[%s848 + $0x30] sm:$0xff]
      %v856 = vld [vmem:[%s848 + $0x38] sm:$0xff]
      %v857 = vld [vmem:[%s848 + $0x40] sm:$0xff]
      %v858 = vld [vmem:[%s848 + $0x48] sm:$0xff]
      %v859 = vld [vmem:[%s848 + $0x50] sm:$0xff]
      %v860 = vld [vmem:[%s848 + $0x58] sm:$0xff]
      %v873 = vunpack.c.l.b16 %v849
      %v874 = vunpack.c.h.b16 %v849
      %v875 = vunpack.c.l.b16 %v850
      %v876 = vunpack.c.h.b16 %v850
      %v877 = vunpack.c.l.b16 %v851
      %v878 = vunpack.c.h.b16 %v851
      %v879 = vunpack.c.l.b16 %v852
      %v880 = vunpack.c.h.b16 %v852
      %v881 = vunpack.c.l.b16 %v853
      %v882 = vunpack.c.h.b16 %v853
      %v883 = vunpack.c.l.b16 %v854
      %v884 = vunpack.c.h.b16 %v854
      %v885 = vunpack.c.l.b16 %v855
      %v886 = vunpack.c.h.b16 %v855
      %v887 = vunpack.c.l.b16 %v856
      %v888 = vunpack.c.h.b16 %v856
      %v889 = vunpack.c.l.b16 %v857
      %v890 = vunpack.c.h.b16 %v857
      %v891 = vunpack.c.l.b16 %v858
      %v892 = vunpack.c.h.b16 %v858
      %v893 = vunpack.c.l.b16 %v859
      %v894 = vunpack.c.h.b16 %v859
      %v895 = vunpack.c.l.b16 %v860
      %v896 = vunpack.c.h.b16 %v860
      %v897 = vpack.c.b16 %v875, %v873
      %v898 = vpack.c.b16 %v876, %v874
      %v899 = vpack.c.b16 %v879, %v877
      %v900 = vpack.c.b16 %v880, %v878
      %v901 = vpack.c.b16 %v883, %v881
      %v902 = vpack.c.b16 %v884, %v882
      %v903 = vpack.c.b16 %v887, %v885
      %v904 = vpack.c.b16 %v888, %v886
      %v905 = vpack.c.b16 %v891, %v889
      %v906 = vpack.c.b16 %v892, %v890
      %v907 = vpack.c.b16 %v895, %v893
      %v908 = vpack.c.b16 %v896, %v894
      %v922 = vsel %vm697, %v846, 0
      %v925 = vsel %vm697, %v847, 0
      %927 = vmatpush.bf16.msra.mxu0 0
      %928 = vmatpush.bf16.msra.mxu0 0
      %929 = vmatpush.bf16.msra.mxu0 %v907
      %930 = vmatpush.bf16.msra.mxu0 %v905
      %931 = vmatpush.bf16.msra.mxu0 %v903
      %932 = vmatpush.bf16.msra.mxu0 %v901
      %933 = vmatpush.bf16.msra.mxu0 %v899
      %934 = vmatpush.bf16.msra.mxu0 %v897
      %935 = vmatmul.bf16.gmra.mxu0 %v922
      %v936 = vpop.f32.mrf.mxu0
      %v937 = vadd.f32 0.0, %v936
      %v938 = vpop.f32.mrf.mxu0
      %v939 = vadd.f32 0.0, %v938
      %940 = vmatmul.bf16.gmra.mxu0 %v925
      %v941 = vpop.f32.mrf.mxu0
      %v942 = vadd.f32 0.0, %v941
      %v943 = vpop.f32.mrf.mxu0
      %v944 = vadd.f32 0.0, %v943
      %945 = vdwg.mxu0
      %946 = vmatpush.bf16.msra.mxu0 0
      %947 = vmatpush.bf16.msra.mxu0 0
      %948 = vmatpush.bf16.msra.mxu0 %v908
      %949 = vmatpush.bf16.msra.mxu0 %v906
      %950 = vmatpush.bf16.msra.mxu0 %v904
      %951 = vmatpush.bf16.msra.mxu0 %v902
      %952 = vmatpush.bf16.msra.mxu0 %v900
      %953 = vmatpush.bf16.msra.mxu0 %v898
      %954 = vmatmul.bf16.gmra.mxu0 %v922
      %v955 = vpop.f32.mrf.mxu0
      %v956 = vadd.f32 0.0, %v955
      %v957 = vpop.f32.mrf.mxu0
      %v958 = vadd.f32 0.0, %v957
      %959 = vmatmul.bf16.gmra.mxu0 %v925
      %v960 = vpop.f32.mrf.mxu0
      %v961 = vadd.f32 0.0, %v960
      %v962 = vpop.f32.mrf.mxu0
      %v963 = vadd.f32 0.0, %v962
      %964 = vdwg.mxu0
      %v965 = vadd.f32 %v818, %v937
      %v966 = vadd.f32 %v837, %v956
      %v967 = vadd.f32 %v820, %v939
      %v968 = vadd.f32 %v839, %v958
      %v969 = vadd.f32 %v823, %v942
      %v970 = vadd.f32 %v842, %v961
      %v971 = vadd.f32 %v825, %v944
      %v972 = vadd.f32 %v844, %v963
      %v973 = vpack.c.bf16 %v605, %v604
      %v974 = vpack.c.bf16 %v607, %v606
      %s975 = scalar_lea.vmem %s4, 288
      %v976 = vld [vmem:[%s975] sm:$0xff]
      %v977 = vld [vmem:[%s975 + $0x8] sm:$0xff]
      %v978 = vld [vmem:[%s975 + $0x10] sm:$0xff]
      %v979 = vld [vmem:[%s975 + $0x18] sm:$0xff]
      %v980 = vld [vmem:[%s975 + $0x20] sm:$0xff]
      %v981 = vld [vmem:[%s975 + $0x28] sm:$0xff]
      %v982 = vld [vmem:[%s975 + $0x30] sm:$0xff]
      %v983 = vld [vmem:[%s975 + $0x38] sm:$0xff]
      %v984 = vld [vmem:[%s975 + $0x40] sm:$0xff]
      %v985 = vld [vmem:[%s975 + $0x48] sm:$0xff]
      %v986 = vld [vmem:[%s975 + $0x50] sm:$0xff]
      %v987 = vld [vmem:[%s975 + $0x58] sm:$0xff]
      %v1000 = vunpack.c.l.b16 %v976
      %v1001 = vunpack.c.h.b16 %v976
      %v1002 = vunpack.c.l.b16 %v977
      %v1003 = vunpack.c.h.b16 %v977
      %v1004 = vunpack.c.l.b16 %v978
      %v1005 = vunpack.c.h.b16 %v978
      %v1006 = vunpack.c.l.b16 %v979
      %v1007 = vunpack.c.h.b16 %v979
      %v1008 = vunpack.c.l.b16 %v980
      %v1009 = vunpack.c.h.b16 %v980
      %v1010 = vunpack.c.l.b16 %v981
      %v1011 = vunpack.c.h.b16 %v981
      %v1012 = vunpack.c.l.b16 %v982
      %v1013 = vunpack.c.h.b16 %v982
      %v1014 = vunpack.c.l.b16 %v983
      %v1015 = vunpack.c.h.b16 %v983
      %v1016 = vunpack.c.l.b16 %v984
      %v1017 = vunpack.c.h.b16 %v984
      %v1018 = vunpack.c.l.b16 %v985
      %v1019 = vunpack.c.h.b16 %v985
      %v1020 = vunpack.c.l.b16 %v986
      %v1021 = vunpack.c.h.b16 %v986
      %v1022 = vunpack.c.l.b16 %v987
      %v1023 = vunpack.c.h.b16 %v987
      %v1024 = vpack.c.b16 %v1002, %v1000
      %v1025 = vpack.c.b16 %v1003, %v1001
      %v1026 = vpack.c.b16 %v1006, %v1004
      %v1027 = vpack.c.b16 %v1007, %v1005
      %v1028 = vpack.c.b16 %v1010, %v1008
      %v1029 = vpack.c.b16 %v1011, %v1009
      %v1030 = vpack.c.b16 %v1014, %v1012
      %v1031 = vpack.c.b16 %v1015, %v1013
      %v1032 = vpack.c.b16 %v1018, %v1016
      %v1033 = vpack.c.b16 %v1019, %v1017
      %v1034 = vpack.c.b16 %v1022, %v1020
      %v1035 = vpack.c.b16 %v1023, %v1021
      %v1049 = vsel %vm697, %v973, 0
      %v1052 = vsel %vm697, %v974, 0
      %1054 = vmatpush.bf16.msra.mxu0 0
      %1055 = vmatpush.bf16.msra.mxu0 0
      %1056 = vmatpush.bf16.msra.mxu0 %v1034
      %1057 = vmatpush.bf16.msra.mxu0 %v1032
      %1058 = vmatpush.bf16.msra.mxu0 %v1030
      %1059 = vmatpush.bf16.msra.mxu0 %v1028
      %1060 = vmatpush.bf16.msra.mxu0 %v1026
      %1061 = vmatpush.bf16.msra.mxu0 %v1024
      %1062 = vmatmul.bf16.gmra.mxu0 %v1049
      %v1063 = vpop.f32.mrf.mxu0
      %v1064 = vadd.f32 0.0, %v1063
      %v1065 = vpop.f32.mrf.mxu0
      %v1066 = vadd.f32 0.0, %v1065
      %1067 = vmatmul.bf16.gmra.mxu0 %v1052
      %v1068 = vpop.f32.mrf.mxu0
      %v1069 = vadd.f32 0.0, %v1068
      %v1070 = vpop.f32.mrf.mxu0
      %v1071 = vadd.f32 0.0, %v1070
      %1072 = vdwg.mxu0
      %1073 = vmatpush.bf16.msra.mxu0 0
      %1074 = vmatpush.bf16.msra.mxu0 0
      %1075 = vmatpush.bf16.msra.mxu0 %v1035
      %1076 = vmatpush.bf16.msra.mxu0 %v1033
      %1077 = vmatpush.bf16.msra.mxu0 %v1031
      %1078 = vmatpush.bf16.msra.mxu0 %v1029
      %1079 = vmatpush.bf16.msra.mxu0 %v1027
      %1080 = vmatpush.bf16.msra.mxu0 %v1025
      %1081 = vmatmul.bf16.gmra.mxu0 %v1049
      %v1082 = vpop.f32.mrf.mxu0
      %v1083 = vadd.f32 0.0, %v1082
      %v1084 = vpop.f32.mrf.mxu0
      %v1085 = vadd.f32 0.0, %v1084
      %1086 = vmatmul.bf16.gmra.mxu0 %v1052
      %v1087 = vpop.f32.mrf.mxu0
      %v1088 = vadd.f32 0.0, %v1087
      %v1089 = vpop.f32.mrf.mxu0
      %v1090 = vadd.f32 0.0, %v1089
      %1091 = vdwg.mxu0
      %v1092 = vadd.f32 %v965, %v1064
      %v1093 = vadd.f32 %v966, %v1083
      %v1094 = vadd.f32 %v967, %v1066
      %v1095 = vadd.f32 %v968, %v1085
      %v1096 = vadd.f32 %v969, %v1069
      %v1097 = vadd.f32 %v970, %v1088
      %v1098 = vadd.f32 %v971, %v1071
      %v1099 = vadd.f32 %v972, %v1090
      %s1100 = scalar_lea.vmem %s4, 384
      %v1101 = vld [vmem:[%s1100] sm:$0xff]
      %v1102 = vld [vmem:[%s1100 + $0x8] sm:$0xff]
      %v1103 = vld [vmem:[%s1100 + $0x10] sm:$0xff]
      %v1104 = vld [vmem:[%s1100 + $0x18] sm:$0xff]
      %v1105 = vld [vmem:[%s1100 + $0x20] sm:$0xff]
      %v1106 = vld [vmem:[%s1100 + $0x28] sm:$0xff]
      %v1107 = vld [vmem:[%s1100 + $0x30] sm:$0xff]
      %v1108 = vld [vmem:[%s1100 + $0x38] sm:$0xff]
      %v1109 = vld [vmem:[%s1100 + $0x40] sm:$0xff]
      %v1110 = vld [vmem:[%s1100 + $0x48] sm:$0xff]
      %v1111 = vld [vmem:[%s1100 + $0x50] sm:$0xff]
      %v1112 = vld [vmem:[%s1100 + $0x58] sm:$0xff]
      %vm1113 = vsmask.f32 7424
      %v1114 = vshrl.u32 %v608, 16
      %v1116 = vshll.u32 %v608, 16
      %v1118 = vrot.slane %v1116, 1
      %v1119 = vor.u32 %v1114, %v1118
      %v1120 = vshll.u32 %v609, 16
      %v1122 = vrot.slane %v1120, 1
      %v1123 = vsel %vm1113, %v1119, %v1122
      %v1124 = vshrl.u32 %v609, 16
      %v1126 = vor.u32 %v1124, %v1122
      %v1139 = vunpack.c.l.b16 %v1101
      %v1140 = vunpack.c.h.b16 %v1101
      %v1141 = vunpack.c.l.b16 %v1102
      %v1142 = vunpack.c.h.b16 %v1102
      %v1143 = vunpack.c.l.b16 %v1103
      %v1144 = vunpack.c.h.b16 %v1103
      %v1145 = vunpack.c.l.b16 %v1104
      %v1146 = vunpack.c.h.b16 %v1104
      %v1147 = vunpack.c.l.b16 %v1105
      %v1148 = vunpack.c.h.b16 %v1105
      %v1149 = vunpack.c.l.b16 %v1106
      %v1150 = vunpack.c.h.b16 %v1106
      %v1151 = vunpack.c.l.b16 %v1107
      %v1152 = vunpack.c.h.b16 %v1107
      %v1153 = vunpack.c.l.b16 %v1108
      %v1154 = vunpack.c.h.b16 %v1108
      %v1155 = vunpack.c.l.b16 %v1109
      %v1156 = vunpack.c.h.b16 %v1109
      %v1157 = vunpack.c.l.b16 %v1110
      %v1158 = vunpack.c.h.b16 %v1110
      %v1159 = vunpack.c.l.b16 %v1111
      %v1160 = vunpack.c.h.b16 %v1111
      %v1161 = vunpack.c.l.b16 %v1112
      %v1162 = vunpack.c.h.b16 %v1112
      %v1163 = vpack.c.b16 %v1141, %v1139
      %v1164 = vpack.c.b16 %v1142, %v1140
      %v1165 = vpack.c.b16 %v1145, %v1143
      %v1166 = vpack.c.b16 %v1146, %v1144
      %v1167 = vpack.c.b16 %v1149, %v1147
      %v1168 = vpack.c.b16 %v1150, %v1148
      %v1169 = vpack.c.b16 %v1153, %v1151
      %v1170 = vpack.c.b16 %v1154, %v1152
      %v1171 = vpack.c.b16 %v1157, %v1155
      %v1172 = vpack.c.b16 %v1158, %v1156
      %v1173 = vpack.c.b16 %v1161, %v1159
      %v1174 = vpack.c.b16 %v1162, %v1160
      %v1188 = vsel %vm697, %v1123, 0
      %v1191 = vsel %vm697, %v1126, 0
      %1193 = vmatpush.bf16.msra.mxu0 0
      %1194 = vmatpush.bf16.msra.mxu0 0
      %1195 = vmatpush.bf16.msra.mxu0 %v1173
      %1196 = vmatpush.bf16.msra.mxu0 %v1171
      %1197 = vmatpush.bf16.msra.mxu0 %v1169
      %1198 = vmatpush.bf16.msra.mxu0 %v1167
      %1199 = vmatpush.bf16.msra.mxu0 %v1165
      %1200 = vmatpush.bf16.msra.mxu0 %v1163
      %1201 = vmatmul.bf16.gmra.mxu0 %v1188
      %v1202 = vpop.f32.mrf.mxu0
      %v1203 = vadd.f32 0.0, %v1202
      %v1204 = vpop.f32.mrf.mxu0
      %v1205 = vadd.f32 0.0, %v1204
      %1206 = vmatmul.bf16.gmra.mxu0 %v1191
      %v1207 = vpop.f32.mrf.mxu0
      %v1208 = vadd.f32 0.0, %v1207
      %v1209 = vpop.f32.mrf.mxu0
      %v1210 = vadd.f32 0.0, %v1209
      %1211 = vdwg.mxu0
      %1212 = vmatpush.bf16.msra.mxu0 0
      %1213 = vmatpush.bf16.msra.mxu0 0
      %1214 = vmatpush.bf16.msra.mxu0 %v1174
      %1215 = vmatpush.bf16.msra.mxu0 %v1172
      %1216 = vmatpush.bf16.msra.mxu0 %v1170
      %1217 = vmatpush.bf16.msra.mxu0 %v1168
      %1218 = vmatpush.bf16.msra.mxu0 %v1166
      %1219 = vmatpush.bf16.msra.mxu0 %v1164
      %1220 = vmatmul.bf16.gmra.mxu0 %v1188
      %v1221 = vpop.f32.mrf.mxu0
      %v1222 = vadd.f32 0.0, %v1221
      %v1223 = vpop.f32.mrf.mxu0
      %v1224 = vadd.f32 0.0, %v1223
      %1225 = vmatmul.bf16.gmra.mxu0 %v1191
      %v1226 = vpop.f32.mrf.mxu0
      %v1227 = vadd.f32 0.0, %v1226
      %v1228 = vpop.f32.mrf.mxu0
      %v1229 = vadd.f32 0.0, %v1228
      %1230 = vdwg.mxu0
      %v1231 = vadd.f32 %v1092, %v1203
      %v1232 = vadd.f32 %v1093, %v1222
      %v1233 = vadd.f32 %v1094, %v1205
      %v1234 = vadd.f32 %v1095, %v1224
      %v1235 = vadd.f32 %v1096, %v1208
      %v1236 = vadd.f32 %v1097, %v1227
      %v1237 = vadd.f32 %v1098, %v1210
      %v1238 = vadd.f32 %v1099, %v1229
      %v1239 = vld [vmem:[%s5] sm:$0x3]
      %v1241 = vperm.slane %v1239, 0
      %v1242 = vperm.slane %v1239, 1
      %v1245 = vadd.f32 %v1231, %v1241
      %v1246 = vadd.f32 %v1232, %v1242
      %v1247 = vadd.f32 %v1233, %v1241
      %v1248 = vadd.f32 %v1234, %v1242
      %v1249 = vadd.f32 %v1235, %v1241
      %v1250 = vadd.f32 %v1236, %v1242
      %v1251 = vadd.f32 %v1237, %v1241
      %v1252 = vadd.f32 %v1238, %v1242
      %1253 = vmatpush.bf16.msra.mxu0 0
      %1254 = vmatpush.bf16.msra.mxu0 0
      %1255 = vmatpush.bf16.msra.mxu0 %v683
      %1256 = vmatpush.bf16.msra.mxu0 %v681
      %1257 = vmatpush.bf16.msra.mxu0 %v679
      %1258 = vmatpush.bf16.msra.mxu0 %v677
      %1259 = vmatpush.bf16.msra.mxu0 %v675
      %1260 = vmatpush.bf16.msra.mxu0 %v673
      %1261 = vmatmul.bf16.gmra.mxu0 %v922
      %v1262 = vpop.f32.mrf.mxu0
      %v1263 = vadd.f32 0.0, %v1262
      %v1264 = vpop.f32.mrf.mxu0
      %v1265 = vadd.f32 0.0, %v1264
      %1266 = vmatmul.bf16.gmra.mxu0 %v925
      %v1267 = vpop.f32.mrf.mxu0
      %v1268 = vadd.f32 0.0, %v1267
      %v1269 = vpop.f32.mrf.mxu0
      %v1270 = vadd.f32 0.0, %v1269
      %1271 = vdwg.mxu0
      %1272 = vmatpush.bf16.msra.mxu0 0
      %1273 = vmatpush.bf16.msra.mxu0 0
      %1274 = vmatpush.bf16.msra.mxu0 %v684
      %1275 = vmatpush.bf16.msra.mxu0 %v682
      %1276 = vmatpush.bf16.msra.mxu0 %v680
      %1277 = vmatpush.bf16.msra.mxu0 %v678
      %1278 = vmatpush.bf16.msra.mxu0 %v676
      %1279 = vmatpush.bf16.msra.mxu0 %v674
      %1280 = vmatmul.bf16.gmra.mxu0 %v922
      %v1281 = vpop.f32.mrf.mxu0
      %v1282 = vadd.f32 0.0, %v1281
      %v1283 = vpop.f32.mrf.mxu0
      %v1284 = vadd.f32 0.0, %v1283
      %1285 = vmatmul.bf16.gmra.mxu0 %v925
      %v1286 = vpop.f32.mrf.mxu0
      %v1287 = vadd.f32 0.0, %v1286
      %v1288 = vpop.f32.mrf.mxu0
      %v1289 = vadd.f32 0.0, %v1288
      %1290 = vdwg.mxu0
      %1291 = vmatpush.bf16.msra.mxu0 0
      %1292 = vmatpush.bf16.msra.mxu0 0
      %1293 = vmatpush.bf16.msra.mxu0 %v788
      %1294 = vmatpush.bf16.msra.mxu0 %v786
      %1295 = vmatpush.bf16.msra.mxu0 %v784
      %1296 = vmatpush.bf16.msra.mxu0 %v782
      %1297 = vmatpush.bf16.msra.mxu0 %v780
      %1298 = vmatpush.bf16.msra.mxu0 %v778
      %1299 = vmatmul.bf16.gmra.mxu0 %v699
      %v1300 = vpop.f32.mrf.mxu0
      %v1301 = vadd.f32 %v1263, %v1300
      %v1302 = vpop.f32.mrf.mxu0
      %v1303 = vadd.f32 %v1265, %v1302
      %1304 = vmatmul.bf16.gmra.mxu0 %v702
      %v1305 = vpop.f32.mrf.mxu0
      %v1306 = vadd.f32 %v1268, %v1305
      %v1307 = vpop.f32.mrf.mxu0
      %v1308 = vadd.f32 %v1270, %v1307
      %1309 = vdwg.mxu0
      %1310 = vmatpush.bf16.msra.mxu0 0
      %1311 = vmatpush.bf16.msra.mxu0 0
      %1312 = vmatpush.bf16.msra.mxu0 %v789
      %1313 = vmatpush.bf16.msra.mxu0 %v787
      %1314 = vmatpush.bf16.msra.mxu0 %v785
      %1315 = vmatpush.bf16.msra.mxu0 %v783
      %1316 = vmatpush.bf16.msra.mxu0 %v781
      %1317 = vmatpush.bf16.msra.mxu0 %v779
      %1318 = vmatmul.bf16.gmra.mxu0 %v699
      %v1319 = vpop.f32.mrf.mxu0
      %v1320 = vadd.f32 %v1282, %v1319
      %v1321 = vpop.f32.mrf.mxu0
      %v1322 = vadd.f32 %v1284, %v1321
      %1323 = vmatmul.bf16.gmra.mxu0 %v702
      %v1324 = vpop.f32.mrf.mxu0
      %v1325 = vadd.f32 %v1287, %v1324
      %v1326 = vpop.f32.mrf.mxu0
      %v1327 = vadd.f32 %v1289, %v1326
      %1328 = vdwg.mxu0
      %1329 = vmatpush.bf16.msra.mxu0 0
      %1330 = vmatpush.bf16.msra.mxu0 0
      %1331 = vmatpush.bf16.msra.mxu0 %v907
      %1332 = vmatpush.bf16.msra.mxu0 %v905
      %1333 = vmatpush.bf16.msra.mxu0 %v903
      %1334 = vmatpush.bf16.msra.mxu0 %v901
      %1335 = vmatpush.bf16.msra.mxu0 %v899
      %1336 = vmatpush.bf16.msra.mxu0 %v897
      %1337 = vmatmul.bf16.gmra.mxu0 %v1049
      %v1338 = vpop.f32.mrf.mxu0
      %v1339 = vadd.f32 0.0, %v1338
      %v1340 = vpop.f32.mrf.mxu0
      %v1341 = vadd.f32 0.0, %v1340
      %1342 = vmatmul.bf16.gmra.mxu0 %v1052
      %v1343 = vpop.f32.mrf.mxu0
      %v1344 = vadd.f32 0.0, %v1343
      %v1345 = vpop.f32.mrf.mxu0
      %v1346 = vadd.f32 0.0, %v1345
      %1347 = vdwg.mxu0
      %1348 = vmatpush.bf16.msra.mxu0 0
      %1349 = vmatpush.bf16.msra.mxu0 0
      %1350 = vmatpush.bf16.msra.mxu0 %v908
      %1351 = vmatpush.bf16.msra.mxu0 %v906
      %1352 = vmatpush.bf16.msra.mxu0 %v904
      %1353 = vmatpush.bf16.msra.mxu0 %v902
      %1354 = vmatpush.bf16.msra.mxu0 %v900
      %1355 = vmatpush.bf16.msra.mxu0 %v898
      %1356 = vmatmul.bf16.gmra.mxu0 %v1049
      %v1357 = vpop.f32.mrf.mxu0
      %v1358 = vadd.f32 0.0, %v1357
      %v1359 = vpop.f32.mrf.mxu0
      %v1360 = vadd.f32 0.0, %v1359
      %1361 = vmatmul.bf16.gmra.mxu0 %v1052
      %v1362 = vpop.f32.mrf.mxu0
      %v1363 = vadd.f32 0.0, %v1362
      %v1364 = vpop.f32.mrf.mxu0
      %v1365 = vadd.f32 0.0, %v1364
      %1366 = vdwg.mxu0
      %v1367 = vadd.f32 %v1301, %v1339
      %v1368 = vadd.f32 %v1320, %v1358
      %v1369 = vadd.f32 %v1303, %v1341
      %v1370 = vadd.f32 %v1322, %v1360
      %v1371 = vadd.f32 %v1306, %v1344
      %v1372 = vadd.f32 %v1325, %v1363
      %v1373 = vadd.f32 %v1308, %v1346
      %v1374 = vadd.f32 %v1327, %v1365
      %1375 = vmatpush.bf16.msra.mxu0 0
      %1376 = vmatpush.bf16.msra.mxu0 0
      %1377 = vmatpush.bf16.msra.mxu0 %v1034
      %1378 = vmatpush.bf16.msra.mxu0 %v1032
      %1379 = vmatpush.bf16.msra.mxu0 %v1030
      %1380 = vmatpush.bf16.msra.mxu0 %v1028
      %1381 = vmatpush.bf16.msra.mxu0 %v1026
      %1382 = vmatpush.bf16.msra.mxu0 %v1024
      %1383 = vmatmul.bf16.gmra.mxu0 %v1188
      %v1384 = vpop.f32.mrf.mxu0
      %v1385 = vadd.f32 0.0, %v1384
      %v1386 = vpop.f32.mrf.mxu0
      %v1387 = vadd.f32 0.0, %v1386
      %1388 = vmatmul.bf16.gmra.mxu0 %v1191
      %v1389 = vpop.f32.mrf.mxu0
      %v1390 = vadd.f32 0.0, %v1389
      %v1391 = vpop.f32.mrf.mxu0
      %v1392 = vadd.f32 0.0, %v1391
      %1393 = vdwg.mxu0
      %1394 = vmatpush.bf16.msra.mxu0 0
      %1395 = vmatpush.bf16.msra.mxu0 0
      %1396 = vmatpush.bf16.msra.mxu0 %v1035
      %1397 = vmatpush.bf16.msra.mxu0 %v1033
      %1398 = vmatpush.bf16.msra.mxu0 %v1031
      %1399 = vmatpush.bf16.msra.mxu0 %v1029
      %1400 = vmatpush.bf16.msra.mxu0 %v1027
      %1401 = vmatpush.bf16.msra.mxu0 %v1025
      %1402 = vmatmul.bf16.gmra.mxu0 %v1188
      %v1403 = vpop.f32.mrf.mxu0
      %v1404 = vadd.f32 0.0, %v1403
      %v1405 = vpop.f32.mrf.mxu0
      %v1406 = vadd.f32 0.0, %v1405
      %1407 = vmatmul.bf16.gmra.mxu0 %v1191
      %v1408 = vpop.f32.mrf.mxu0
      %v1409 = vadd.f32 0.0, %v1408
      %v1410 = vpop.f32.mrf.mxu0
      %v1411 = vadd.f32 0.0, %v1410
      %1412 = vdwg.mxu0
      %v1413 = vadd.f32 %v1367, %v1385
      %v1414 = vadd.f32 %v1368, %v1404
      %v1415 = vadd.f32 %v1369, %v1387
      %v1416 = vadd.f32 %v1370, %v1406
      %v1417 = vadd.f32 %v1371, %v1390
      %v1418 = vadd.f32 %v1372, %v1409
      %v1419 = vadd.f32 %v1373, %v1392
      %v1420 = vadd.f32 %v1374, %v1411
      %v1421 = vshrl.u32 %v622, 16
      %v1423 = vshll.u32 %v622, 16
      %v1425 = vrot.slane %v1423, 1
      %v1426 = vor.u32 %v1421, %v1425
      %v1427 = vshll.u32 %v623, 16
      %v1429 = vrot.slane %v1427, 1
      %v1430 = vsel %vm1113, %v1426, %v1429
      %v1431 = vshrl.u32 %v623, 16
      %v1433 = vor.u32 %v1431, %v1429
      %v1435 = vsel %vm697, %v1430, 0
      %v1438 = vsel %vm697, %v1433, 0
      %1440 = vmatpush.bf16.msra.mxu0 0
      %1441 = vmatpush.bf16.msra.mxu0 0
      %1442 = vmatpush.bf16.msra.mxu0 %v1173
      %1443 = vmatpush.bf16.msra.mxu0 %v1171
      %1444 = vmatpush.bf16.msra.mxu0 %v1169
      %1445 = vmatpush.bf16.msra.mxu0 %v1167
      %1446 = vmatpush.bf16.msra.mxu0 %v1165
      %1447 = vmatpush.bf16.msra.mxu0 %v1163
      %1448 = vmatmul.bf16.gmra.mxu0 %v1435
      %v1449 = vpop.f32.mrf.mxu0
      %v1450 = vadd.f32 0.0, %v1449
      %v1451 = vpop.f32.mrf.mxu0
      %v1452 = vadd.f32 0.0, %v1451
      %1453 = vmatmul.bf16.gmra.mxu0 %v1438
      %v1454 = vpop.f32.mrf.mxu0
      %v1455 = vadd.f32 0.0, %v1454
      %v1456 = vpop.f32.mrf.mxu0
      %v1457 = vadd.f32 0.0, %v1456
      %1458 = vdwg.mxu0
      %1459 = vmatpush.bf16.msra.mxu0 0
      %1460 = vmatpush.bf16.msra.mxu0 0
      %1461 = vmatpush.bf16.msra.mxu0 %v1174
      %1462 = vmatpush.bf16.msra.mxu0 %v1172
      %1463 = vmatpush.bf16.msra.mxu0 %v1170
      %1464 = vmatpush.bf16.msra.mxu0 %v1168
      %1465 = vmatpush.bf16.msra.mxu0 %v1166
      %1466 = vmatpush.bf16.msra.mxu0 %v1164
      %1467 = vmatmul.bf16.gmra.mxu0 %v1435
      %v1468 = vpop.f32.mrf.mxu0
      %v1469 = vadd.f32 0.0, %v1468
      %v1470 = vpop.f32.mrf.mxu0
      %v1471 = vadd.f32 0.0, %v1470
      %1472 = vmatmul.bf16.gmra.mxu0 %v1438
      %v1473 = vpop.f32.mrf.mxu0
      %v1474 = vadd.f32 0.0, %v1473
      %v1475 = vpop.f32.mrf.mxu0
      %v1476 = vadd.f32 0.0, %v1475
      %1477 = vdwg.mxu0
      %v1478 = vadd.f32 %v1413, %v1450
      %v1479 = vadd.f32 %v1414, %v1469
      %v1480 = vadd.f32 %v1415, %v1452
      %v1481 = vadd.f32 %v1416, %v1471
      %v1482 = vadd.f32 %v1417, %v1455
      %v1483 = vadd.f32 %v1418, %v1474
      %v1484 = vadd.f32 %v1419, %v1457
      %v1485 = vadd.f32 %v1420, %v1476
      %v1486 = vadd.f32 %v1478, %v1241
      %v1487 = vadd.f32 %v1479, %v1242
      %v1488 = vadd.f32 %v1480, %v1241
      %v1489 = vadd.f32 %v1481, %v1242
      %v1490 = vadd.f32 %v1482, %v1241
      %v1491 = vadd.f32 %v1483, %v1242
      %v1492 = vadd.f32 %v1484, %v1241
      %v1493 = vadd.f32 %v1485, %v1242
      %1494 = vmatpush.bf16.msra.mxu0 0
      %1495 = vmatpush.bf16.msra.mxu0 0
      %1496 = vmatpush.bf16.msra.mxu0 %v683
      %1497 = vmatpush.bf16.msra.mxu0 %v681
      %1498 = vmatpush.bf16.msra.mxu0 %v679
      %1499 = vmatpush.bf16.msra.mxu0 %v677
      %1500 = vmatpush.bf16.msra.mxu0 %v675
      %1501 = vmatpush.bf16.msra.mxu0 %v673
      %1502 = vmatmul.bf16.gmra.mxu0 %v1049
      %v1503 = vpop.f32.mrf.mxu0
      %v1504 = vadd.f32 0.0, %v1503
      %v1505 = vpop.f32.mrf.mxu0
      %v1506 = vadd.f32 0.0, %v1505
      %1507 = vmatmul.bf16.gmra.mxu0 %v1052
      %v1508 = vpop.f32.mrf.mxu0
      %v1509 = vadd.f32 0.0, %v1508
      %v1510 = vpop.f32.mrf.mxu0
      %v1511 = vadd.f32 0.0, %v1510
      %1512 = vdwg.mxu0
      %1513 = vmatpush.bf16.msra.mxu0 0
      %1514 = vmatpush.bf16.msra.mxu0 0
      %1515 = vmatpush.bf16.msra.mxu0 %v684
      %1516 = vmatpush.bf16.msra.mxu0 %v682
      %1517 = vmatpush.bf16.msra.mxu0 %v680
      %1518 = vmatpush.bf16.msra.mxu0 %v678
      %1519 = vmatpush.bf16.msra.mxu0 %v676
      %1520 = vmatpush.bf16.msra.mxu0 %v674
      %1521 = vmatmul.bf16.gmra.mxu0 %v1049
      %v1522 = vpop.f32.mrf.mxu0
      %v1523 = vadd.f32 0.0, %v1522
      %v1524 = vpop.f32.mrf.mxu0
      %v1525 = vadd.f32 0.0, %v1524
      %1526 = vmatmul.bf16.gmra.mxu0 %v1052
      %v1527 = vpop.f32.mrf.mxu0
      %v1528 = vadd.f32 0.0, %v1527
      %v1529 = vpop.f32.mrf.mxu0
      %v1530 = vadd.f32 0.0, %v1529
      %1531 = vdwg.mxu0
      %1532 = vmatpush.bf16.msra.mxu0 0
      %1533 = vmatpush.bf16.msra.mxu0 0
      %1534 = vmatpush.bf16.msra.mxu0 %v788
      %1535 = vmatpush.bf16.msra.mxu0 %v786
      %1536 = vmatpush.bf16.msra.mxu0 %v784
      %1537 = vmatpush.bf16.msra.mxu0 %v782
      %1538 = vmatpush.bf16.msra.mxu0 %v780
      %1539 = vmatpush.bf16.msra.mxu0 %v778
      %1540 = vmatmul.bf16.gmra.mxu0 %v922
      %v1541 = vpop.f32.mrf.mxu0
      %v1542 = vadd.f32 %v1504, %v1541
      %v1543 = vpop.f32.mrf.mxu0
      %v1544 = vadd.f32 %v1506, %v1543
      %1545 = vmatmul.bf16.gmra.mxu0 %v925
      %v1546 = vpop.f32.mrf.mxu0
      %v1547 = vadd.f32 %v1509, %v1546
      %v1548 = vpop.f32.mrf.mxu0
      %v1549 = vadd.f32 %v1511, %v1548
      %1550 = vdwg.mxu0
      %1551 = vmatpush.bf16.msra.mxu0 0
      %1552 = vmatpush.bf16.msra.mxu0 0
      %1553 = vmatpush.bf16.msra.mxu0 %v789
      %1554 = vmatpush.bf16.msra.mxu0 %v787
      %1555 = vmatpush.bf16.msra.mxu0 %v785
      %1556 = vmatpush.bf16.msra.mxu0 %v783
      %1557 = vmatpush.bf16.msra.mxu0 %v781
      %1558 = vmatpush.bf16.msra.mxu0 %v779
      %1559 = vmatmul.bf16.gmra.mxu0 %v922
      %v1560 = vpop.f32.mrf.mxu0
      %v1561 = vadd.f32 %v1523, %v1560
      %v1562 = vpop.f32.mrf.mxu0
      %v1563 = vadd.f32 %v1525, %v1562
      %1564 = vmatmul.bf16.gmra.mxu0 %v925
      %v1565 = vpop.f32.mrf.mxu0
      %v1566 = vadd.f32 %v1528, %v1565
      %v1567 = vpop.f32.mrf.mxu0
      %v1568 = vadd.f32 %v1530, %v1567
      %1569 = vdwg.mxu0
      %1570 = vmatpush.bf16.msra.mxu0 0
      %1571 = vmatpush.bf16.msra.mxu0 0
      %1572 = vmatpush.bf16.msra.mxu0 %v907
      %1573 = vmatpush.bf16.msra.mxu0 %v905
      %1574 = vmatpush.bf16.msra.mxu0 %v903
      %1575 = vmatpush.bf16.msra.mxu0 %v901
      %1576 = vmatpush.bf16.msra.mxu0 %v899
      %1577 = vmatpush.bf16.msra.mxu0 %v897
      %1578 = vmatmul.bf16.gmra.mxu0 %v1188
      %v1579 = vpop.f32.mrf.mxu0
      %v1580 = vadd.f32 0.0, %v1579
      %v1581 = vpop.f32.mrf.mxu0
      %v1582 = vadd.f32 0.0, %v1581
      %1583 = vmatmul.bf16.gmra.mxu0 %v1191
      %v1584 = vpop.f32.mrf.mxu0
      %v1585 = vadd.f32 0.0, %v1584
      %v1586 = vpop.f32.mrf.mxu0
      %v1587 = vadd.f32 0.0, %v1586
      %1588 = vdwg.mxu0
      %1589 = vmatpush.bf16.msra.mxu0 0
      %1590 = vmatpush.bf16.msra.mxu0 0
      %1591 = vmatpush.bf16.msra.mxu0 %v908
      %1592 = vmatpush.bf16.msra.mxu0 %v906
      %1593 = vmatpush.bf16.msra.mxu0 %v904
      %1594 = vmatpush.bf16.msra.mxu0 %v902
      %1595 = vmatpush.bf16.msra.mxu0 %v900
      %1596 = vmatpush.bf16.msra.mxu0 %v898
      %1597 = vmatmul.bf16.gmra.mxu0 %v1188
      %v1598 = vpop.f32.mrf.mxu0
      %v1599 = vadd.f32 0.0, %v1598
      %v1600 = vpop.f32.mrf.mxu0
      %v1601 = vadd.f32 0.0, %v1600
      %1602 = vmatmul.bf16.gmra.mxu0 %v1191
      %v1603 = vpop.f32.mrf.mxu0
      %v1604 = vadd.f32 0.0, %v1603
      %v1605 = vpop.f32.mrf.mxu0
      %v1606 = vadd.f32 0.0, %v1605
      %1607 = vdwg.mxu0
      %v1608 = vadd.f32 %v1542, %v1580
      %v1609 = vadd.f32 %v1561, %v1599
      %v1610 = vadd.f32 %v1544, %v1582
      %v1611 = vadd.f32 %v1563, %v1601
      %v1612 = vadd.f32 %v1547, %v1585
      %v1613 = vadd.f32 %v1566, %v1604
      %v1614 = vadd.f32 %v1549, %v1587
      %v1615 = vadd.f32 %v1568, %v1606
      %1616 = vmatpush.bf16.msra.mxu0 0
      %1617 = vmatpush.bf16.msra.mxu0 0
      %1618 = vmatpush.bf16.msra.mxu0 %v1034
      %1619 = vmatpush.bf16.msra.mxu0 %v1032
      %1620 = vmatpush.bf16.msra.mxu0 %v1030
      %1621 = vmatpush.bf16.msra.mxu0 %v1028
      %1622 = vmatpush.bf16.msra.mxu0 %v1026
      %1623 = vmatpush.bf16.msra.mxu0 %v1024
      %1624 = vmatmul.bf16.gmra.mxu0 %v1435
      %v1625 = vpop.f32.mrf.mxu0
      %v1626 = vadd.f32 0.0, %v1625
      %v1627 = vpop.f32.mrf.mxu0
      %v1628 = vadd.f32 0.0, %v1627
      %1629 = vmatmul.bf16.gmra.mxu0 %v1438
      %v1630 = vpop.f32.mrf.mxu0
      %v1631 = vadd.f32 0.0, %v1630
      %v1632 = vpop.f32.mrf.mxu0
      %v1633 = vadd.f32 0.0, %v1632
      %1634 = vdwg.mxu0
      %1635 = vmatpush.bf16.msra.mxu0 0
      %1636 = vmatpush.bf16.msra.mxu0 0
      %1637 = vmatpush.bf16.msra.mxu0 %v1035
      %1638 = vmatpush.bf16.msra.mxu0 %v1033
      %1639 = vmatpush.bf16.msra.mxu0 %v1031
      %1640 = vmatpush.bf16.msra.mxu0 %v1029
      %1641 = vmatpush.bf16.msra.mxu0 %v1027
      %1642 = vmatpush.bf16.msra.mxu0 %v1025
      %1643 = vmatmul.bf16.gmra.mxu0 %v1435
      %v1644 = vpop.f32.mrf.mxu0
      %v1645 = vadd.f32 0.0, %v1644
      %v1646 = vpop.f32.mrf.mxu0
      %v1647 = vadd.f32 0.0, %v1646
      %1648 = vmatmul.bf16.gmra.mxu0 %v1438
      %v1649 = vpop.f32.mrf.mxu0
      %v1650 = vadd.f32 0.0, %v1649
      %v1651 = vpop.f32.mrf.mxu0
      %v1652 = vadd.f32 0.0, %v1651
      %1653 = vdwg.mxu0
      %v1654 = vadd.f32 %v1608, %v1626
      %v1655 = vadd.f32 %v1609, %v1645
      %v1656 = vadd.f32 %v1610, %v1628
      %v1657 = vadd.f32 %v1611, %v1647
      %v1658 = vadd.f32 %v1612, %v1631
      %v1659 = vadd.f32 %v1613, %v1650
      %v1660 = vadd.f32 %v1614, %v1633
      %v1661 = vadd.f32 %v1615, %v1652
      %v1662 = vshrl.u32 %v846, 16
      %v1664 = vshll.u32 %v846, 16
      %v1666 = vrot.slane %v1664, 1
      %v1667 = vor.u32 %v1662, %v1666
      %v1668 = vshll.u32 %v847, 16
      %v1670 = vrot.slane %v1668, 1
      %v1671 = vsel %vm1113, %v1667, %v1670
      %v1672 = vshrl.u32 %v847, 16
      %v1674 = vor.u32 %v1672, %v1670
      %v1676 = vsel %vm697, %v1671, 0
      %v1679 = vsel %vm697, %v1674, 0
      %1681 = vmatpush.bf16.msra.mxu0 0
      %1682 = vmatpush.bf16.msra.mxu0 0
      %1683 = vmatpush.bf16.msra.mxu0 %v1173
      %1684 = vmatpush.bf16.msra.mxu0 %v1171
      %1685 = vmatpush.bf16.msra.mxu0 %v1169
      %1686 = vmatpush.bf16.msra.mxu0 %v1167
      %1687 = vmatpush.bf16.msra.mxu0 %v1165
      %1688 = vmatpush.bf16.msra.mxu0 %v1163
      %1689 = vmatmul.bf16.gmra.mxu0 %v1676
      %v1690 = vpop.f32.mrf.mxu0
      %v1691 = vadd.f32 0.0, %v1690
      %v1692 = vpop.f32.mrf.mxu0
      %v1693 = vadd.f32 0.0, %v1692
      %1694 = vmatmul.bf16.gmra.mxu0 %v1679
      %v1695 = vpop.f32.mrf.mxu0
      %v1696 = vadd.f32 0.0, %v1695
      %v1697 = vpop.f32.mrf.mxu0
      %v1698 = vadd.f32 0.0, %v1697
      %1699 = vdwg.mxu0
      %1700 = vmatpush.bf16.msra.mxu0 0
      %1701 = vmatpush.bf16.msra.mxu0 0
      %1702 = vmatpush.bf16.msra.mxu0 %v1174
      %1703 = vmatpush.bf16.msra.mxu0 %v1172
      %1704 = vmatpush.bf16.msra.mxu0 %v1170
      %1705 = vmatpush.bf16.msra.mxu0 %v1168
      %1706 = vmatpush.bf16.msra.mxu0 %v1166
      %1707 = vmatpush.bf16.msra.mxu0 %v1164
      %1708 = vmatmul.bf16.gmra.mxu0 %v1676
      %v1709 = vpop.f32.mrf.mxu0
      %v1710 = vadd.f32 0.0, %v1709
      %v1711 = vpop.f32.mrf.mxu0
      %v1712 = vadd.f32 0.0, %v1711
      %1713 = vmatmul.bf16.gmra.mxu0 %v1679
      %v1714 = vpop.f32.mrf.mxu0
      %v1715 = vadd.f32 0.0, %v1714
      %v1716 = vpop.f32.mrf.mxu0
      %v1717 = vadd.f32 0.0, %v1716
      %1718 = vdwg.mxu0
      %v1719 = vadd.f32 %v1654, %v1691
      %v1720 = vadd.f32 %v1655, %v1710
      %v1721 = vadd.f32 %v1656, %v1693
      %v1722 = vadd.f32 %v1657, %v1712
      %v1723 = vadd.f32 %v1658, %v1696
      %v1724 = vadd.f32 %v1659, %v1715
      %v1725 = vadd.f32 %v1660, %v1698
      %v1726 = vadd.f32 %v1661, %v1717
      %v1727 = vadd.f32 %v1719, %v1241
      %v1728 = vadd.f32 %v1720, %v1242
      %v1729 = vadd.f32 %v1721, %v1241
      %v1730 = vadd.f32 %v1722, %v1242
      %v1731 = vadd.f32 %v1723, %v1241
      %v1732 = vadd.f32 %v1724, %v1242
      %v1733 = vadd.f32 %v1725, %v1241
      %v1734 = vadd.f32 %v1726, %v1242
      %1735 = vmatpush.bf16.msra.mxu0 0
      %1736 = vmatpush.bf16.msra.mxu0 0
      %1737 = vmatpush.bf16.msra.mxu0 %v683
      %1738 = vmatpush.bf16.msra.mxu0 %v681
      %1739 = vmatpush.bf16.msra.mxu0 %v679
      %1740 = vmatpush.bf16.msra.mxu0 %v677
      %1741 = vmatpush.bf16.msra.mxu0 %v675
      %1742 = vmatpush.bf16.msra.mxu0 %v673
      %1743 = vmatmul.bf16.gmra.mxu0 %v1188
      %v1744 = vpop.f32.mrf.mxu0
      %v1745 = vadd.f32 0.0, %v1744
      %v1746 = vpop.f32.mrf.mxu0
      %v1747 = vadd.f32 0.0, %v1746
      %1748 = vmatmul.bf16.gmra.mxu0 %v1191
      %v1749 = vpop.f32.mrf.mxu0
      %v1750 = vadd.f32 0.0, %v1749
      %v1751 = vpop.f32.mrf.mxu0
      %v1752 = vadd.f32 0.0, %v1751
      %1753 = vdwg.mxu0
      %1754 = vmatpush.bf16.msra.mxu0 0
      %1755 = vmatpush.bf16.msra.mxu0 0
      %1756 = vmatpush.bf16.msra.mxu0 %v684
      %1757 = vmatpush.bf16.msra.mxu0 %v682
      %1758 = vmatpush.bf16.msra.mxu0 %v680
      %1759 = vmatpush.bf16.msra.mxu0 %v678
      %1760 = vmatpush.bf16.msra.mxu0 %v676
      %1761 = vmatpush.bf16.msra.mxu0 %v674
      %1762 = vmatmul.bf16.gmra.mxu0 %v1188
      %v1763 = vpop.f32.mrf.mxu0
      %v1764 = vadd.f32 0.0, %v1763
      %v1765 = vpop.f32.mrf.mxu0
      %v1766 = vadd.f32 0.0, %v1765
      %1767 = vmatmul.bf16.gmra.mxu0 %v1191
      %v1768 = vpop.f32.mrf.mxu0
      %v1769 = vadd.f32 0.0, %v1768
      %v1770 = vpop.f32.mrf.mxu0
      %v1771 = vadd.f32 0.0, %v1770
      %1772 = vdwg.mxu0
      %1773 = vmatpush.bf16.msra.mxu0 0
      %1774 = vmatpush.bf16.msra.mxu0 0
      %1775 = vmatpush.bf16.msra.mxu0 %v788
      %1776 = vmatpush.bf16.msra.mxu0 %v786
      %1777 = vmatpush.bf16.msra.mxu0 %v784
      %1778 = vmatpush.bf16.msra.mxu0 %v782
      %1779 = vmatpush.bf16.msra.mxu0 %v780
      %1780 = vmatpush.bf16.msra.mxu0 %v778
      %1781 = vmatmul.bf16.gmra.mxu0 %v1049
      %v1782 = vpop.f32.mrf.mxu0
      %v1783 = vadd.f32 %v1745, %v1782
      %v1784 = vpop.f32.mrf.mxu0
      %v1785 = vadd.f32 %v1747, %v1784
      %1786 = vmatmul.bf16.gmra.mxu0 %v1052
      %v1787 = vpop.f32.mrf.mxu0
      %v1788 = vadd.f32 %v1750, %v1787
      %v1789 = vpop.f32.mrf.mxu0
      %v1790 = vadd.f32 %v1752, %v1789
      %1791 = vdwg.mxu0
      %1792 = vmatpush.bf16.msra.mxu0 0
      %1793 = vmatpush.bf16.msra.mxu0 0
      %1794 = vmatpush.bf16.msra.mxu0 %v789
      %1795 = vmatpush.bf16.msra.mxu0 %v787
      %1796 = vmatpush.bf16.msra.mxu0 %v785
      %1797 = vmatpush.bf16.msra.mxu0 %v783
      %1798 = vmatpush.bf16.msra.mxu0 %v781
      %1799 = vmatpush.bf16.msra.mxu0 %v779
      %1800 = vmatmul.bf16.gmra.mxu0 %v1049
      %v1801 = vpop.f32.mrf.mxu0
      %v1802 = vadd.f32 %v1764, %v1801
      %v1803 = vpop.f32.mrf.mxu0
      %v1804 = vadd.f32 %v1766, %v1803
      %1805 = vmatmul.bf16.gmra.mxu0 %v1052
      %v1806 = vpop.f32.mrf.mxu0
      %v1807 = vadd.f32 %v1769, %v1806
      %v1808 = vpop.f32.mrf.mxu0
      %v1809 = vadd.f32 %v1771, %v1808
      %1810 = vdwg.mxu0
      %1811 = vmatpush.bf16.msra.mxu0 0
      %1812 = vmatpush.bf16.msra.mxu0 0
      %1813 = vmatpush.bf16.msra.mxu0 %v907
      %1814 = vmatpush.bf16.msra.mxu0 %v905
      %1815 = vmatpush.bf16.msra.mxu0 %v903
      %1816 = vmatpush.bf16.msra.mxu0 %v901
      %1817 = vmatpush.bf16.msra.mxu0 %v899
      %1818 = vmatpush.bf16.msra.mxu0 %v897
      %1819 = vmatmul.bf16.gmra.mxu0 %v1435
      %v1820 = vpop.f32.mrf.mxu0
      %v1821 = vadd.f32 0.0, %v1820
      %v1822 = vpop.f32.mrf.mxu0
      %v1823 = vadd.f32 0.0, %v1822
      %1824 = vmatmul.bf16.gmra.mxu0 %v1438
      %v1825 = vpop.f32.mrf.mxu0
      %v1826 = vadd.f32 0.0, %v1825
      %v1827 = vpop.f32.mrf.mxu0
      %v1828 = vadd.f32 0.0, %v1827
      %1829 = vdwg.mxu0
      %1830 = vmatpush.bf16.msra.mxu0 0
      %1831 = vmatpush.bf16.msra.mxu0 0
      %1832 = vmatpush.bf16.msra.mxu0 %v908
      %1833 = vmatpush.bf16.msra.mxu0 %v906
      %1834 = vmatpush.bf16.msra.mxu0 %v904
      %1835 = vmatpush.bf16.msra.mxu0 %v902
      %1836 = vmatpush.bf16.msra.mxu0 %v900
      %1837 = vmatpush.bf16.msra.mxu0 %v898
      %1838 = vmatmul.bf16.gmra.mxu0 %v1435
      %v1839 = vpop.f32.mrf.mxu0
      %v1840 = vadd.f32 0.0, %v1839
      %v1841 = vpop.f32.mrf.mxu0
      %v1842 = vadd.f32 0.0, %v1841
      %1843 = vmatmul.bf16.gmra.mxu0 %v1438
      %v1844 = vpop.f32.mrf.mxu0
      %v1845 = vadd.f32 0.0, %v1844
      %v1846 = vpop.f32.mrf.mxu0
      %v1847 = vadd.f32 0.0, %v1846
      %1848 = vdwg.mxu0
      %v1849 = vadd.f32 %v1783, %v1821
      %v1850 = vadd.f32 %v1802, %v1840
      %v1851 = vadd.f32 %v1785, %v1823
      %v1852 = vadd.f32 %v1804, %v1842
      %v1853 = vadd.f32 %v1788, %v1826
      %v1854 = vadd.f32 %v1807, %v1845
      %v1855 = vadd.f32 %v1790, %v1828
      %v1856 = vadd.f32 %v1809, %v1847
      %1857 = vmatpush.bf16.msra.mxu0 0
      %1858 = vmatpush.bf16.msra.mxu0 0
      %1859 = vmatpush.bf16.msra.mxu0 %v1034
      %1860 = vmatpush.bf16.msra.mxu0 %v1032
      %1861 = vmatpush.bf16.msra.mxu0 %v1030
      %1862 = vmatpush.bf16.msra.mxu0 %v1028
      %1863 = vmatpush.bf16.msra.mxu0 %v1026
      %1864 = vmatpush.bf16.msra.mxu0 %v1024
      %1865 = vmatmul.bf16.gmra.mxu0 %v1676
      %v1866 = vpop.f32.mrf.mxu0
      %v1867 = vadd.f32 0.0, %v1866
      %v1868 = vpop.f32.mrf.mxu0
      %v1869 = vadd.f32 0.0, %v1868
      %1870 = vmatmul.bf16.gmra.mxu0 %v1679
      %v1871 = vpop.f32.mrf.mxu0
      %v1872 = vadd.f32 0.0, %v1871
      %v1873 = vpop.f32.mrf.mxu0
      %v1874 = vadd.f32 0.0, %v1873
      %1875 = vdwg.mxu0
      %1876 = vmatpush.bf16.msra.mxu0 0
      %1877 = vmatpush.bf16.msra.mxu0 0
      %1878 = vmatpush.bf16.msra.mxu0 %v1035
      %1879 = vmatpush.bf16.msra.mxu0 %v1033
      %1880 = vmatpush.bf16.msra.mxu0 %v1031
      %1881 = vmatpush.bf16.msra.mxu0 %v1029
      %1882 = vmatpush.bf16.msra.mxu0 %v1027
      %1883 = vmatpush.bf16.msra.mxu0 %v1025
      %1884 = vmatmul.bf16.gmra.mxu0 %v1676
      %v1885 = vpop.f32.mrf.mxu0
      %v1886 = vadd.f32 0.0, %v1885
      %v1887 = vpop.f32.mrf.mxu0
      %v1888 = vadd.f32 0.0, %v1887
      %1889 = vmatmul.bf16.gmra.mxu0 %v1679
      %v1890 = vpop.f32.mrf.mxu0
      %v1891 = vadd.f32 0.0, %v1890
      %v1892 = vpop.f32.mrf.mxu0
      %v1893 = vadd.f32 0.0, %v1892
      %1894 = vdwg.mxu0
      %v1895 = vadd.f32 %v1849, %v1867
      %v1896 = vadd.f32 %v1850, %v1886
      %v1897 = vadd.f32 %v1851, %v1869
      %v1898 = vadd.f32 %v1852, %v1888
      %v1899 = vadd.f32 %v1853, %v1872
      %v1900 = vadd.f32 %v1854, %v1891
      %v1901 = vadd.f32 %v1855, %v1874
      %v1902 = vadd.f32 %v1856, %v1893
      %v1903 = vshrl.u32 %v973, 16
      %v1905 = vshll.u32 %v973, 16
      %v1907 = vrot.slane %v1905, 1
      %v1908 = vor.u32 %v1903, %v1907
      %v1909 = vshll.u32 %v974, 16
      %v1911 = vrot.slane %v1909, 1
      %v1912 = vsel %vm1113, %v1908, %v1911
      %v1913 = vshrl.u32 %v974, 16
      %v1915 = vor.u32 %v1913, %v1911
      %v1917 = vsel %vm697, %v1912, 0
      %v1920 = vsel %vm697, %v1915, 0
      %1922 = vmatpush.bf16.msra.mxu0 0
      %1923 = vmatpush.bf16.msra.mxu0 0
      %1924 = vmatpush.bf16.msra.mxu0 %v1173
      %1925 = vmatpush.bf16.msra.mxu0 %v1171
      %1926 = vmatpush.bf16.msra.mxu0 %v1169
      %1927 = vmatpush.bf16.msra.mxu0 %v1167
      %1928 = vmatpush.bf16.msra.mxu0 %v1165
      %1929 = vmatpush.bf16.msra.mxu0 %v1163
      %1930 = vmatmul.bf16.gmra.mxu0 %v1917
      %v1931 = vpop.f32.mrf.mxu0
      %v1932 = vadd.f32 0.0, %v1931
      %v1933 = vpop.f32.mrf.mxu0
      %v1934 = vadd.f32 0.0, %v1933
      %1935 = vmatmul.bf16.gmra.mxu0 %v1920
      %v1936 = vpop.f32.mrf.mxu0
      %v1937 = vadd.f32 0.0, %v1936
      %v1938 = vpop.f32.mrf.mxu0
      %v1939 = vadd.f32 0.0, %v1938
      %1940 = vdwg.mxu0
      %1941 = vmatpush.bf16.msra.mxu0 0
      %1942 = vmatpush.bf16.msra.mxu0 0
      %1943 = vmatpush.bf16.msra.mxu0 %v1174
      %1944 = vmatpush.bf16.msra.mxu0 %v1172
      %1945 = vmatpush.bf16.msra.mxu0 %v1170
      %1946 = vmatpush.bf16.msra.mxu0 %v1168
      %1947 = vmatpush.bf16.msra.mxu0 %v1166
      %1948 = vmatpush.bf16.msra.mxu0 %v1164
      %1949 = vmatmul.bf16.gmra.mxu0 %v1917
      %v1950 = vpop.f32.mrf.mxu0
      %v1951 = vadd.f32 0.0, %v1950
      %v1952 = vpop.f32.mrf.mxu0
      %v1953 = vadd.f32 0.0, %v1952
      %1954 = vmatmul.bf16.gmra.mxu0 %v1920
      %v1955 = vpop.f32.mrf.mxu0
      %v1956 = vadd.f32 0.0, %v1955
      %v1957 = vpop.f32.mrf.mxu0
      %v1958 = vadd.f32 0.0, %v1957
      %1959 = vdwg.mxu0
      %v1960 = vadd.f32 %v1895, %v1932
      %v1961 = vadd.f32 %v1896, %v1951
      %v1962 = vadd.f32 %v1897, %v1934
      %v1963 = vadd.f32 %v1898, %v1953
      %v1964 = vadd.f32 %v1899, %v1937
      %v1965 = vadd.f32 %v1900, %v1956
      %v1966 = vadd.f32 %v1901, %v1939
      %v1967 = vadd.f32 %v1902, %v1958
      %v1968 = vadd.f32 %v1960, %v1241
      %v1969 = vadd.f32 %v1961, %v1242
      %v1970 = vadd.f32 %v1962, %v1241
      %v1971 = vadd.f32 %v1963, %v1242
      %v1972 = vadd.f32 %v1964, %v1241
      %v1973 = vadd.f32 %v1965, %v1242
      %v1974 = vadd.f32 %v1966, %v1241
      %v1975 = vadd.f32 %v1967, %v1242
      %v1976 = vmax.f32 %v1245, %v1486
      %v1977 = vmax.f32 %v1246, %v1487
      %v1978 = vmax.f32 %v1247, %v1488
      %v1979 = vmax.f32 %v1248, %v1489
      %v1980 = vmax.f32 %v1249, %v1490
      %v1981 = vmax.f32 %v1250, %v1491
      %v1982 = vmax.f32 %v1251, %v1492
      %v1983 = vmax.f32 %v1252, %v1493
      %v1984 = vpack.c.bf16 %v1978, %v1976
      %v1985 = vpack.c.bf16 %v1979, %v1977
      %v1986 = vpack.c.bf16 %v1982, %v1980
      %v1987 = vpack.c.bf16 %v1983, %v1981
      %v1988 = vmax.f32 %v1727, %v1968
      %v1989 = vmax.f32 %v1728, %v1969
      %v1990 = vmax.f32 %v1729, %v1970
      %v1991 = vmax.f32 %v1730, %v1971
      %v1992 = vmax.f32 %v1731, %v1972
      %v1993 = vmax.f32 %v1732, %v1973
      %v1994 = vmax.f32 %v1733, %v1974
      %v1995 = vmax.f32 %v1734, %v1975
      %v1996 = vpack.c.bf16 %v1990, %v1988
      %v1997 = vpack.c.bf16 %v1991, %v1989
      %v1998 = vpack.c.bf16 %v1994, %v1992
      %v1999 = vpack.c.bf16 %v1995, %v1993
      %v2000 = vld [vmem:[%s6] sm:$0xf]
      %v2001 = vld [vmem:[%s6 + $0x4] sm:$0xf]
      %v2002 = vld [vmem:[%s6 + $0x8] sm:$0xf]
      %v2003 = vld [vmem:[%s6 + $0xc] sm:$0xf]
      %v2004 = vld [vmem:[%s6 + $0x10] sm:$0xf]
      %v2005 = vld [vmem:[%s6 + $0x14] sm:$0xf]
      %v2006 = vld [vmem:[%s6 + $0x18] sm:$0xf]
      %v2007 = vld [vmem:[%s6 + $0x1c] sm:$0xf]
      %v2008 = vld [vmem:[%s6 + $0x20] sm:$0xf]
      %v2009 = vld [vmem:[%s6 + $0x24] sm:$0xf]
      %v2010 = vld [vmem:[%s6 + $0x28] sm:$0xf]
      %v2011 = vld [vmem:[%s6 + $0x2c] sm:$0xf]
      %v2012 = vld [vmem:[%s6 + $0x30] sm:$0xf]
      %v2013 = vld [vmem:[%s6 + $0x34] sm:$0xf]
      %v2014 = vld [vmem:[%s6 + $0x38] sm:$0xf]
      %v2015 = vld [vmem:[%s6 + $0x3c] sm:$0xf]
      %v2016 = vld [vmem:[%s6 + $0x40] sm:$0xf]
      %v2017 = vld [vmem:[%s6 + $0x44] sm:$0xf]
      %v2018 = vld [vmem:[%s6 + $0x48] sm:$0xf]
      %v2019 = vld [vmem:[%s6 + $0x4c] sm:$0xf]
      %v2020 = vld [vmem:[%s6 + $0x50] sm:$0xf]
      %v2021 = vld [vmem:[%s6 + $0x54] sm:$0xf]
      %v2022 = vld [vmem:[%s6 + $0x58] sm:$0xf]
      %v2023 = vld [vmem:[%s6 + $0x5c] sm:$0xf]
      %v2024 = vld [vmem:[%s6 + $0x60] sm:$0xf]
      %v2025 = vld [vmem:[%s6 + $0x64] sm:$0xf]
      %v2026 = vld [vmem:[%s6 + $0x68] sm:$0xf]
      %v2027 = vld [vmem:[%s6 + $0x6c] sm:$0xf]
      %v2056 = vunpack.c.l.b16 %v2000
      %v2057 = vunpack.c.l.b16 %v2001
      %v2058 = vunpack.c.l.b16 %v2002
      %v2059 = vunpack.c.l.b16 %v2003
      %v2060 = vunpack.c.l.b16 %v2004
      %v2061 = vunpack.c.l.b16 %v2005
      %v2062 = vunpack.c.l.b16 %v2006
      %v2063 = vunpack.c.l.b16 %v2007
      %v2064 = vunpack.c.l.b16 %v2008
      %v2065 = vunpack.c.l.b16 %v2009
      %v2066 = vunpack.c.l.b16 %v2010
      %v2067 = vunpack.c.l.b16 %v2011
      %v2068 = vunpack.c.l.b16 %v2012
      %v2069 = vunpack.c.l.b16 %v2013
      %v2070 = vunpack.c.l.b16 %v2014
      %v2071 = vunpack.c.l.b16 %v2015
      %v2072 = vunpack.c.l.b16 %v2016
      %v2073 = vunpack.c.l.b16 %v2017
      %v2074 = vunpack.c.l.b16 %v2018
      %v2075 = vunpack.c.l.b16 %v2019
      %v2076 = vunpack.c.l.b16 %v2020
      %v2077 = vunpack.c.l.b16 %v2021
      %v2078 = vunpack.c.l.b16 %v2022
      %v2079 = vunpack.c.l.b16 %v2023
      %v2080 = vunpack.c.l.b16 %v2024
      %v2081 = vunpack.c.l.b16 %v2025
      %v2082 = vunpack.c.l.b16 %v2026
      %v2083 = vunpack.c.l.b16 %v2027
      %v2084 = vpack.c.b16 %v2057, %v2056
      %v2085 = vpack.c.b16 %v2059, %v2058
      %v2086 = vpack.c.b16 %v2061, %v2060
      %v2087 = vpack.c.b16 %v2063, %v2062
      %v2088 = vpack.c.b16 %v2065, %v2064
      %v2089 = vpack.c.b16 %v2067, %v2066
      %v2090 = vpack.c.b16 %v2069, %v2068
      %v2091 = vpack.c.b16 %v2071, %v2070
      %v2092 = vpack.c.b16 %v2073, %v2072
      %v2093 = vpack.c.b16 %v2075, %v2074
      %v2094 = vpack.c.b16 %v2077, %v2076
      %v2095 = vpack.c.b16 %v2079, %v2078
      %v2096 = vpack.c.b16 %v2081, %v2080
      %v2097 = vpack.c.b16 %v2083, %v2082
      %v2113 = vsel %vm697, %v1985, 0
      %v2116 = vsel %vm697, %v1987, 0
      %2118 = vmatpush.bf16.msra.mxu0 %v2091
      %2119 = vmatpush.bf16.msra.mxu0 %v2090
      %2120 = vmatpush.bf16.msra.mxu0 %v2089
      %2121 = vmatpush.bf16.msra.mxu0 %v2088
      %2122 = vmatpush.bf16.msra.mxu0 %v2087
      %2123 = vmatpush.bf16.msra.mxu0 %v2086
      %2124 = vmatpush.bf16.msra.mxu0 %v2085
      %2125 = vmatpush.bf16.msra.mxu0 %v2084
      %2126 = vmatmul.bf16.gmra.mxu0 %v1984
      %v2127 = vpop.f32.mrf.mxu0
      %v2128 = vadd.f32 0.0, %v2127
      %v2129 = vpop.f32.mrf.mxu0
      %v2130 = vadd.f32 0.0, %v2129
      %2131 = vmatmul.bf16.gmra.mxu0 %v1986
      %v2132 = vpop.f32.mrf.mxu0
      %v2133 = vadd.f32 0.0, %v2132
      %v2134 = vpop.f32.mrf.mxu0
      %v2135 = vadd.f32 0.0, %v2134
      %2136 = vdwg.mxu0
      %2137 = vmatpush.bf16.msra.mxu0 0
      %2138 = vmatpush.bf16.msra.mxu0 0
      %2139 = vmatpush.bf16.msra.mxu0 %v2097
      %2140 = vmatpush.bf16.msra.mxu0 %v2096
      %2141 = vmatpush.bf16.msra.mxu0 %v2095
      %2142 = vmatpush.bf16.msra.mxu0 %v2094
      %2143 = vmatpush.bf16.msra.mxu0 %v2093
      %2144 = vmatpush.bf16.msra.mxu0 %v2092
      %2145 = vmatmul.bf16.gmra.mxu0 %v2113
      %v2146 = vpop.f32.mrf.mxu0
      %v2147 = vadd.f32 %v2128, %v2146
      %v2148 = vpop.f32.mrf.mxu0
      %v2149 = vadd.f32 %v2130, %v2148
      %2150 = vmatmul.bf16.gmra.mxu0 %v2116
      %v2151 = vpop.f32.mrf.mxu0
      %v2152 = vadd.f32 %v2133, %v2151
      %v2153 = vpop.f32.mrf.mxu0
      %v2154 = vadd.f32 %v2135, %v2153
      %2155 = vdwg.mxu0
      %s2156 = scalar_lea.vmem %s6, 112
      %v2157 = vld [vmem:[%s2156] sm:$0xf]
      %v2158 = vld [vmem:[%s2156 + $0x4] sm:$0xf]
      %v2159 = vld [vmem:[%s2156 + $0x8] sm:$0xf]
      %v2160 = vld [vmem:[%s2156 + $0xc] sm:$0xf]
      %v2161 = vld [vmem:[%s2156 + $0x10] sm:$0xf]
      %v2162 = vld [vmem:[%s2156 + $0x14] sm:$0xf]
      %v2163 = vld [vmem:[%s2156 + $0x18] sm:$0xf]
      %v2164 = vld [vmem:[%s2156 + $0x1c] sm:$0xf]
      %v2165 = vld [vmem:[%s2156 + $0x20] sm:$0xf]
      %v2166 = vld [vmem:[%s2156 + $0x24] sm:$0xf]
      %v2167 = vld [vmem:[%s2156 + $0x28] sm:$0xf]
      %v2168 = vld [vmem:[%s2156 + $0x2c] sm:$0xf]
      %v2169 = vld [vmem:[%s2156 + $0x30] sm:$0xf]
      %v2170 = vld [vmem:[%s2156 + $0x34] sm:$0xf]
      %v2171 = vld [vmem:[%s2156 + $0x38] sm:$0xf]
      %v2172 = vld [vmem:[%s2156 + $0x3c] sm:$0xf]
      %v2173 = vld [vmem:[%s2156 + $0x40] sm:$0xf]
      %v2174 = vld [vmem:[%s2156 + $0x44] sm:$0xf]
      %v2175 = vld [vmem:[%s2156 + $0x48] sm:$0xf]
      %v2176 = vld [vmem:[%s2156 + $0x4c] sm:$0xf]
      %v2177 = vld [vmem:[%s2156 + $0x50] sm:$0xf]
      %v2178 = vld [vmem:[%s2156 + $0x54] sm:$0xf]
      %v2179 = vld [vmem:[%s2156 + $0x58] sm:$0xf]
      %v2180 = vld [vmem:[%s2156 + $0x5c] sm:$0xf]
      %v2181 = vld [vmem:[%s2156 + $0x60] sm:$0xf]
      %v2182 = vld [vmem:[%s2156 + $0x64] sm:$0xf]
      %v2183 = vld [vmem:[%s2156 + $0x68] sm:$0xf]
      %v2184 = vld [vmem:[%s2156 + $0x6c] sm:$0xf]
      %v2213 = vunpack.c.l.b16 %v2157
      %v2214 = vunpack.c.l.b16 %v2158
      %v2215 = vunpack.c.l.b16 %v2159
      %v2216 = vunpack.c.l.b16 %v2160
      %v2217 = vunpack.c.l.b16 %v2161
      %v2218 = vunpack.c.l.b16 %v2162
      %v2219 = vunpack.c.l.b16 %v2163
      %v2220 = vunpack.c.l.b16 %v2164
      %v2221 = vunpack.c.l.b16 %v2165
      %v2222 = vunpack.c.l.b16 %v2166
      %v2223 = vunpack.c.l.b16 %v2167
      %v2224 = vunpack.c.l.b16 %v2168
      %v2225 = vunpack.c.l.b16 %v2169
      %v2226 = vunpack.c.l.b16 %v2170
      %v2227 = vunpack.c.l.b16 %v2171
      %v2228 = vunpack.c.l.b16 %v2172
      %v2229 = vunpack.c.l.b16 %v2173
      %v2230 = vunpack.c.l.b16 %v2174
      %v2231 = vunpack.c.l.b16 %v2175
      %v2232 = vunpack.c.l.b16 %v2176
      %v2233 = vunpack.c.l.b16 %v2177
      %v2234 = vunpack.c.l.b16 %v2178
      %v2235 = vunpack.c.l.b16 %v2179
      %v2236 = vunpack.c.l.b16 %v2180
      %v2237 = vunpack.c.l.b16 %v2181
      %v2238 = vunpack.c.l.b16 %v2182
      %v2239 = vunpack.c.l.b16 %v2183
      %v2240 = vunpack.c.l.b16 %v2184
      %v2241 = vpack.c.b16 %v2214, %v2213
      %v2242 = vpack.c.b16 %v2216, %v2215
      %v2243 = vpack.c.b16 %v2218, %v2217
      %v2244 = vpack.c.b16 %v2220, %v2219
      %v2245 = vpack.c.b16 %v2222, %v2221
      %v2246 = vpack.c.b16 %v2224, %v2223
      %v2247 = vpack.c.b16 %v2226, %v2225
      %v2248 = vpack.c.b16 %v2228, %v2227
      %v2249 = vpack.c.b16 %v2230, %v2229
      %v2250 = vpack.c.b16 %v2232, %v2231
      %v2251 = vpack.c.b16 %v2234, %v2233
      %v2252 = vpack.c.b16 %v2236, %v2235
      %v2253 = vpack.c.b16 %v2238, %v2237
      %v2254 = vpack.c.b16 %v2240, %v2239
      %2269 = vmatpush.bf16.msra.mxu0 %v2248
      %2270 = vmatpush.bf16.msra.mxu0 %v2247
      %2271 = vmatpush.bf16.msra.mxu0 %v2246
      %2272 = vmatpush.bf16.msra.mxu0 %v2245
      %2273 = vmatpush.bf16.msra.mxu0 %v2244
      %2274 = vmatpush.bf16.msra.mxu0 %v2243
      %2275 = vmatpush.bf16.msra.mxu0 %v2242
      %2276 = vmatpush.bf16.msra.mxu0 %v2241
      %2277 = vmatmul.bf16.gmra.mxu0 %v1984
      %v2278 = vpop.f32.mrf.mxu0
      %v2279 = vadd.f32 0.0, %v2278
      %v2280 = vpop.f32.mrf.mxu0
      %v2281 = vadd.f32 0.0, %v2280
      %2282 = vmatmul.bf16.gmra.mxu0 %v1986
      %v2283 = vpop.f32.mrf.mxu0
      %v2284 = vadd.f32 0.0, %v2283
      %v2285 = vpop.f32.mrf.mxu0
      %v2286 = vadd.f32 0.0, %v2285
      %2287 = vdwg.mxu0
      %2288 = vmatpush.bf16.msra.mxu0 0
      %2289 = vmatpush.bf16.msra.mxu0 0
      %2290 = vmatpush.bf16.msra.mxu0 %v2254
      %2291 = vmatpush.bf16.msra.mxu0 %v2253
      %2292 = vmatpush.bf16.msra.mxu0 %v2252
      %2293 = vmatpush.bf16.msra.mxu0 %v2251
      %2294 = vmatpush.bf16.msra.mxu0 %v2250
      %2295 = vmatpush.bf16.msra.mxu0 %v2249
      %2296 = vmatmul.bf16.gmra.mxu0 %v2113
      %v2297 = vpop.f32.mrf.mxu0
      %v2298 = vadd.f32 %v2279, %v2297
      %v2299 = vpop.f32.mrf.mxu0
      %v2300 = vadd.f32 %v2281, %v2299
      %2301 = vmatmul.bf16.gmra.mxu0 %v2116
      %v2302 = vpop.f32.mrf.mxu0
      %v2303 = vadd.f32 %v2284, %v2302
      %v2304 = vpop.f32.mrf.mxu0
      %v2305 = vadd.f32 %v2286, %v2304
      %2306 = vdwg.mxu0
      %v2307 = vmax.f32 %v2147, %v2298
      %v2308 = vmax.f32 %v2149, %v2300
      %v2309 = vmax.f32 %v2152, %v2303
      %v2310 = vmax.f32 %v2154, %v2305
      %v2311 = vmax.f32 %v2307, 0.0
      %v2312 = vmax.f32 %v2308, 0.0
      %v2313 = vmax.f32 %v2309, 0.0
      %v2314 = vmax.f32 %v2310, 0.0
      %v2316 = vsel %vm697, %v1997, 0
      %v2319 = vsel %vm697, %v1999, 0
      %2321 = vmatpush.bf16.msra.mxu0 %v2091
      %2322 = vmatpush.bf16.msra.mxu0 %v2090
      %2323 = vmatpush.bf16.msra.mxu0 %v2089
      %2324 = vmatpush.bf16.msra.mxu0 %v2088
      %2325 = vmatpush.bf16.msra.mxu0 %v2087
      %2326 = vmatpush.bf16.msra.mxu0 %v2086
      %2327 = vmatpush.bf16.msra.mxu0 %v2085
      %2328 = vmatpush.bf16.msra.mxu0 %v2084
      %2329 = vmatmul.bf16.gmra.mxu0 %v1996
      %v2330 = vpop.f32.mrf.mxu0
      %v2331 = vadd.f32 0.0, %v2330
      %v2332 = vpop.f32.mrf.mxu0
      %v2333 = vadd.f32 0.0, %v2332
      %2334 = vmatmul.bf16.gmra.mxu0 %v1998
      %v2335 = vpop.f32.mrf.mxu0
      %v2336 = vadd.f32 0.0, %v2335
      %v2337 = vpop.f32.mrf.mxu0
      %v2338 = vadd.f32 0.0, %v2337
      %2339 = vdwg.mxu0
      %2340 = vmatpush.bf16.msra.mxu0 0
      %2341 = vmatpush.bf16.msra.mxu0 0
      %2342 = vmatpush.bf16.msra.mxu0 %v2097
      %2343 = vmatpush.bf16.msra.mxu0 %v2096
      %2344 = vmatpush.bf16.msra.mxu0 %v2095
      %2345 = vmatpush.bf16.msra.mxu0 %v2094
      %2346 = vmatpush.bf16.msra.mxu0 %v2093
      %2347 = vmatpush.bf16.msra.mxu0 %v2092
      %2348 = vmatmul.bf16.gmra.mxu0 %v2316
      %v2349 = vpop.f32.mrf.mxu0
      %v2350 = vadd.f32 %v2331, %v2349
      %v2351 = vpop.f32.mrf.mxu0
      %v2352 = vadd.f32 %v2333, %v2351
      %2353 = vmatmul.bf16.gmra.mxu0 %v2319
      %v2354 = vpop.f32.mrf.mxu0
      %v2355 = vadd.f32 %v2336, %v2354
      %v2356 = vpop.f32.mrf.mxu0
      %v2357 = vadd.f32 %v2338, %v2356
      %2358 = vdwg.mxu0
      %2359 = vmatpush.bf16.msra.mxu0 %v2248
      %2360 = vmatpush.bf16.msra.mxu0 %v2247
      %2361 = vmatpush.bf16.msra.mxu0 %v2246
      %2362 = vmatpush.bf16.msra.mxu0 %v2245
      %2363 = vmatpush.bf16.msra.mxu0 %v2244
      %2364 = vmatpush.bf16.msra.mxu0 %v2243
      %2365 = vmatpush.bf16.msra.mxu0 %v2242
      %2366 = vmatpush.bf16.msra.mxu0 %v2241
      %2367 = vmatmul.bf16.gmra.mxu0 %v1996
      %v2368 = vpop.f32.mrf.mxu0
      %v2369 = vadd.f32 0.0, %v2368
      %v2370 = vpop.f32.mrf.mxu0
      %v2371 = vadd.f32 0.0, %v2370
      %2372 = vmatmul.bf16.gmra.mxu0 %v1998
      %v2373 = vpop.f32.mrf.mxu0
      %v2374 = vadd.f32 0.0, %v2373
      %v2375 = vpop.f32.mrf.mxu0
      %v2376 = vadd.f32 0.0, %v2375
      %2377 = vdwg.mxu0
      %2378 = vmatpush.bf16.msra.mxu0 0
      %2379 = vmatpush.bf16.msra.mxu0 0
      %2380 = vmatpush.bf16.msra.mxu0 %v2254
      %2381 = vmatpush.bf16.msra.mxu0 %v2253
      %2382 = vmatpush.bf16.msra.mxu0 %v2252
      %2383 = vmatpush.bf16.msra.mxu0 %v2251
      %2384 = vmatpush.bf16.msra.mxu0 %v2250
      %2385 = vmatpush.bf16.msra.mxu0 %v2249
      %2386 = vmatmul.bf16.gmra.mxu0 %v2316
      %v2387 = vpop.f32.mrf.mxu0
      %v2388 = vadd.f32 %v2369, %v2387
      %v2389 = vpop.f32.mrf.mxu0
      %v2390 = vadd.f32 %v2371, %v2389
      %2391 = vmatmul.bf16.gmra.mxu0 %v2319
      %v2392 = vpop.f32.mrf.mxu0
      %v2393 = vadd.f32 %v2374, %v2392
      %v2394 = vpop.f32.mrf.mxu0
      %v2395 = vadd.f32 %v2376, %v2394
      %2396 = vdwg.mxu0
      %v2397 = vmax.f32 %v2350, %v2388
      %v2398 = vmax.f32 %v2352, %v2390
      %v2399 = vmax.f32 %v2355, %v2393
      %v2400 = vmax.f32 %v2357, %v2395
      %v2401 = vmax.f32 %v2397, 0.0
      %v2402 = vmax.f32 %v2398, 0.0
      %v2403 = vmax.f32 %v2399, 0.0
      %v2404 = vmax.f32 %v2400, 0.0
      %v2405 = vpack.c.bf16 %v2312, %v2311
      %v2406 = vpack.c.bf16 %v2314, %v2313
      %v2407 = vld [vmem:[%s7] sm:$0xff]
      %v2408 = vld [vmem:[%s7 + $0x8] sm:$0xff]
      %v2409 = vld [vmem:[%s7 + $0x10] sm:$0xff]
      %v2410 = vld [vmem:[%s7 + $0x18] sm:$0xff]
      %v2411 = vld [vmem:[%s7 + $0x20] sm:$0xff]
      %v2412 = vld [vmem:[%s7 + $0x28] sm:$0xff]
      %v2413 = vld [vmem:[%s7 + $0x30] sm:$0xff]
      %v2414 = vld [vmem:[%s7 + $0x38] sm:$0xff]
      %v2415 = vld [vmem:[%s7 + $0x40] sm:$0xff]
      %v2416 = vld [vmem:[%s7 + $0x48] sm:$0xff]
      %v2417 = vld [vmem:[%s7 + $0x50] sm:$0xff]
      %v2418 = vld [vmem:[%s7 + $0x58] sm:$0xff]
      %v2419 = vld [vmem:[%s7 + $0x60] sm:$0xff]
      %v2420 = vld [vmem:[%s7 + $0x68] sm:$0xff]
      %v2421 = vpack.c.bf16 %v2402, %v2401
      %v2422 = vpack.c.bf16 %v2404, %v2403
      %s2423 = scalar_lea.vmem %s7, 112
      %v2424 = vld [vmem:[%s2423] sm:$0xff]
      %v2425 = vld [vmem:[%s2423 + $0x8] sm:$0xff]
      %v2426 = vld [vmem:[%s2423 + $0x10] sm:$0xff]
      %v2427 = vld [vmem:[%s2423 + $0x18] sm:$0xff]
      %v2428 = vld [vmem:[%s2423 + $0x20] sm:$0xff]
      %v2429 = vld [vmem:[%s2423 + $0x28] sm:$0xff]
      %v2430 = vld [vmem:[%s2423 + $0x30] sm:$0xff]
      %v2431 = vld [vmem:[%s2423 + $0x38] sm:$0xff]
      %v2432 = vld [vmem:[%s2423 + $0x40] sm:$0xff]
      %v2433 = vld [vmem:[%s2423 + $0x48] sm:$0xff]
      %v2434 = vld [vmem:[%s2423 + $0x50] sm:$0xff]
      %v2435 = vld [vmem:[%s2423 + $0x58] sm:$0xff]
      %v2436 = vld [vmem:[%s2423 + $0x60] sm:$0xff]
      %v2437 = vld [vmem:[%s2423 + $0x68] sm:$0xff]
      %v2452 = vunpack.c.l.b16 %v2424
      %v2453 = vunpack.c.h.b16 %v2424
      %v2454 = vunpack.c.l.b16 %v2425
      %v2455 = vunpack.c.h.b16 %v2425
      %v2456 = vunpack.c.l.b16 %v2426
      %v2457 = vunpack.c.h.b16 %v2426
      %v2458 = vunpack.c.l.b16 %v2427
      %v2459 = vunpack.c.h.b16 %v2427
      %v2460 = vunpack.c.l.b16 %v2428
      %v2461 = vunpack.c.h.b16 %v2428
      %v2462 = vunpack.c.l.b16 %v2429
      %v2463 = vunpack.c.h.b16 %v2429
      %v2464 = vunpack.c.l.b16 %v2430
      %v2465 = vunpack.c.h.b16 %v2430
      %v2466 = vunpack.c.l.b16 %v2431
      %v2467 = vunpack.c.h.b16 %v2431
      %v2468 = vunpack.c.l.b16 %v2432
      %v2469 = vunpack.c.h.b16 %v2432
      %v2470 = vunpack.c.l.b16 %v2433
      %v2471 = vunpack.c.h.b16 %v2433
      %v2472 = vunpack.c.l.b16 %v2434
      %v2473 = vunpack.c.h.b16 %v2434
      %v2474 = vunpack.c.l.b16 %v2435
      %v2475 = vunpack.c.h.b16 %v2435
      %v2476 = vunpack.c.l.b16 %v2436
      %v2477 = vunpack.c.h.b16 %v2436
      %v2478 = vunpack.c.l.b16 %v2437
      %v2479 = vunpack.c.h.b16 %v2437
      %v2480 = vpack.c.b16 %v2454, %v2452
      %v2481 = vpack.c.b16 %v2455, %v2453
      %v2482 = vpack.c.b16 %v2458, %v2456
      %v2483 = vpack.c.b16 %v2459, %v2457
      %v2484 = vpack.c.b16 %v2462, %v2460
      %v2485 = vpack.c.b16 %v2463, %v2461
      %v2486 = vpack.c.b16 %v2466, %v2464
      %v2487 = vpack.c.b16 %v2467, %v2465
      %v2488 = vpack.c.b16 %v2470, %v2468
      %v2489 = vpack.c.b16 %v2471, %v2469
      %v2490 = vpack.c.b16 %v2474, %v2472
      %v2491 = vpack.c.b16 %v2475, %v2473
      %v2492 = vpack.c.b16 %v2478, %v2476
      %v2493 = vpack.c.b16 %v2479, %v2477
      %vm2508 = vcmask 916480
      %v2510 = vsel %vm2508, %v2421, 0
      %v2513 = vsel %vm2508, %v2422, 0
      %2515 = vmatpush.bf16.msra.mxu0 0
      %2516 = vmatpush.bf16.msra.mxu0 %v2492
      %2517 = vmatpush.bf16.msra.mxu0 %v2490
      %2518 = vmatpush.bf16.msra.mxu0 %v2488
      %2519 = vmatpush.bf16.msra.mxu0 %v2486
      %2520 = vmatpush.bf16.msra.mxu0 %v2484
      %2521 = vmatpush.bf16.msra.mxu0 %v2482
      %2522 = vmatpush.bf16.msra.mxu0 %v2480
      %2523 = vmatmul.bf16.gmra.mxu0 %v2510
      %v2524 = vpop.f32.mrf.mxu0
      %v2525 = vadd.f32 0.0, %v2524
      %v2526 = vpop.f32.mrf.mxu0
      %v2527 = vadd.f32 0.0, %v2526
      %2528 = vmatmul.bf16.gmra.mxu0 %v2513
      %v2529 = vpop.f32.mrf.mxu0
      %v2530 = vadd.f32 0.0, %v2529
      %v2531 = vpop.f32.mrf.mxu0
      %v2532 = vadd.f32 0.0, %v2531
      %2533 = vdwg.mxu0
      %2534 = vmatpush.bf16.msra.mxu0 0
      %2535 = vmatpush.bf16.msra.mxu0 %v2493
      %2536 = vmatpush.bf16.msra.mxu0 %v2491
      %2537 = vmatpush.bf16.msra.mxu0 %v2489
      %2538 = vmatpush.bf16.msra.mxu0 %v2487
      %2539 = vmatpush.bf16.msra.mxu0 %v2485
      %2540 = vmatpush.bf16.msra.mxu0 %v2483
      %2541 = vmatpush.bf16.msra.mxu0 %v2481
      %2542 = vmatmul.bf16.gmra.mxu0 %v2510
      %v2543 = vpop.f32.mrf.mxu0
      %v2544 = vadd.f32 0.0, %v2543
      %v2545 = vpop.f32.mrf.mxu0
      %v2546 = vadd.f32 0.0, %v2545
      %2547 = vmatmul.bf16.gmra.mxu0 %v2513
      %v2548 = vpop.f32.mrf.mxu0
      %v2549 = vadd.f32 0.0, %v2548
      %v2550 = vpop.f32.mrf.mxu0
      %v2551 = vadd.f32 0.0, %v2550
      %2552 = vdwg.mxu0
      %v2567 = vunpack.c.l.b16 %v2407
      %v2568 = vunpack.c.h.b16 %v2407
      %v2569 = vunpack.c.l.b16 %v2408
      %v2570 = vunpack.c.h.b16 %v2408
      %v2571 = vunpack.c.l.b16 %v2409
      %v2572 = vunpack.c.h.b16 %v2409
      %v2573 = vunpack.c.l.b16 %v2410
      %v2574 = vunpack.c.h.b16 %v2410
      %v2575 = vunpack.c.l.b16 %v2411
      %v2576 = vunpack.c.h.b16 %v2411
      %v2577 = vunpack.c.l.b16 %v2412
      %v2578 = vunpack.c.h.b16 %v2412
      %v2579 = vunpack.c.l.b16 %v2413
      %v2580 = vunpack.c.h.b16 %v2413
      %v2581 = vunpack.c.l.b16 %v2414
      %v2582 = vunpack.c.h.b16 %v2414
      %v2583 = vunpack.c.l.b16 %v2415
      %v2584 = vunpack.c.h.b16 %v2415
      %v2585 = vunpack.c.l.b16 %v2416
      %v2586 = vunpack.c.h.b16 %v2416
      %v2587 = vunpack.c.l.b16 %v2417
      %v2588 = vunpack.c.h.b16 %v2417
      %v2589 = vunpack.c.l.b16 %v2418
      %v2590 = vunpack.c.h.b16 %v2418
      %v2591 = vunpack.c.l.b16 %v2419
      %v2592 = vunpack.c.h.b16 %v2419
      %v2593 = vunpack.c.l.b16 %v2420
      %v2594 = vunpack.c.h.b16 %v2420
      %v2595 = vpack.c.b16 %v2569, %v2567
      %v2596 = vpack.c.b16 %v2570, %v2568
      %v2597 = vpack.c.b16 %v2573, %v2571
      %v2598 = vpack.c.b16 %v2574, %v2572
      %v2599 = vpack.c.b16 %v2577, %v2575
      %v2600 = vpack.c.b16 %v2578, %v2576
      %v2601 = vpack.c.b16 %v2581, %v2579
      %v2602 = vpack.c.b16 %v2582, %v2580
      %v2603 = vpack.c.b16 %v2585, %v2583
      %v2604 = vpack.c.b16 %v2586, %v2584
      %v2605 = vpack.c.b16 %v2589, %v2587
      %v2606 = vpack.c.b16 %v2590, %v2588
      %v2607 = vpack.c.b16 %v2593, %v2591
      %v2608 = vpack.c.b16 %v2594, %v2592
      %v2624 = vsel %vm2508, %v2405, 0
      %v2627 = vsel %vm2508, %v2406, 0
      %2629 = vmatpush.bf16.msra.mxu0 0
      %2630 = vmatpush.bf16.msra.mxu0 %v2607
      %2631 = vmatpush.bf16.msra.mxu0 %v2605
      %2632 = vmatpush.bf16.msra.mxu0 %v2603
      %2633 = vmatpush.bf16.msra.mxu0 %v2601
      %2634 = vmatpush.bf16.msra.mxu0 %v2599
      %2635 = vmatpush.bf16.msra.mxu0 %v2597
      %2636 = vmatpush.bf16.msra.mxu0 %v2595
      %2637 = vmatmul.bf16.gmra.mxu0 %v2624
      %v2638 = vpop.f32.mrf.mxu0
      %v2639 = vadd.f32 %v2525, %v2638
      %v2640 = vpop.f32.mrf.mxu0
      %v2641 = vadd.f32 %v2527, %v2640
      %2642 = vmatmul.bf16.gmra.mxu0 %v2627
      %v2643 = vpop.f32.mrf.mxu0
      %v2644 = vadd.f32 %v2530, %v2643
      %v2645 = vpop.f32.mrf.mxu0
      %v2646 = vadd.f32 %v2532, %v2645
      %2647 = vdwg.mxu0
      %2648 = vmatpush.bf16.msra.mxu0 0
      %2649 = vmatpush.bf16.msra.mxu0 %v2608
      %2650 = vmatpush.bf16.msra.mxu0 %v2606
      %2651 = vmatpush.bf16.msra.mxu0 %v2604
      %2652 = vmatpush.bf16.msra.mxu0 %v2602
      %2653 = vmatpush.bf16.msra.mxu0 %v2600
      %2654 = vmatpush.bf16.msra.mxu0 %v2598
      %2655 = vmatpush.bf16.msra.mxu0 %v2596
      %2656 = vmatmul.bf16.gmra.mxu0 %v2624
      %v2657 = vpop.f32.mrf.mxu0
      %v2658 = vadd.f32 %v2544, %v2657
      %v2659 = vpop.f32.mrf.mxu0
      %v2660 = vadd.f32 %v2546, %v2659
      %2661 = vmatmul.bf16.gmra.mxu0 %v2627
      %v2662 = vpop.f32.mrf.mxu0
      %v2663 = vadd.f32 %v2549, %v2662
      %v2664 = vpop.f32.mrf.mxu0
      %v2665 = vadd.f32 %v2551, %v2664
      %2666 = vdwg.mxu0
      %s2667 = scalar_lea.vmem %s7, 224
      %v2668 = vld [vmem:[%s2667] sm:$0xff]
      %v2669 = vld [vmem:[%s2667 + $0x8] sm:$0xff]
      %v2670 = vld [vmem:[%s2667 + $0x10] sm:$0xff]
      %v2671 = vld [vmem:[%s2667 + $0x18] sm:$0xff]
      %v2672 = vld [vmem:[%s2667 + $0x20] sm:$0xff]
      %v2673 = vld [vmem:[%s2667 + $0x28] sm:$0xff]
      %v2674 = vld [vmem:[%s2667 + $0x30] sm:$0xff]
      %v2675 = vld [vmem:[%s2667 + $0x38] sm:$0xff]
      %v2676 = vld [vmem:[%s2667 + $0x40] sm:$0xff]
      %v2677 = vld [vmem:[%s2667 + $0x48] sm:$0xff]
      %v2678 = vld [vmem:[%s2667 + $0x50] sm:$0xff]
      %v2679 = vld [vmem:[%s2667 + $0x58] sm:$0xff]
      %v2680 = vld [vmem:[%s2667 + $0x60] sm:$0xff]
      %v2681 = vld [vmem:[%s2667 + $0x68] sm:$0xff]
      %v2682 = vshrl.u32 %v2405, 16
      %v2684 = vshll.u32 %v2405, 16
      %v2686 = vrot.slane %v2684, 1
      %v2687 = vor.u32 %v2682, %v2686
      %v2688 = vshll.u32 %v2406, 16
      %v2690 = vrot.slane %v2688, 1
      %v2691 = vsel %vm1113, %v2687, %v2690
      %v2692 = vshrl.u32 %v2406, 16
      %v2694 = vor.u32 %v2692, %v2690
      %v2709 = vunpack.c.l.b16 %v2668
      %v2710 = vunpack.c.h.b16 %v2668
      %v2711 = vunpack.c.l.b16 %v2669
      %v2712 = vunpack.c.h.b16 %v2669
      %v2713 = vunpack.c.l.b16 %v2670
      %v2714 = vunpack.c.h.b16 %v2670
      %v2715 = vunpack.c.l.b16 %v2671
      %v2716 = vunpack.c.h.b16 %v2671
      %v2717 = vunpack.c.l.b16 %v2672
      %v2718 = vunpack.c.h.b16 %v2672
      %v2719 = vunpack.c.l.b16 %v2673
      %v2720 = vunpack.c.h.b16 %v2673
      %v2721 = vunpack.c.l.b16 %v2674
      %v2722 = vunpack.c.h.b16 %v2674
      %v2723 = vunpack.c.l.b16 %v2675
      %v2724 = vunpack.c.h.b16 %v2675
      %v2725 = vunpack.c.l.b16 %v2676
      %v2726 = vunpack.c.h.b16 %v2676
      %v2727 = vunpack.c.l.b16 %v2677
      %v2728 = vunpack.c.h.b16 %v2677
      %v2729 = vunpack.c.l.b16 %v2678
      %v2730 = vunpack.c.h.b16 %v2678
      %v2731 = vunpack.c.l.b16 %v2679
      %v2732 = vunpack.c.h.b16 %v2679
      %v2733 = vunpack.c.l.b16 %v2680
      %v2734 = vunpack.c.h.b16 %v2680
      %v2735 = vunpack.c.l.b16 %v2681
      %v2736 = vunpack.c.h.b16 %v2681
      %v2737 = vpack.c.b16 %v2711, %v2709
      %v2738 = vpack.c.b16 %v2712, %v2710
      %v2739 = vpack.c.b16 %v2715, %v2713
      %v2740 = vpack.c.b16 %v2716, %v2714
      %v2741 = vpack.c.b16 %v2719, %v2717
      %v2742 = vpack.c.b16 %v2720, %v2718
      %v2743 = vpack.c.b16 %v2723, %v2721
      %v2744 = vpack.c.b16 %v2724, %v2722
      %v2745 = vpack.c.b16 %v2727, %v2725
      %v2746 = vpack.c.b16 %v2728, %v2726
      %v2747 = vpack.c.b16 %v2731, %v2729
      %v2748 = vpack.c.b16 %v2732, %v2730
      %v2749 = vpack.c.b16 %v2735, %v2733
      %v2750 = vpack.c.b16 %v2736, %v2734
      %v2766 = vsel %vm2508, %v2691, 0
      %v2769 = vsel %vm2508, %v2694, 0
      %2771 = vmatpush.bf16.msra.mxu0 0
      %2772 = vmatpush.bf16.msra.mxu0 %v2749
      %2773 = vmatpush.bf16.msra.mxu0 %v2747
      %2774 = vmatpush.bf16.msra.mxu0 %v2745
      %2775 = vmatpush.bf16.msra.mxu0 %v2743
      %2776 = vmatpush.bf16.msra.mxu0 %v2741
      %2777 = vmatpush.bf16.msra.mxu0 %v2739
      %2778 = vmatpush.bf16.msra.mxu0 %v2737
      %2779 = vmatmul.bf16.gmra.mxu0 %v2766
      %v2780 = vpop.f32.mrf.mxu0
      %v2781 = vadd.f32 0.0, %v2780
      %v2782 = vpop.f32.mrf.mxu0
      %v2783 = vadd.f32 0.0, %v2782
      %2784 = vmatmul.bf16.gmra.mxu0 %v2769
      %v2785 = vpop.f32.mrf.mxu0
      %v2786 = vadd.f32 0.0, %v2785
      %v2787 = vpop.f32.mrf.mxu0
      %v2788 = vadd.f32 0.0, %v2787
      %2789 = vdwg.mxu0
      %2790 = vmatpush.bf16.msra.mxu0 0
      %2791 = vmatpush.bf16.msra.mxu0 %v2750
      %2792 = vmatpush.bf16.msra.mxu0 %v2748
      %2793 = vmatpush.bf16.msra.mxu0 %v2746
      %2794 = vmatpush.bf16.msra.mxu0 %v2744
      %2795 = vmatpush.bf16.msra.mxu0 %v2742
      %2796 = vmatpush.bf16.msra.mxu0 %v2740
      %2797 = vmatpush.bf16.msra.mxu0 %v2738
      %2798 = vmatmul.bf16.gmra.mxu0 %v2766
      %v2799 = vpop.f32.mrf.mxu0
      %v2800 = vadd.f32 0.0, %v2799
      %v2801 = vpop.f32.mrf.mxu0
      %v2802 = vadd.f32 0.0, %v2801
      %2803 = vmatmul.bf16.gmra.mxu0 %v2769
      %v2804 = vpop.f32.mrf.mxu0
      %v2805 = vadd.f32 0.0, %v2804
      %v2806 = vpop.f32.mrf.mxu0
      %v2807 = vadd.f32 0.0, %v2806
      %2808 = vdwg.mxu0
      %v2809 = vadd.f32 %v2639, %v2781
      %v2810 = vadd.f32 %v2658, %v2800
      %v2811 = vadd.f32 %v2641, %v2783
      %v2812 = vadd.f32 %v2660, %v2802
      %v2813 = vadd.f32 %v2644, %v2786
      %v2814 = vadd.f32 %v2663, %v2805
      %v2815 = vadd.f32 %v2646, %v2788
      %v2816 = vadd.f32 %v2665, %v2807
      %s2817 = scalar_lea.vmem %s7, 336
      %v2818 = vld [vmem:[%s2817] sm:$0xff]
      %v2819 = vld [vmem:[%s2817 + $0x8] sm:$0xff]
      %v2820 = vld [vmem:[%s2817 + $0x10] sm:$0xff]
      %v2821 = vld [vmem:[%s2817 + $0x18] sm:$0xff]
      %v2822 = vld [vmem:[%s2817 + $0x20] sm:$0xff]
      %v2823 = vld [vmem:[%s2817 + $0x28] sm:$0xff]
      %v2824 = vld [vmem:[%s2817 + $0x30] sm:$0xff]
      %v2825 = vld [vmem:[%s2817 + $0x38] sm:$0xff]
      %v2826 = vld [vmem:[%s2817 + $0x40] sm:$0xff]
      %v2827 = vld [vmem:[%s2817 + $0x48] sm:$0xff]
      %v2828 = vld [vmem:[%s2817 + $0x50] sm:$0xff]
      %v2829 = vld [vmem:[%s2817 + $0x58] sm:$0xff]
      %v2830 = vld [vmem:[%s2817 + $0x60] sm:$0xff]
      %v2831 = vld [vmem:[%s2817 + $0x68] sm:$0xff]
      %v2832 = vshrl.u32 %v2421, 16
      %v2834 = vshll.u32 %v2421, 16
      %v2836 = vrot.slane %v2834, 1
      %v2837 = vor.u32 %v2832, %v2836
      %v2838 = vshll.u32 %v2422, 16
      %v2840 = vrot.slane %v2838, 1
      %v2841 = vsel %vm1113, %v2837, %v2840
      %v2842 = vshrl.u32 %v2422, 16
      %v2844 = vor.u32 %v2842, %v2840
      %v2859 = vunpack.c.l.b16 %v2818
      %v2860 = vunpack.c.h.b16 %v2818
      %v2861 = vunpack.c.l.b16 %v2819
      %v2862 = vunpack.c.h.b16 %v2819
      %v2863 = vunpack.c.l.b16 %v2820
      %v2864 = vunpack.c.h.b16 %v2820
      %v2865 = vunpack.c.l.b16 %v2821
      %v2866 = vunpack.c.h.b16 %v2821
      %v2867 = vunpack.c.l.b16 %v2822
      %v2868 = vunpack.c.h.b16 %v2822
      %v2869 = vunpack.c.l.b16 %v2823
      %v2870 = vunpack.c.h.b16 %v2823
      %v2871 = vunpack.c.l.b16 %v2824
      %v2872 = vunpack.c.h.b16 %v2824
      %v2873 = vunpack.c.l.b16 %v2825
      %v2874 = vunpack.c.h.b16 %v2825
      %v2875 = vunpack.c.l.b16 %v2826
      %v2876 = vunpack.c.h.b16 %v2826
      %v2877 = vunpack.c.l.b16 %v2827
      %v2878 = vunpack.c.h.b16 %v2827
      %v2879 = vunpack.c.l.b16 %v2828
      %v2880 = vunpack.c.h.b16 %v2828
      %v2881 = vunpack.c.l.b16 %v2829
      %v2882 = vunpack.c.h.b16 %v2829
      %v2883 = vunpack.c.l.b16 %v2830
      %v2884 = vunpack.c.h.b16 %v2830
      %v2885 = vunpack.c.l.b16 %v2831
      %v2886 = vunpack.c.h.b16 %v2831
      %v2887 = vpack.c.b16 %v2861, %v2859
      %v2888 = vpack.c.b16 %v2862, %v2860
      %v2889 = vpack.c.b16 %v2865, %v2863
      %v2890 = vpack.c.b16 %v2866, %v2864
      %v2891 = vpack.c.b16 %v2869, %v2867
      %v2892 = vpack.c.b16 %v2870, %v2868
      %v2893 = vpack.c.b16 %v2873, %v2871
      %v2894 = vpack.c.b16 %v2874, %v2872
      %v2895 = vpack.c.b16 %v2877, %v2875
      %v2896 = vpack.c.b16 %v2878, %v2876
      %v2897 = vpack.c.b16 %v2881, %v2879
      %v2898 = vpack.c.b16 %v2882, %v2880
      %v2899 = vpack.c.b16 %v2885, %v2883
      %v2900 = vpack.c.b16 %v2886, %v2884
      %v2916 = vsel %vm2508, %v2841, 0
      %v2919 = vsel %vm2508, %v2844, 0
      %2921 = vmatpush.bf16.msra.mxu0 0
      %2922 = vmatpush.bf16.msra.mxu0 %v2899
      %2923 = vmatpush.bf16.msra.mxu0 %v2897
      %2924 = vmatpush.bf16.msra.mxu0 %v2895
      %2925 = vmatpush.bf16.msra.mxu0 %v2893
      %2926 = vmatpush.bf16.msra.mxu0 %v2891
      %2927 = vmatpush.bf16.msra.mxu0 %v2889
      %2928 = vmatpush.bf16.msra.mxu0 %v2887
      %2929 = vmatmul.bf16.gmra.mxu0 %v2916
      %v2930 = vpop.f32.mrf.mxu0
      %v2931 = vadd.f32 0.0, %v2930
      %v2932 = vpop.f32.mrf.mxu0
      %v2933 = vadd.f32 0.0, %v2932
      %2934 = vmatmul.bf16.gmra.mxu0 %v2919
      %v2935 = vpop.f32.mrf.mxu0
      %v2936 = vadd.f32 0.0, %v2935
      %v2937 = vpop.f32.mrf.mxu0
      %v2938 = vadd.f32 0.0, %v2937
      %2939 = vdwg.mxu0
      %2940 = vmatpush.bf16.msra.mxu0 0
      %2941 = vmatpush.bf16.msra.mxu0 %v2900
      %2942 = vmatpush.bf16.msra.mxu0 %v2898
      %2943 = vmatpush.bf16.msra.mxu0 %v2896
      %2944 = vmatpush.bf16.msra.mxu0 %v2894
      %2945 = vmatpush.bf16.msra.mxu0 %v2892
      %2946 = vmatpush.bf16.msra.mxu0 %v2890
      %2947 = vmatpush.bf16.msra.mxu0 %v2888
      %2948 = vmatmul.bf16.gmra.mxu0 %v2916
      %v2949 = vpop.f32.mrf.mxu0
      %v2950 = vadd.f32 0.0, %v2949
      %v2951 = vpop.f32.mrf.mxu0
      %v2952 = vadd.f32 0.0, %v2951
      %2953 = vmatmul.bf16.gmra.mxu0 %v2919
      %v2954 = vpop.f32.mrf.mxu0
      %v2955 = vadd.f32 0.0, %v2954
      %v2956 = vpop.f32.mrf.mxu0
      %v2957 = vadd.f32 0.0, %v2956
      %2958 = vdwg.mxu0
      %v2959 = vadd.f32 %v2809, %v2931
      %v2960 = vadd.f32 %v2810, %v2950
      %v2961 = vadd.f32 %v2811, %v2933
      %v2962 = vadd.f32 %v2812, %v2952
      %v2963 = vadd.f32 %v2813, %v2936
      %v2964 = vadd.f32 %v2814, %v2955
      %v2965 = vadd.f32 %v2815, %v2938
      %v2966 = vadd.f32 %v2816, %v2957
      %s2967 = scalar_lea.vmem %s7, 448
      %v2968 = vld [vmem:[%s2967] sm:$0xff]
      %v2969 = vld [vmem:[%s2967 + $0x8] sm:$0xff]
      %v2970 = vld [vmem:[%s2967 + $0x10] sm:$0xff]
      %v2971 = vld [vmem:[%s2967 + $0x18] sm:$0xff]
      %v2972 = vld [vmem:[%s2967 + $0x20] sm:$0xff]
      %v2973 = vld [vmem:[%s2967 + $0x28] sm:$0xff]
      %v2974 = vld [vmem:[%s2967 + $0x30] sm:$0xff]
      %v2975 = vld [vmem:[%s2967 + $0x38] sm:$0xff]
      %v2976 = vld [vmem:[%s2967 + $0x40] sm:$0xff]
      %v2977 = vld [vmem:[%s2967 + $0x48] sm:$0xff]
      %v2978 = vld [vmem:[%s2967 + $0x50] sm:$0xff]
      %v2979 = vld [vmem:[%s2967 + $0x58] sm:$0xff]
      %v2980 = vld [vmem:[%s2967 + $0x60] sm:$0xff]
      %v2981 = vld [vmem:[%s2967 + $0x68] sm:$0xff]
      %vm2984 = vcmask 1046528
      %v2985 = vrot.slane %v2405, 1
      %v2986 = vrot.slane %v2406, 1
      %v2987 = vsel %vm2984, %v2985, %v2986
      %v3002 = vunpack.c.l.b16 %v2968
      %v3003 = vunpack.c.h.b16 %v2968
      %v3004 = vunpack.c.l.b16 %v2969
      %v3005 = vunpack.c.h.b16 %v2969
      %v3006 = vunpack.c.l.b16 %v2970
      %v3007 = vunpack.c.h.b16 %v2970
      %v3008 = vunpack.c.l.b16 %v2971
      %v3009 = vunpack.c.h.b16 %v2971
      %v3010 = vunpack.c.l.b16 %v2972
      %v3011 = vunpack.c.h.b16 %v2972
      %v3012 = vunpack.c.l.b16 %v2973
      %v3013 = vunpack.c.h.b16 %v2973
      %v3014 = vunpack.c.l.b16 %v2974
      %v3015 = vunpack.c.h.b16 %v2974
      %v3016 = vunpack.c.l.b16 %v2975
      %v3017 = vunpack.c.h.b16 %v2975
      %v3018 = vunpack.c.l.b16 %v2976
      %v3019 = vunpack.c.h.b16 %v2976
      %v3020 = vunpack.c.l.b16 %v2977
      %v3021 = vunpack.c.h.b16 %v2977
      %v3022 = vunpack.c.l.b16 %v2978
      %v3023 = vunpack.c.h.b16 %v2978
      %v3024 = vunpack.c.l.b16 %v2979
      %v3025 = vunpack.c.h.b16 %v2979
      %v3026 = vunpack.c.l.b16 %v2980
      %v3027 = vunpack.c.h.b16 %v2980
      %v3028 = vunpack.c.l.b16 %v2981
      %v3029 = vunpack.c.h.b16 %v2981
      %v3030 = vpack.c.b16 %v3004, %v3002
      %v3031 = vpack.c.b16 %v3005, %v3003
      %v3032 = vpack.c.b16 %v3008, %v3006
      %v3033 = vpack.c.b16 %v3009, %v3007
      %v3034 = vpack.c.b16 %v3012, %v3010
      %v3035 = vpack.c.b16 %v3013, %v3011
      %v3036 = vpack.c.b16 %v3016, %v3014
      %v3037 = vpack.c.b16 %v3017, %v3015
      %v3038 = vpack.c.b16 %v3020, %v3018
      %v3039 = vpack.c.b16 %v3021, %v3019
      %v3040 = vpack.c.b16 %v3024, %v3022
      %v3041 = vpack.c.b16 %v3025, %v3023
      %v3042 = vpack.c.b16 %v3028, %v3026
      %v3043 = vpack.c.b16 %v3029, %v3027
      %v3059 = vsel %vm2508, %v2987, 0
      %v3062 = vsel %vm2508, %v2986, 0
      %3064 = vmatpush.bf16.msra.mxu0 0
      %3065 = vmatpush.bf16.msra.mxu0 %v3042
      %3066 = vmatpush.bf16.msra.mxu0 %v3040
      %3067 = vmatpush.bf16.msra.mxu0 %v3038
      %3068 = vmatpush.bf16.msra.mxu0 %v3036
      %3069 = vmatpush.bf16.msra.mxu0 %v3034
      %3070 = vmatpush.bf16.msra.mxu0 %v3032
      %3071 = vmatpush.bf16.msra.mxu0 %v3030
      %3072 = vmatmul.bf16.gmra.mxu0 %v3059
      %v3073 = vpop.f32.mrf.mxu0
      %v3074 = vadd.f32 0.0, %v3073
      %v3075 = vpop.f32.mrf.mxu0
      %v3076 = vadd.f32 0.0, %v3075
      %3077 = vmatmul.bf16.gmra.mxu0 %v3062
      %v3078 = vpop.f32.mrf.mxu0
      %v3079 = vadd.f32 0.0, %v3078
      %v3080 = vpop.f32.mrf.mxu0
      %v3081 = vadd.f32 0.0, %v3080
      %3082 = vdwg.mxu0
      %3083 = vmatpush.bf16.msra.mxu0 0
      %3084 = vmatpush.bf16.msra.mxu0 %v3043
      %3085 = vmatpush.bf16.msra.mxu0 %v3041
      %3086 = vmatpush.bf16.msra.mxu0 %v3039
      %3087 = vmatpush.bf16.msra.mxu0 %v3037
      %3088 = vmatpush.bf16.msra.mxu0 %v3035
      %3089 = vmatpush.bf16.msra.mxu0 %v3033
      %3090 = vmatpush.bf16.msra.mxu0 %v3031
      %3091 = vmatmul.bf16.gmra.mxu0 %v3059
      %v3092 = vpop.f32.mrf.mxu0
      %v3093 = vadd.f32 0.0, %v3092
      %v3094 = vpop.f32.mrf.mxu0
      %v3095 = vadd.f32 0.0, %v3094
      %3096 = vmatmul.bf16.gmra.mxu0 %v3062
      %v3097 = vpop.f32.mrf.mxu0
      %v3098 = vadd.f32 0.0, %v3097
      %v3099 = vpop.f32.mrf.mxu0
      %v3100 = vadd.f32 0.0, %v3099
      %3101 = vdwg.mxu0
      %v3102 = vadd.f32 %v2959, %v3074
      %v3103 = vadd.f32 %v2960, %v3093
      %v3104 = vadd.f32 %v2961, %v3076
      %v3105 = vadd.f32 %v2962, %v3095
      %v3106 = vadd.f32 %v2963, %v3079
      %v3107 = vadd.f32 %v2964, %v3098
      %v3108 = vadd.f32 %v2965, %v3081
      %v3109 = vadd.f32 %v2966, %v3100
      %v3110 = vld [vmem:[%s8] sm:$0x3]
      %v3112 = vperm.slane %v3110, 0
      %v3113 = vperm.slane %v3110, 1
      %v3116 = vadd.f32 %v3102, %v3112
      %v3117 = vadd.f32 %v3103, %v3113
      %v3118 = vadd.f32 %v3104, %v3112
      %v3119 = vadd.f32 %v3105, %v3113
      %v3120 = vadd.f32 %v3106, %v3112
      %v3121 = vadd.f32 %v3107, %v3113
      %v3122 = vadd.f32 %v3108, %v3112
      %v3123 = vadd.f32 %v3109, %v3113
      %3124 = vmatpush.bf16.msra.mxu0 0
      %3125 = vmatpush.bf16.msra.mxu0 %v2492
      %3126 = vmatpush.bf16.msra.mxu0 %v2490
      %3127 = vmatpush.bf16.msra.mxu0 %v2488
      %3128 = vmatpush.bf16.msra.mxu0 %v2486
      %3129 = vmatpush.bf16.msra.mxu0 %v2484
      %3130 = vmatpush.bf16.msra.mxu0 %v2482
      %3131 = vmatpush.bf16.msra.mxu0 %v2480
      %3132 = vmatmul.bf16.gmra.mxu0 %v2766
      %v3133 = vpop.f32.mrf.mxu0
      %v3134 = vadd.f32 0.0, %v3133
      %v3135 = vpop.f32.mrf.mxu0
      %v3136 = vadd.f32 0.0, %v3135
      %3137 = vmatmul.bf16.gmra.mxu0 %v2769
      %v3138 = vpop.f32.mrf.mxu0
      %v3139 = vadd.f32 0.0, %v3138
      %v3140 = vpop.f32.mrf.mxu0
      %v3141 = vadd.f32 0.0, %v3140
      %3142 = vdwg.mxu0
      %3143 = vmatpush.bf16.msra.mxu0 0
      %3144 = vmatpush.bf16.msra.mxu0 %v2493
      %3145 = vmatpush.bf16.msra.mxu0 %v2491
      %3146 = vmatpush.bf16.msra.mxu0 %v2489
      %3147 = vmatpush.bf16.msra.mxu0 %v2487
      %3148 = vmatpush.bf16.msra.mxu0 %v2485
      %3149 = vmatpush.bf16.msra.mxu0 %v2483
      %3150 = vmatpush.bf16.msra.mxu0 %v2481
      %3151 = vmatmul.bf16.gmra.mxu0 %v2766
      %v3152 = vpop.f32.mrf.mxu0
      %v3153 = vadd.f32 0.0, %v3152
      %v3154 = vpop.f32.mrf.mxu0
      %v3155 = vadd.f32 0.0, %v3154
      %3156 = vmatmul.bf16.gmra.mxu0 %v2769
      %v3157 = vpop.f32.mrf.mxu0
      %v3158 = vadd.f32 0.0, %v3157
      %v3159 = vpop.f32.mrf.mxu0
      %v3160 = vadd.f32 0.0, %v3159
      %3161 = vdwg.mxu0
      %3162 = vmatpush.bf16.msra.mxu0 0
      %3163 = vmatpush.bf16.msra.mxu0 %v2607
      %3164 = vmatpush.bf16.msra.mxu0 %v2605
      %3165 = vmatpush.bf16.msra.mxu0 %v2603
      %3166 = vmatpush.bf16.msra.mxu0 %v2601
      %3167 = vmatpush.bf16.msra.mxu0 %v2599
      %3168 = vmatpush.bf16.msra.mxu0 %v2597
      %3169 = vmatpush.bf16.msra.mxu0 %v2595
      %3170 = vmatmul.bf16.gmra.mxu0 %v2510
      %v3171 = vpop.f32.mrf.mxu0
      %v3172 = vadd.f32 %v3134, %v3171
      %v3173 = vpop.f32.mrf.mxu0
      %v3174 = vadd.f32 %v3136, %v3173
      %3175 = vmatmul.bf16.gmra.mxu0 %v2513
      %v3176 = vpop.f32.mrf.mxu0
      %v3177 = vadd.f32 %v3139, %v3176
      %v3178 = vpop.f32.mrf.mxu0
      %v3179 = vadd.f32 %v3141, %v3178
      %3180 = vdwg.mxu0
      %3181 = vmatpush.bf16.msra.mxu0 0
      %3182 = vmatpush.bf16.msra.mxu0 %v2608
      %3183 = vmatpush.bf16.msra.mxu0 %v2606
      %3184 = vmatpush.bf16.msra.mxu0 %v2604
      %3185 = vmatpush.bf16.msra.mxu0 %v2602
      %3186 = vmatpush.bf16.msra.mxu0 %v2600
      %3187 = vmatpush.bf16.msra.mxu0 %v2598
      %3188 = vmatpush.bf16.msra.mxu0 %v2596
      %3189 = vmatmul.bf16.gmra.mxu0 %v2510
      %v3190 = vpop.f32.mrf.mxu0
      %v3191 = vadd.f32 %v3153, %v3190
      %v3192 = vpop.f32.mrf.mxu0
      %v3193 = vadd.f32 %v3155, %v3192
      %3194 = vmatmul.bf16.gmra.mxu0 %v2513
      %v3195 = vpop.f32.mrf.mxu0
      %v3196 = vadd.f32 %v3158, %v3195
      %v3197 = vpop.f32.mrf.mxu0
      %v3198 = vadd.f32 %v3160, %v3197
      %3199 = vdwg.mxu0
      %3200 = vmatpush.bf16.msra.mxu0 0
      %3201 = vmatpush.bf16.msra.mxu0 %v2749
      %3202 = vmatpush.bf16.msra.mxu0 %v2747
      %3203 = vmatpush.bf16.msra.mxu0 %v2745
      %3204 = vmatpush.bf16.msra.mxu0 %v2743
      %3205 = vmatpush.bf16.msra.mxu0 %v2741
      %3206 = vmatpush.bf16.msra.mxu0 %v2739
      %3207 = vmatpush.bf16.msra.mxu0 %v2737
      %3208 = vmatmul.bf16.gmra.mxu0 %v2916
      %v3209 = vpop.f32.mrf.mxu0
      %v3210 = vadd.f32 0.0, %v3209
      %v3211 = vpop.f32.mrf.mxu0
      %v3212 = vadd.f32 0.0, %v3211
      %3213 = vmatmul.bf16.gmra.mxu0 %v2919
      %v3214 = vpop.f32.mrf.mxu0
      %v3215 = vadd.f32 0.0, %v3214
      %v3216 = vpop.f32.mrf.mxu0
      %v3217 = vadd.f32 0.0, %v3216
      %3218 = vdwg.mxu0
      %3219 = vmatpush.bf16.msra.mxu0 0
      %3220 = vmatpush.bf16.msra.mxu0 %v2750
      %3221 = vmatpush.bf16.msra.mxu0 %v2748
      %3222 = vmatpush.bf16.msra.mxu0 %v2746
      %3223 = vmatpush.bf16.msra.mxu0 %v2744
      %3224 = vmatpush.bf16.msra.mxu0 %v2742
      %3225 = vmatpush.bf16.msra.mxu0 %v2740
      %3226 = vmatpush.bf16.msra.mxu0 %v2738
      %3227 = vmatmul.bf16.gmra.mxu0 %v2916
      %v3228 = vpop.f32.mrf.mxu0
      %v3229 = vadd.f32 0.0, %v3228
      %v3230 = vpop.f32.mrf.mxu0
      %v3231 = vadd.f32 0.0, %v3230
      %3232 = vmatmul.bf16.gmra.mxu0 %v2919
      %v3233 = vpop.f32.mrf.mxu0
      %v3234 = vadd.f32 0.0, %v3233
      %v3235 = vpop.f32.mrf.mxu0
      %v3236 = vadd.f32 0.0, %v3235
      %3237 = vdwg.mxu0
      %v3238 = vadd.f32 %v3172, %v3210
      %v3239 = vadd.f32 %v3191, %v3229
      %v3240 = vadd.f32 %v3174, %v3212
      %v3241 = vadd.f32 %v3193, %v3231
      %v3242 = vadd.f32 %v3177, %v3215
      %v3243 = vadd.f32 %v3196, %v3234
      %v3244 = vadd.f32 %v3179, %v3217
      %v3245 = vadd.f32 %v3198, %v3236
      %3246 = vmatpush.bf16.msra.mxu0 0
      %3247 = vmatpush.bf16.msra.mxu0 %v2899
      %3248 = vmatpush.bf16.msra.mxu0 %v2897
      %3249 = vmatpush.bf16.msra.mxu0 %v2895
      %3250 = vmatpush.bf16.msra.mxu0 %v2893
      %3251 = vmatpush.bf16.msra.mxu0 %v2891
      %3252 = vmatpush.bf16.msra.mxu0 %v2889
      %3253 = vmatpush.bf16.msra.mxu0 %v2887
      %3254 = vmatmul.bf16.gmra.mxu0 %v3059
      %v3255 = vpop.f32.mrf.mxu0
      %v3256 = vadd.f32 0.0, %v3255
      %v3257 = vpop.f32.mrf.mxu0
      %v3258 = vadd.f32 0.0, %v3257
      %3259 = vmatmul.bf16.gmra.mxu0 %v3062
      %v3260 = vpop.f32.mrf.mxu0
      %v3261 = vadd.f32 0.0, %v3260
      %v3262 = vpop.f32.mrf.mxu0
      %v3263 = vadd.f32 0.0, %v3262
      %3264 = vdwg.mxu0
      %3265 = vmatpush.bf16.msra.mxu0 0
      %3266 = vmatpush.bf16.msra.mxu0 %v2900
      %3267 = vmatpush.bf16.msra.mxu0 %v2898
      %3268 = vmatpush.bf16.msra.mxu0 %v2896
      %3269 = vmatpush.bf16.msra.mxu0 %v2894
      %3270 = vmatpush.bf16.msra.mxu0 %v2892
      %3271 = vmatpush.bf16.msra.mxu0 %v2890
      %3272 = vmatpush.bf16.msra.mxu0 %v2888
      %3273 = vmatmul.bf16.gmra.mxu0 %v3059
      %v3274 = vpop.f32.mrf.mxu0
      %v3275 = vadd.f32 0.0, %v3274
      %v3276 = vpop.f32.mrf.mxu0
      %v3277 = vadd.f32 0.0, %v3276
      %3278 = vmatmul.bf16.gmra.mxu0 %v3062
      %v3279 = vpop.f32.mrf.mxu0
      %v3280 = vadd.f32 0.0, %v3279
      %v3281 = vpop.f32.mrf.mxu0
      %v3282 = vadd.f32 0.0, %v3281
      %3283 = vdwg.mxu0
      %v3284 = vadd.f32 %v3238, %v3256
      %v3285 = vadd.f32 %v3239, %v3275
      %v3286 = vadd.f32 %v3240, %v3258
      %v3287 = vadd.f32 %v3241, %v3277
      %v3288 = vadd.f32 %v3242, %v3261
      %v3289 = vadd.f32 %v3243, %v3280
      %v3290 = vadd.f32 %v3244, %v3263
      %v3291 = vadd.f32 %v3245, %v3282
      %v3294 = vrot.slane %v2421, 1
      %v3295 = vrot.slane %v2422, 1
      %v3296 = vsel %vm2984, %v3294, %v3295
      %v3298 = vsel %vm2508, %v3296, 0
      %v3301 = vsel %vm2508, %v3295, 0
      %3303 = vmatpush.bf16.msra.mxu0 0
      %3304 = vmatpush.bf16.msra.mxu0 %v3042
      %3305 = vmatpush.bf16.msra.mxu0 %v3040
      %3306 = vmatpush.bf16.msra.mxu0 %v3038
      %3307 = vmatpush.bf16.msra.mxu0 %v3036
      %3308 = vmatpush.bf16.msra.mxu0 %v3034
      %3309 = vmatpush.bf16.msra.mxu0 %v3032
      %3310 = vmatpush.bf16.msra.mxu0 %v3030
      %3311 = vmatmul.bf16.gmra.mxu0 %v3298
      %v3312 = vpop.f32.mrf.mxu0
      %v3313 = vadd.f32 0.0, %v3312
      %v3314 = vpop.f32.mrf.mxu0
      %v3315 = vadd.f32 0.0, %v3314
      %3316 = vmatmul.bf16.gmra.mxu0 %v3301
      %v3317 = vpop.f32.mrf.mxu0
      %v3318 = vadd.f32 0.0, %v3317
      %v3319 = vpop.f32.mrf.mxu0
      %v3320 = vadd.f32 0.0, %v3319
      %3321 = vdwg.mxu0
      %3322 = vmatpush.bf16.msra.mxu0 0
      %3323 = vmatpush.bf16.msra.mxu0 %v3043
      %3324 = vmatpush.bf16.msra.mxu0 %v3041
      %3325 = vmatpush.bf16.msra.mxu0 %v3039
      %3326 = vmatpush.bf16.msra.mxu0 %v3037
      %3327 = vmatpush.bf16.msra.mxu0 %v3035
      %3328 = vmatpush.bf16.msra.mxu0 %v3033
      %3329 = vmatpush.bf16.msra.mxu0 %v3031
      %3330 = vmatmul.bf16.gmra.mxu0 %v3298
      %v3331 = vpop.f32.mrf.mxu0
      %v3332 = vadd.f32 0.0, %v3331
      %v3333 = vpop.f32.mrf.mxu0
      %v3334 = vadd.f32 0.0, %v3333
      %3335 = vmatmul.bf16.gmra.mxu0 %v3301
      %v3336 = vpop.f32.mrf.mxu0
      %v3337 = vadd.f32 0.0, %v3336
      %v3338 = vpop.f32.mrf.mxu0
      %v3339 = vadd.f32 0.0, %v3338
      %3340 = vdwg.mxu0
      %v3341 = vadd.f32 %v3284, %v3313
      %v3342 = vadd.f32 %v3285, %v3332
      %v3343 = vadd.f32 %v3286, %v3315
      %v3344 = vadd.f32 %v3287, %v3334
      %v3345 = vadd.f32 %v3288, %v3318
      %v3346 = vadd.f32 %v3289, %v3337
      %v3347 = vadd.f32 %v3290, %v3320
      %v3348 = vadd.f32 %v3291, %v3339
      %v3349 = vadd.f32 %v3341, %v3112
      %v3350 = vadd.f32 %v3342, %v3113
      %v3351 = vadd.f32 %v3343, %v3112
      %v3352 = vadd.f32 %v3344, %v3113
      %v3353 = vadd.f32 %v3345, %v3112
      %v3354 = vadd.f32 %v3346, %v3113
      %v3355 = vadd.f32 %v3347, %v3112
      %v3356 = vadd.f32 %v3348, %v3113
      %v3357 = vmax.f32 %v3116, %v3349
      %v3358 = vmax.f32 %v3117, %v3350
      %v3359 = vmax.f32 %v3118, %v3351
      %v3360 = vmax.f32 %v3119, %v3352
      %v3361 = vmax.f32 %v3120, %v3353
      %v3362 = vmax.f32 %v3121, %v3354
      %v3363 = vmax.f32 %v3122, %v3355
      %v3364 = vmax.f32 %v3123, %v3356
      %v3365 = vpack.c.bf16 %v3359, %v3357
      %v3366 = vpack.c.bf16 %v3360, %v3358
      %v3367 = vpack.c.bf16 %v3363, %v3361
      %v3368 = vpack.c.bf16 %v3364, %v3362
      %v3369 = vld [vmem:[%s9] sm:$0xf]
      %v3370 = vld [vmem:[%s9 + $0x4] sm:$0xf]
      %v3371 = vld [vmem:[%s9 + $0x8] sm:$0xf]
      %v3372 = vld [vmem:[%s9 + $0xc] sm:$0xf]
      %v3373 = vld [vmem:[%s9 + $0x10] sm:$0xf]
      %v3374 = vld [vmem:[%s9 + $0x14] sm:$0xf]
      %v3375 = vld [vmem:[%s9 + $0x18] sm:$0xf]
      %v3376 = vld [vmem:[%s9 + $0x1c] sm:$0xf]
      %v3377 = vld [vmem:[%s9 + $0x20] sm:$0xf]
      %v3378 = vld [vmem:[%s9 + $0x24] sm:$0xf]
      %v3379 = vld [vmem:[%s9 + $0x28] sm:$0xf]
      %v3380 = vld [vmem:[%s9 + $0x2c] sm:$0xf]
      %v3381 = vld [vmem:[%s9 + $0x30] sm:$0xf]
      %v3382 = vld [vmem:[%s9 + $0x34] sm:$0xf]
      %v3383 = vld [vmem:[%s9 + $0x38] sm:$0xf]
      %v3384 = vld [vmem:[%s9 + $0x3c] sm:$0xf]
      %v3385 = vld [vmem:[%s9 + $0x40] sm:$0xf]
      %v3386 = vld [vmem:[%s9 + $0x44] sm:$0xf]
      %v3387 = vld [vmem:[%s9 + $0x48] sm:$0xf]
      %v3388 = vld [vmem:[%s9 + $0x4c] sm:$0xf]
      %v3409 = vunpack.c.l.b16 %v3369
      %v3410 = vunpack.c.l.b16 %v3370
      %v3411 = vunpack.c.l.b16 %v3371
      %v3412 = vunpack.c.l.b16 %v3372
      %v3413 = vunpack.c.l.b16 %v3373
      %v3414 = vunpack.c.l.b16 %v3374
      %v3415 = vunpack.c.l.b16 %v3375
      %v3416 = vunpack.c.l.b16 %v3376
      %v3417 = vunpack.c.l.b16 %v3377
      %v3418 = vunpack.c.l.b16 %v3378
      %v3419 = vunpack.c.l.b16 %v3379
      %v3420 = vunpack.c.l.b16 %v3380
      %v3421 = vunpack.c.l.b16 %v3381
      %v3422 = vunpack.c.l.b16 %v3382
      %v3423 = vunpack.c.l.b16 %v3383
      %v3424 = vunpack.c.l.b16 %v3384
      %v3425 = vunpack.c.l.b16 %v3385
      %v3426 = vunpack.c.l.b16 %v3386
      %v3427 = vunpack.c.l.b16 %v3387
      %v3428 = vunpack.c.l.b16 %v3388
      %v3429 = vpack.c.b16 %v3410, %v3409
      %v3430 = vpack.c.b16 %v3412, %v3411
      %v3431 = vpack.c.b16 %v3414, %v3413
      %v3432 = vpack.c.b16 %v3416, %v3415
      %v3433 = vpack.c.b16 %v3418, %v3417
      %v3434 = vpack.c.b16 %v3420, %v3419
      %v3435 = vpack.c.b16 %v3422, %v3421
      %v3436 = vpack.c.b16 %v3424, %v3423
      %v3437 = vpack.c.b16 %v3426, %v3425
      %v3438 = vpack.c.b16 %v3428, %v3427
      %vm3449 = vcmask 261120
      %v3451 = vsel %vm3449, %v3366, 0
      %v3454 = vsel %vm3449, %v3368, 0
      %3456 = vmatpush.bf16.msra.mxu0 %v3436
      %3457 = vmatpush.bf16.msra.mxu0 %v3435
      %3458 = vmatpush.bf16.msra.mxu0 %v3434
      %3459 = vmatpush.bf16.msra.mxu0 %v3433
      %3460 = vmatpush.bf16.msra.mxu0 %v3432
      %3461 = vmatpush.bf16.msra.mxu0 %v3431
      %3462 = vmatpush.bf16.msra.mxu0 %v3430
      %3463 = vmatpush.bf16.msra.mxu0 %v3429
      %3464 = vmatmul.bf16.gmra.mxu0 %v3365
      %v3465 = vpop.f32.mrf.mxu0
      %v3466 = vadd.f32 0.0, %v3465
      %v3467 = vpop.f32.mrf.mxu0
      %v3468 = vadd.f32 0.0, %v3467
      %3469 = vmatmul.bf16.gmra.mxu0 %v3367
      %v3470 = vpop.f32.mrf.mxu0
      %v3471 = vadd.f32 0.0, %v3470
      %v3472 = vpop.f32.mrf.mxu0
      %v3473 = vadd.f32 0.0, %v3472
      %3474 = vdwg.mxu0
      %3475 = vmatpush.bf16.msra.mxu0 0
      %3476 = vmatpush.bf16.msra.mxu0 0
      %3477 = vmatpush.bf16.msra.mxu0 0
      %3478 = vmatpush.bf16.msra.mxu0 0
      %3479 = vmatpush.bf16.msra.mxu0 0
      %3480 = vmatpush.bf16.msra.mxu0 0
      %3481 = vmatpush.bf16.msra.mxu0 %v3438
      %3482 = vmatpush.bf16.msra.mxu0 %v3437
      %3483 = vmatmul.bf16.gmra.mxu0 %v3451
      %v3484 = vpop.f32.mrf.mxu0
      %v3485 = vadd.f32 %v3466, %v3484
      %v3486 = vpop.f32.mrf.mxu0
      %v3487 = vadd.f32 %v3468, %v3486
      %3488 = vmatmul.bf16.gmra.mxu0 %v3454
      %v3489 = vpop.f32.mrf.mxu0
      %v3490 = vadd.f32 %v3471, %v3489
      %v3491 = vpop.f32.mrf.mxu0
      %v3492 = vadd.f32 %v3473, %v3491
      %3493 = vdwg.mxu0
      %s3494 = scalar_lea.vmem %s9, 80
      %v3495 = vld [vmem:[%s3494] sm:$0xf]
      %v3496 = vld [vmem:[%s3494 + $0x4] sm:$0xf]
      %v3497 = vld [vmem:[%s3494 + $0x8] sm:$0xf]
      %v3498 = vld [vmem:[%s3494 + $0xc] sm:$0xf]
      %v3499 = vld [vmem:[%s3494 + $0x10] sm:$0xf]
      %v3500 = vld [vmem:[%s3494 + $0x14] sm:$0xf]
      %v3501 = vld [vmem:[%s3494 + $0x18] sm:$0xf]
      %v3502 = vld [vmem:[%s3494 + $0x1c] sm:$0xf]
      %v3503 = vld [vmem:[%s3494 + $0x20] sm:$0xf]
      %v3504 = vld [vmem:[%s3494 + $0x24] sm:$0xf]
      %v3505 = vld [vmem:[%s3494 + $0x28] sm:$0xf]
      %v3506 = vld [vmem:[%s3494 + $0x2c] sm:$0xf]
      %v3507 = vld [vmem:[%s3494 + $0x30] sm:$0xf]
      %v3508 = vld [vmem:[%s3494 + $0x34] sm:$0xf]
      %v3509 = vld [vmem:[%s3494 + $0x38] sm:$0xf]
      %v3510 = vld [vmem:[%s3494 + $0x3c] sm:$0xf]
      %v3511 = vld [vmem:[%s3494 + $0x40] sm:$0xf]
      %v3512 = vld [vmem:[%s3494 + $0x44] sm:$0xf]
      %v3513 = vld [vmem:[%s3494 + $0x48] sm:$0xf]
      %v3514 = vld [vmem:[%s3494 + $0x4c] sm:$0xf]
      %v3535 = vunpack.c.l.b16 %v3495
      %v3536 = vunpack.c.l.b16 %v3496
      %v3537 = vunpack.c.l.b16 %v3497
      %v3538 = vunpack.c.l.b16 %v3498
      %v3539 = vunpack.c.l.b16 %v3499
      %v3540 = vunpack.c.l.b16 %v3500
      %v3541 = vunpack.c.l.b16 %v3501
      %v3542 = vunpack.c.l.b16 %v3502
      %v3543 = vunpack.c.l.b16 %v3503
      %v3544 = vunpack.c.l.b16 %v3504
      %v3545 = vunpack.c.l.b16 %v3505
      %v3546 = vunpack.c.l.b16 %v3506
      %v3547 = vunpack.c.l.b16 %v3507
      %v3548 = vunpack.c.l.b16 %v3508
      %v3549 = vunpack.c.l.b16 %v3509
      %v3550 = vunpack.c.l.b16 %v3510
      %v3551 = vunpack.c.l.b16 %v3511
      %v3552 = vunpack.c.l.b16 %v3512
      %v3553 = vunpack.c.l.b16 %v3513
      %v3554 = vunpack.c.l.b16 %v3514
      %v3555 = vpack.c.b16 %v3536, %v3535
      %v3556 = vpack.c.b16 %v3538, %v3537
      %v3557 = vpack.c.b16 %v3540, %v3539
      %v3558 = vpack.c.b16 %v3542, %v3541
      %v3559 = vpack.c.b16 %v3544, %v3543
      %v3560 = vpack.c.b16 %v3546, %v3545
      %v3561 = vpack.c.b16 %v3548, %v3547
      %v3562 = vpack.c.b16 %v3550, %v3549
      %v3563 = vpack.c.b16 %v3552, %v3551
      %v3564 = vpack.c.b16 %v3554, %v3553
      %3575 = vmatpush.bf16.msra.mxu0 %v3562
      %3576 = vmatpush.bf16.msra.mxu0 %v3561
      %3577 = vmatpush.bf16.msra.mxu0 %v3560
      %3578 = vmatpush.bf16.msra.mxu0 %v3559
      %3579 = vmatpush.bf16.msra.mxu0 %v3558
      %3580 = vmatpush.bf16.msra.mxu0 %v3557
      %3581 = vmatpush.bf16.msra.mxu0 %v3556
      %3582 = vmatpush.bf16.msra.mxu0 %v3555
      %3583 = vmatmul.bf16.gmra.mxu0 %v3365
      %v3584 = vpop.f32.mrf.mxu0
      %v3585 = vadd.f32 0.0, %v3584
      %v3586 = vpop.f32.mrf.mxu0
      %v3587 = vadd.f32 0.0, %v3586
      %3588 = vmatmul.bf16.gmra.mxu0 %v3367
      %v3589 = vpop.f32.mrf.mxu0
      %v3590 = vadd.f32 0.0, %v3589
      %v3591 = vpop.f32.mrf.mxu0
      %v3592 = vadd.f32 0.0, %v3591
      %3593 = vdwg.mxu0
      %3594 = vmatpush.bf16.msra.mxu0 0
      %3595 = vmatpush.bf16.msra.mxu0 0
      %3596 = vmatpush.bf16.msra.mxu0 0
      %3597 = vmatpush.bf16.msra.mxu0 0
      %3598 = vmatpush.bf16.msra.mxu0 0
      %3599 = vmatpush.bf16.msra.mxu0 0
      %3600 = vmatpush.bf16.msra.mxu0 %v3564
      %3601 = vmatpush.bf16.msra.mxu0 %v3563
      %3602 = vmatmul.bf16.gmra.mxu0 %v3451
      %v3603 = vpop.f32.mrf.mxu0
      %v3604 = vadd.f32 %v3585, %v3603
      %v3605 = vpop.f32.mrf.mxu0
      %v3606 = vadd.f32 %v3587, %v3605
      %3607 = vmatmul.bf16.gmra.mxu0 %v3454
      %v3608 = vpop.f32.mrf.mxu0
      %v3609 = vadd.f32 %v3590, %v3608
      %v3610 = vpop.f32.mrf.mxu0
      %v3611 = vadd.f32 %v3592, %v3610
      %3612 = vdwg.mxu0
      %v3613 = vmax.f32 %v3485, %v3604
      %v3614 = vmax.f32 %v3487, %v3606
      %v3615 = vmax.f32 %v3490, %v3609
      %v3616 = vmax.f32 %v3492, %v3611
      %v3617 = vmax.f32 %v3613, 0.0
      %v3618 = vmax.f32 %v3614, 0.0
      %v3619 = vmax.f32 %v3615, 0.0
      %v3620 = vmax.f32 %v3616, 0.0
      %v3621 = vpack.c.bf16 %v3618, %v3617
      %v3622 = vpack.c.bf16 %v3620, %v3619
      %v3623 = vld [vmem:[%s10] sm:$0xf]
      %v3624 = vld [vmem:[%s10 + $0x4] sm:$0xf]
      %v3625 = vld [vmem:[%s10 + $0x8] sm:$0xf]
      %v3626 = vld [vmem:[%s10 + $0xc] sm:$0xf]
      %v3627 = vld [vmem:[%s10 + $0x10] sm:$0xf]
      %v3628 = vld [vmem:[%s10 + $0x14] sm:$0xf]
      %v3629 = vld [vmem:[%s10 + $0x18] sm:$0xf]
      %v3630 = vld [vmem:[%s10 + $0x1c] sm:$0xf]
      %v3631 = vld [vmem:[%s10 + $0x20] sm:$0xf]
      %v3632 = vld [vmem:[%s10 + $0x24] sm:$0xf]
      %s3633 = scalar_lea.vmem %s10, 40
      %v3634 = vld [vmem:[%s3633] sm:$0xf]
      %v3635 = vld [vmem:[%s3633 + $0x4] sm:$0xf]
      %v3636 = vld [vmem:[%s3633 + $0x8] sm:$0xf]
      %v3637 = vld [vmem:[%s3633 + $0xc] sm:$0xf]
      %v3638 = vld [vmem:[%s3633 + $0x10] sm:$0xf]
      %v3639 = vld [vmem:[%s3633 + $0x14] sm:$0xf]
      %v3640 = vld [vmem:[%s3633 + $0x18] sm:$0xf]
      %v3641 = vld [vmem:[%s3633 + $0x1c] sm:$0xf]
      %v3642 = vld [vmem:[%s3633 + $0x20] sm:$0xf]
      %v3643 = vld [vmem:[%s3633 + $0x24] sm:$0xf]
      %v3645 = vshrl.u32 %v3621, 16
      %v3647 = vshll.u32 %v3621, 16
      %v3649 = vrot.slane %v3647, 1
      %v3650 = vor.u32 %v3645, %v3649
      %v3652 = vshll.u32 %v3622, 16
      %v3654 = vrot.slane %v3652, 1
      %v3655 = vsel %vm1113, %v3650, %v3654
      %v3656 = vshrl.u32 %v3622, 16
      %v3658 = vor.u32 %v3656, %v3654
      %v3669 = vunpack.c.l.b16 %v3634
      %v3670 = vunpack.c.l.b16 %v3635
      %v3671 = vunpack.c.l.b16 %v3636
      %v3672 = vunpack.c.l.b16 %v3637
      %v3673 = vunpack.c.l.b16 %v3638
      %v3674 = vunpack.c.l.b16 %v3639
      %v3675 = vunpack.c.l.b16 %v3640
      %v3676 = vunpack.c.l.b16 %v3641
      %v3677 = vunpack.c.l.b16 %v3642
      %v3678 = vunpack.c.l.b16 %v3643
      %v3679 = vpack.c.b16 %v3670, %v3669
      %v3680 = vpack.c.b16 %v3672, %v3671
      %v3681 = vpack.c.b16 %v3674, %v3673
      %v3682 = vpack.c.b16 %v3676, %v3675
      %v3683 = vpack.c.b16 %v3678, %v3677
      %vm3689 = vcmask 654336
      %v3691 = vsel %vm3689, %v3655, 0
      %v3694 = vsel %vm3689, %v3658, 0
      %3696 = vmatpush.bf16.msra.mxu0 0
      %3697 = vmatpush.bf16.msra.mxu0 0
      %3698 = vmatpush.bf16.msra.mxu0 0
      %3699 = vmatpush.bf16.msra.mxu0 %v3683
      %3700 = vmatpush.bf16.msra.mxu0 %v3682
      %3701 = vmatpush.bf16.msra.mxu0 %v3681
      %3702 = vmatpush.bf16.msra.mxu0 %v3680
      %3703 = vmatpush.bf16.msra.mxu0 %v3679
      %3704 = vmatmul.bf16.gmra.mxu0 %v3691
      %v3705 = vpop.f32.mrf.mxu0
      %v3706 = vadd.f32 0.0, %v3705
      %v3707 = vpop.f32.mrf.mxu0
      %v3708 = vadd.f32 0.0, %v3707
      %3709 = vmatmul.bf16.gmra.mxu0 %v3694
      %v3710 = vpop.f32.mrf.mxu0
      %v3711 = vadd.f32 0.0, %v3710
      %v3712 = vpop.f32.mrf.mxu0
      %v3713 = vadd.f32 0.0, %v3712
      %3714 = vdwg.mxu0
      %v3725 = vunpack.c.l.b16 %v3623
      %v3726 = vunpack.c.l.b16 %v3624
      %v3727 = vunpack.c.l.b16 %v3625
      %v3728 = vunpack.c.l.b16 %v3626
      %v3729 = vunpack.c.l.b16 %v3627
      %v3730 = vunpack.c.l.b16 %v3628
      %v3731 = vunpack.c.l.b16 %v3629
      %v3732 = vunpack.c.l.b16 %v3630
      %v3733 = vunpack.c.l.b16 %v3631
      %v3734 = vunpack.c.l.b16 %v3632
      %v3735 = vpack.c.b16 %v3726, %v3725
      %v3736 = vpack.c.b16 %v3728, %v3727
      %v3737 = vpack.c.b16 %v3730, %v3729
      %v3738 = vpack.c.b16 %v3732, %v3731
      %v3739 = vpack.c.b16 %v3734, %v3733
      %v3745 = vsel %vm3689, %v3621, 0
      %v3747 = vsel %vm3689, %v3622, 0
      %3749 = vmatpush.bf16.msra.mxu0 0
      %3750 = vmatpush.bf16.msra.mxu0 0
      %3751 = vmatpush.bf16.msra.mxu0 0
      %3752 = vmatpush.bf16.msra.mxu0 %v3739
      %3753 = vmatpush.bf16.msra.mxu0 %v3738
      %3754 = vmatpush.bf16.msra.mxu0 %v3737
      %3755 = vmatpush.bf16.msra.mxu0 %v3736
      %3756 = vmatpush.bf16.msra.mxu0 %v3735
      %3757 = vmatmul.bf16.gmra.mxu0 %v3745
      %v3758 = vpop.f32.mrf.mxu0
      %v3759 = vadd.f32 %v3706, %v3758
      %v3760 = vpop.f32.mrf.mxu0
      %v3761 = vadd.f32 %v3708, %v3760
      %3762 = vmatmul.bf16.gmra.mxu0 %v3747
      %v3763 = vpop.f32.mrf.mxu0
      %v3764 = vadd.f32 %v3711, %v3763
      %v3765 = vpop.f32.mrf.mxu0
      %v3766 = vadd.f32 %v3713, %v3765
      %3767 = vdwg.mxu0
      %s3768 = scalar_lea.vmem %s10, 80
      %v3769 = vld [vmem:[%s3768] sm:$0xf]
      %v3770 = vld [vmem:[%s3768 + $0x4] sm:$0xf]
      %v3771 = vld [vmem:[%s3768 + $0x8] sm:$0xf]
      %v3772 = vld [vmem:[%s3768 + $0xc] sm:$0xf]
      %v3773 = vld [vmem:[%s3768 + $0x10] sm:$0xf]
      %v3774 = vld [vmem:[%s3768 + $0x14] sm:$0xf]
      %v3775 = vld [vmem:[%s3768 + $0x18] sm:$0xf]
      %v3776 = vld [vmem:[%s3768 + $0x1c] sm:$0xf]
      %v3777 = vld [vmem:[%s3768 + $0x20] sm:$0xf]
      %v3778 = vld [vmem:[%s3768 + $0x24] sm:$0xf]
      %v3781 = vrot.slane %v3621, 1
      %v3782 = vrot.slane %v3622, 1
      %v3783 = vsel %vm2984, %v3781, %v3782
      %v3794 = vunpack.c.l.b16 %v3769
      %v3795 = vunpack.c.l.b16 %v3770
      %v3796 = vunpack.c.l.b16 %v3771
      %v3797 = vunpack.c.l.b16 %v3772
      %v3798 = vunpack.c.l.b16 %v3773
      %v3799 = vunpack.c.l.b16 %v3774
      %v3800 = vunpack.c.l.b16 %v3775
      %v3801 = vunpack.c.l.b16 %v3776
      %v3802 = vunpack.c.l.b16 %v3777
      %v3803 = vunpack.c.l.b16 %v3778
      %v3804 = vpack.c.b16 %v3795, %v3794
      %v3805 = vpack.c.b16 %v3797, %v3796
      %v3806 = vpack.c.b16 %v3799, %v3798
      %v3807 = vpack.c.b16 %v3801, %v3800
      %v3808 = vpack.c.b16 %v3803, %v3802
      %v3815 = vsel %vm3689, %v3783, 0
      %v3818 = vsel %vm3689, %v3782, 0
      %3820 = vmatpush.bf16.msra.mxu0 0
      %3821 = vmatpush.bf16.msra.mxu0 0
      %3822 = vmatpush.bf16.msra.mxu0 0
      %3823 = vmatpush.bf16.msra.mxu0 %v3808
      %3824 = vmatpush.bf16.msra.mxu0 %v3807
      %3825 = vmatpush.bf16.msra.mxu0 %v3806
      %3826 = vmatpush.bf16.msra.mxu0 %v3805
      %3827 = vmatpush.bf16.msra.mxu0 %v3804
      %3828 = vmatmul.bf16.gmra.mxu0 %v3815
      %v3829 = vpop.f32.mrf.mxu0
      %v3830 = vadd.f32 0.0, %v3829
      %v3831 = vpop.f32.mrf.mxu0
      %v3832 = vadd.f32 0.0, %v3831
      %3833 = vmatmul.bf16.gmra.mxu0 %v3818
      %v3834 = vpop.f32.mrf.mxu0
      %v3835 = vadd.f32 0.0, %v3834
      %v3836 = vpop.f32.mrf.mxu0
      %v3837 = vadd.f32 0.0, %v3836
      %3838 = vdwg.mxu0
      %v3839 = vadd.f32 %v3759, %v3830
      %v3840 = vadd.f32 %v3761, %v3832
      %v3841 = vadd.f32 %v3764, %v3835
      %v3842 = vadd.f32 %v3766, %v3837
      %s3843 = scalar_lea.vmem %s10, 120
      %v3844 = vld [vmem:[%s3843] sm:$0xf]
      %v3845 = vld [vmem:[%s3843 + $0x4] sm:$0xf]
      %v3846 = vld [vmem:[%s3843 + $0x8] sm:$0xf]
      %v3847 = vld [vmem:[%s3843 + $0xc] sm:$0xf]
      %v3848 = vld [vmem:[%s3843 + $0x10] sm:$0xf]
      %v3849 = vld [vmem:[%s3843 + $0x14] sm:$0xf]
      %v3850 = vld [vmem:[%s3843 + $0x18] sm:$0xf]
      %v3851 = vld [vmem:[%s3843 + $0x1c] sm:$0xf]
      %v3852 = vld [vmem:[%s3843 + $0x20] sm:$0xf]
      %v3853 = vld [vmem:[%s3843 + $0x24] sm:$0xf]
      %vm3854 = vsmask.f32 6400
      %v3855 = vrot.slane %v3645, 1
      %v3856 = vrot.slane %v3647, 2
      %v3857 = vor.u32 %v3855, %v3856
      %v3858 = vrot.slane %v3656, 1
      %v3859 = vrot.slane %v3652, 2
      %v3860 = vor.u32 %v3858, %v3859
      %v3861 = vsel %vm3854, %v3857, %v3860
      %v3872 = vunpack.c.l.b16 %v3844
      %v3873 = vunpack.c.l.b16 %v3845
      %v3874 = vunpack.c.l.b16 %v3846
      %v3875 = vunpack.c.l.b16 %v3847
      %v3876 = vunpack.c.l.b16 %v3848
      %v3877 = vunpack.c.l.b16 %v3849
      %v3878 = vunpack.c.l.b16 %v3850
      %v3879 = vunpack.c.l.b16 %v3851
      %v3880 = vunpack.c.l.b16 %v3852
      %v3881 = vunpack.c.l.b16 %v3853
      %v3882 = vpack.c.b16 %v3873, %v3872
      %v3883 = vpack.c.b16 %v3875, %v3874
      %v3884 = vpack.c.b16 %v3877, %v3876
      %v3885 = vpack.c.b16 %v3879, %v3878
      %v3886 = vpack.c.b16 %v3881, %v3880
      %v3893 = vsel %vm3689, %v3861, 0
      %v3896 = vsel %vm3689, %v3860, 0
      %3898 = vmatpush.bf16.msra.mxu0 0
      %3899 = vmatpush.bf16.msra.mxu0 0
      %3900 = vmatpush.bf16.msra.mxu0 0
      %3901 = vmatpush.bf16.msra.mxu0 %v3886
      %3902 = vmatpush.bf16.msra.mxu0 %v3885
      %3903 = vmatpush.bf16.msra.mxu0 %v3884
      %3904 = vmatpush.bf16.msra.mxu0 %v3883
      %3905 = vmatpush.bf16.msra.mxu0 %v3882
      %3906 = vmatmul.bf16.gmra.mxu0 %v3893
      %v3907 = vpop.f32.mrf.mxu0
      %v3908 = vadd.f32 0.0, %v3907
      %v3909 = vpop.f32.mrf.mxu0
      %v3910 = vadd.f32 0.0, %v3909
      %3911 = vmatmul.bf16.gmra.mxu0 %v3896
      %v3912 = vpop.f32.mrf.mxu0
      %v3913 = vadd.f32 0.0, %v3912
      %v3914 = vpop.f32.mrf.mxu0
      %v3915 = vadd.f32 0.0, %v3914
      %3916 = vdwg.mxu0
      %v3917 = vadd.f32 %v3839, %v3908
      %v3918 = vadd.f32 %v3840, %v3910
      %v3919 = vadd.f32 %v3841, %v3913
      %v3920 = vadd.f32 %v3842, %v3915
      %s3921 = scalar_lea.vmem %s10, 160
      %v3922 = vld [vmem:[%s3921] sm:$0xf]
      %v3923 = vld [vmem:[%s3921 + $0x4] sm:$0xf]
      %v3924 = vld [vmem:[%s3921 + $0x8] sm:$0xf]
      %v3925 = vld [vmem:[%s3921 + $0xc] sm:$0xf]
      %v3926 = vld [vmem:[%s3921 + $0x10] sm:$0xf]
      %v3927 = vld [vmem:[%s3921 + $0x14] sm:$0xf]
      %v3928 = vld [vmem:[%s3921 + $0x18] sm:$0xf]
      %v3929 = vld [vmem:[%s3921 + $0x1c] sm:$0xf]
      %v3930 = vld [vmem:[%s3921 + $0x20] sm:$0xf]
      %v3931 = vld [vmem:[%s3921 + $0x24] sm:$0xf]
      %vm3932 = vcmask 1045504
      %v3933 = vrot.slane %v3621, 2
      %v3934 = vrot.slane %v3622, 2
      %v3935 = vsel %vm3932, %v3933, %v3934
      %v3946 = vunpack.c.l.b16 %v3922
      %v3947 = vunpack.c.l.b16 %v3923
      %v3948 = vunpack.c.l.b16 %v3924
      %v3949 = vunpack.c.l.b16 %v3925
      %v3950 = vunpack.c.l.b16 %v3926
      %v3951 = vunpack.c.l.b16 %v3927
      %v3952 = vunpack.c.l.b16 %v3928
      %v3953 = vunpack.c.l.b16 %v3929
      %v3954 = vunpack.c.l.b16 %v3930
      %v3955 = vunpack.c.l.b16 %v3931
      %v3956 = vpack.c.b16 %v3947, %v3946
      %v3957 = vpack.c.b16 %v3949, %v3948
      %v3958 = vpack.c.b16 %v3951, %v3950
      %v3959 = vpack.c.b16 %v3953, %v3952
      %v3960 = vpack.c.b16 %v3955, %v3954
      %v3967 = vsel %vm3689, %v3935, 0
      %v3970 = vsel %vm3689, %v3934, 0
      %3972 = vmatpush.bf16.msra.mxu0 0
      %3973 = vmatpush.bf16.msra.mxu0 0
      %3974 = vmatpush.bf16.msra.mxu0 0
      %3975 = vmatpush.bf16.msra.mxu0 %v3960
      %3976 = vmatpush.bf16.msra.mxu0 %v3959
      %3977 = vmatpush.bf16.msra.mxu0 %v3958
      %3978 = vmatpush.bf16.msra.mxu0 %v3957
      %3979 = vmatpush.bf16.msra.mxu0 %v3956
      %3980 = vmatmul.bf16.gmra.mxu0 %v3967
      %v3981 = vpop.f32.mrf.mxu0
      %v3982 = vadd.f32 0.0, %v3981
      %v3983 = vpop.f32.mrf.mxu0
      %v3984 = vadd.f32 0.0, %v3983
      %3985 = vmatmul.bf16.gmra.mxu0 %v3970
      %v3986 = vpop.f32.mrf.mxu0
      %v3987 = vadd.f32 0.0, %v3986
      %v3988 = vpop.f32.mrf.mxu0
      %v3989 = vadd.f32 0.0, %v3988
      %3990 = vdwg.mxu0
      %v3991 = vadd.f32 %v3917, %v3982
      %v3992 = vadd.f32 %v3918, %v3984
      %v3993 = vadd.f32 %v3919, %v3987
      %v3994 = vadd.f32 %v3920, %v3989
      %v3995 = vld [vmem:[%s11] sm:$0x1]
      %v3997 = vperm.slane %v3995, 0
      %v3999 = vadd.f32 %v3991, %v3997
      %v4000 = vadd.f32 %v3992, %v3997
      %v4001 = vadd.f32 %v3993, %v3997
      %v4002 = vadd.f32 %v3994, %v3997
      %v4003 = vmax.f32 %v3999, 0.0
      %v4004 = vmax.f32 %v4000, 0.0
      %v4005 = vmax.f32 %v4001, 0.0
      %v4006 = vmax.f32 %v4002, 0.0
      %v4007 = vpack.c.bf16 %v4004, %v4003
      %v4008 = vpack.c.bf16 %v4006, %v4005
      %v4009 = vld [vmem:[%s12] sm:$0xf]
      %v4010 = vld [vmem:[%s12 + $0x4] sm:$0xf]
      %v4011 = vld [vmem:[%s12 + $0x8] sm:$0xf]
      %v4012 = vld [vmem:[%s12 + $0xc] sm:$0xf]
      %v4013 = vld [vmem:[%s12 + $0x10] sm:$0xf]
      %v4014 = vld [vmem:[%s12 + $0x14] sm:$0xf]
      %v4015 = vld [vmem:[%s12 + $0x18] sm:$0xf]
      %v4016 = vld [vmem:[%s12 + $0x1c] sm:$0xf]
      %v4017 = vld [vmem:[%s12 + $0x20] sm:$0xf]
      %v4018 = vld [vmem:[%s12 + $0x24] sm:$0xf]
      %v4019 = vld [vmem:[%s12 + $0x28] sm:$0xf]
      %v4020 = vld [vmem:[%s12 + $0x2c] sm:$0xf]
      %v4021 = vld [vmem:[%s12 + $0x30] sm:$0xf]
      %v4022 = vld [vmem:[%s12 + $0x34] sm:$0xf]
      %v4023 = vld [vmem:[%s12 + $0x38] sm:$0xf]
      %v4024 = vld [vmem:[%s12 + $0x3c] sm:$0xf]
      %v4025 = vld [vmem:[%s13] sm:$0x1]
      %v4027 = vperm.slane %v4025, 0
      %v4045 = vunpack.c.l.b16 %v4009
      %v4046 = vunpack.c.l.b16 %v4010
      %v4047 = vunpack.c.l.b16 %v4011
      %v4048 = vunpack.c.l.b16 %v4012
      %v4049 = vunpack.c.l.b16 %v4013
      %v4050 = vunpack.c.l.b16 %v4014
      %v4051 = vunpack.c.l.b16 %v4015
      %v4052 = vunpack.c.l.b16 %v4016
      %v4053 = vunpack.c.l.b16 %v4017
      %v4054 = vunpack.c.l.b16 %v4018
      %v4055 = vunpack.c.l.b16 %v4019
      %v4056 = vunpack.c.l.b16 %v4020
      %v4057 = vunpack.c.l.b16 %v4021
      %v4058 = vunpack.c.l.b16 %v4022
      %v4059 = vunpack.c.l.b16 %v4023
      %v4060 = vunpack.c.l.b16 %v4024
      %v4061 = vpack.c.b16 %v4046, %v4045
      %v4062 = vpack.c.b16 %v4048, %v4047
      %v4063 = vpack.c.b16 %v4050, %v4049
      %v4064 = vpack.c.b16 %v4052, %v4051
      %v4065 = vpack.c.b16 %v4054, %v4053
      %v4066 = vpack.c.b16 %v4056, %v4055
      %v4067 = vpack.c.b16 %v4058, %v4057
      %v4068 = vpack.c.b16 %v4060, %v4059
      %4077 = vmatpush.bf16.msra.mxu0 %v4068
      %4078 = vmatpush.bf16.msra.mxu0 %v4067
      %4079 = vmatpush.bf16.msra.mxu0 %v4066
      %4080 = vmatpush.bf16.msra.mxu0 %v4065
      %4081 = vmatpush.bf16.msra.mxu0 %v4064
      %4082 = vmatpush.bf16.msra.mxu0 %v4063
      %4083 = vmatpush.bf16.msra.mxu0 %v4062
      %4084 = vmatpush.bf16.msra.mxu0 %v4061
      %4085 = vmatmul.bf16.gmra.mxu0 %v4007
      %v4086 = vpop.f32.mrf.mxu0
      %v4087 = vadd.f32 %v4027, %v4086
      %v4088 = vpop.f32.mrf.mxu0
      %v4089 = vadd.f32 %v4027, %v4088
      %4090 = vmatmul.bf16.gmra.mxu0 %v4008
      %v4091 = vpop.f32.mrf.mxu0
      %v4092 = vadd.f32 %v4027, %v4091
      %v4093 = vpop.f32.mrf.mxu0
      %v4094 = vadd.f32 %v4027, %v4093
      %4095 = vdwg.mxu0
      %v4096 = vmax.f32 %v4087, 0.0
      %v4097 = vmax.f32 %v4089, 0.0
      %v4098 = vmax.f32 %v4092, 0.0
      %v4099 = vmax.f32 %v4094, 0.0
      %v4100 = vpack.c.bf16 %v4097, %v4096
      %v4101 = vpack.c.bf16 %v4099, %v4098
      %v4102 = vld [vmem:[%s14] sm:$0xf]
      %v4103 = vld [vmem:[%s14 + $0x4] sm:$0xf]
      %v4104 = vld [vmem:[%s14 + $0x8] sm:$0xf]
      %v4105 = vld [vmem:[%s14 + $0xc] sm:$0xf]
      %v4106 = vld [vmem:[%s14 + $0x10] sm:$0xf]
      %v4107 = vld [vmem:[%s14 + $0x14] sm:$0xf]
      %v4108 = vld [vmem:[%s14 + $0x18] sm:$0xf]
      %v4109 = vld [vmem:[%s14 + $0x1c] sm:$0xf]
      %v4110 = vld [vmem:[%s14 + $0x20] sm:$0xf]
      %v4111 = vld [vmem:[%s14 + $0x24] sm:$0xf]
      %v4112 = vld [vmem:[%s14 + $0x28] sm:$0xf]
      %v4113 = vld [vmem:[%s14 + $0x2c] sm:$0xf]
      %v4114 = vld [vmem:[%s14 + $0x30] sm:$0xf]
      %v4115 = vld [vmem:[%s14 + $0x34] sm:$0xf]
      %v4116 = vld [vmem:[%s14 + $0x38] sm:$0xf]
      %v4117 = vld [vmem:[%s14 + $0x3c] sm:$0xf]
      %v4118 = vld [vmem:[%s15] sm:$0x1]
      %v4120 = vperm.slane %v4118, 0
      %v4138 = vunpack.c.l.b16 %v4102
      %v4139 = vunpack.c.l.b16 %v4103
      %v4140 = vunpack.c.l.b16 %v4104
      %v4141 = vunpack.c.l.b16 %v4105
      %v4142 = vunpack.c.l.b16 %v4106
      %v4143 = vunpack.c.l.b16 %v4107
      %v4144 = vunpack.c.l.b16 %v4108
      %v4145 = vunpack.c.l.b16 %v4109
      %v4146 = vunpack.c.l.b16 %v4110
      %v4147 = vunpack.c.l.b16 %v4111
      %v4148 = vunpack.c.l.b16 %v4112
      %v4149 = vunpack.c.l.b16 %v4113
      %v4150 = vunpack.c.l.b16 %v4114
      %v4151 = vunpack.c.l.b16 %v4115
      %v4152 = vunpack.c.l.b16 %v4116
      %v4153 = vunpack.c.l.b16 %v4117
      %v4154 = vpack.c.b16 %v4139, %v4138
      %v4155 = vpack.c.b16 %v4141, %v4140
      %v4156 = vpack.c.b16 %v4143, %v4142
      %v4157 = vpack.c.b16 %v4145, %v4144
      %v4158 = vpack.c.b16 %v4147, %v4146
      %v4159 = vpack.c.b16 %v4149, %v4148
      %v4160 = vpack.c.b16 %v4151, %v4150
      %v4161 = vpack.c.b16 %v4153, %v4152
      %4170 = vmatpush.bf16.msra.mxu0 %v4161
      %4171 = vmatpush.bf16.msra.mxu0 %v4160
      %4172 = vmatpush.bf16.msra.mxu0 %v4159
      %4173 = vmatpush.bf16.msra.mxu0 %v4158
      %4174 = vmatpush.bf16.msra.mxu0 %v4157
      %4175 = vmatpush.bf16.msra.mxu0 %v4156
      %4176 = vmatpush.bf16.msra.mxu0 %v4155
      %4177 = vmatpush.bf16.msra.mxu0 %v4154
      %4178 = vmatmul.bf16.gmra.mxu0 %v4100
      %v4179 = vpop.f32.mrf.mxu0
      %v4180 = vadd.f32 %v4120, %v4179
      %v4181 = vpop.f32.mrf.mxu0
      %v4182 = vadd.f32 %v4120, %v4181
      %4183 = vmatmul.bf16.gmra.mxu0 %v4101
      %v4184 = vpop.f32.mrf.mxu0
      %v4185 = vadd.f32 %v4120, %v4184
      %v4186 = vpop.f32.mrf.mxu0
      %v4187 = vadd.f32 %v4120, %v4186
      %4188 = vdwg.mxu0
      %4189 = vst [vmem:[%s589] sm:$0xff] %v4180
      %4190 = vst [vmem:[%s589 + $0x8] sm:$0xff] %v4182
      %4191 = vst [vmem:[%s589 + $0x10] sm:$0xff] %v4185
      %4192 = vst [vmem:[%s589 + $0x18] sm:$0x1] %v4187
      %s4193 = smul.u32 4, %s27
      %p4194 = scmp.lt.s32.totalorder %s4193, 7
      %s4195 = scalar_select %p4194, %s4193, 7
      %s4196 = smul.addr %s4195, 8
      %s4197 = scalar_lea.vmem %s16, %s4196
      // Predicated region
      $region85: #{net_forward.1} parent=83 // pred_check
        %p4198 = pneg %p401
      $region86: #{net_forward.1} parent=83 // pred_check_branch
        %4200 = sbr.rel (%p4198) target = $region88
      $region87: #{net_forward.1} parent=83 // pred_region
        %s4201 = smul.u32 4, %s27
      $region88: #{net_forward.1} parent=83 // pred_fallthru
        _
    $region84: #{net_forward.1} parent=5 // pred_fallthru
      _
    %p4202 = scmp.le.s32.totalorder 2, %s22
    // Predicated region
    $region89: #{net_forward.1} parent=5 // pred_check
      %p4203 = pneg %p4202
    $region90: #{net_forward.1} parent=5 // pred_check_branch
      %4205 = sbr.rel (%p4203) target = $region92
    $region91: #{net_forward.1} parent=5 // pred_region
      %s4206 = ssub.s32 %s22, 2
      // Predicated region
      $region93: #{net_forward.1} parent=91 // pred_check
        %p4207 = pneg %p407
      $region94: #{net_forward.1} parent=91 // pred_check_branch
        %4209 = sbr.rel (%p4207) target = $region96
      $region95: #{net_forward.1} parent=91 // pred_region
        %s4210 = smul.u32 4, %s28
        %p4211 = scmp.lt.s32.totalorder %s4210, 7
        %s4212 = scalar_select %p4211, %s4210, 7
        %s4213 = smul.addr %s4212, 8
        %s4214 = scalar_lea.vmem %s16, %s4213
      $region96: #{net_forward.1} parent=91 // pred_fallthru
        _
    $region92: #{net_forward.1} parent=5 // pred_fallthru
      _
  $region6: #{net_forward.1} parent=0 // loop_footer
    %s26 = sadd.s32 1, %s22
  $region7: #{net_forward.1} parent=0 // loop_footer_branch
    %21 = sbr.rel target = $region3
  $region8: #{net_forward.1} parent=0 // loop_exit
    _

</llo_original>
